<compile_context>
chip_gen: v7x
topology: tpu7x:2x2x1
jax: 0.10.0
libtpu: 0.0.40
codegen_flags: <defaults>
</compile_context>

<pallas_src>
import functools

import jax
import jax.numpy as jnp
import numpy as np
from jax.experimental import pallas as pl
from jax.experimental.pallas import tpu as pltpu

H = W = 36                     # spatial size implied by Linear(2592, 2)
CIN, COUT = 3, 32
KH = KW = 3
POOL = 4
PH = PW = H // POOL            # 9 pooled rows/cols
FEAT = COUT * PH * PW          # 2592
NCLS = 2

WPAD = W + 2                   # 38 zero-padded input columns
HPAD = H + 2                   # 38 zero-padded input rows
KIN = KH * WPAD * CIN          # 342 contraction lanes: (dy, w_pad, cin)
KPAD = 384                     # 342 -> 3*128, lane-dense K for the MXU
PWPAD = 12                     # pooled col 9 -> 12 so each dw block is exactly 3*128 lanes
DWBLK = PWPAD * COUT           # 384 lanes per pool-width offset
NOUT = POOL * DWBLK            # 1536 conv-output lanes, layout (dw, j, cout)
MAX_B_BLK = 8                  # images per grid step (per-step VMEM ~3.5 MiB incl. f32 acc)


def _make_kernel(b_blk):
    def kernel(x_ref, m_ref, wl_ref, b_ref, o_ref):
        # x_ref : (b_blk, 36, 384) bf16  per-row triplet of padded input rows, lanes=(dy,w_pad,cin)
        # m_ref : (384, 1536)      bf16  conv matrix, cols = (dw, j, cout)  (j padded 9->12)
        # wl_ref: (2, 9, 384)      f32   linear weight, rows = pooled i, cols = (j, cout)
        # b_ref : (1, 2)           f32   linear bias
        # o_ref : (1, b_blk, 2)    f32   logits for this batch tile
        m = m_ref[...]                         # hoist conv matrix load once
        wl0 = wl_ref[0]
        wl1 = wl_ref[1]
        rows = []
        for b in range(b_blk):
            lhs = x_ref[b]                                                   # (36, 384) bf16
            # Conv3x3 (pad=1, no bias) as one lane-dense MXU matmul, f32 accumulation.
            acc = jnp.dot(lhs, m, preferred_element_type=jnp.float32)        # (36, 1536) f32
            # 4x4 max-pool over height: max over each group of 4 consecutive conv rows.
            yh = jnp.concatenate(
                [jnp.max(acc[POOL * i:POOL * (i + 1), :], axis=0, keepdims=True)
                 for i in range(PH)], axis=0)                                # (9, 1536)
            # 4x4 max-pool over width: max over the 4 contiguous 384-lane (dw) groups.
            p = jnp.maximum(
                jnp.maximum(yh[:, 0:DWBLK], yh[:, DWBLK:2 * DWBLK]),
                jnp.maximum(yh[:, 2 * DWBLK:3 * DWBLK], yh[:, 3 * DWBLK:4 * DWBLK]))
            # Linear(2592, 2): single full contraction over (i, j, cout) per class.
            s0 = jnp.sum(jnp.sum(p * wl0, axis=1, keepdims=True), axis=0, keepdims=True)
            s1 = jnp.sum(jnp.sum(p * wl1, axis=1, keepdims=True), axis=0, keepdims=True)
            rows.append(jnp.concatenate([s0, s1], axis=1))                   # (1, 2)
        # Single store of the whole batch-tile of logits (lane-2 store is tiny; low priority).
        o_ref[0] = jnp.concatenate(rows, axis=0) + b_ref[...]
    return kernel


def _fused_call(x3, mmat, wl, bias, b_blk, g):
    return pl.pallas_call(
        _make_kernel(b_blk),
        out_shape=jax.ShapeDtypeStruct((g, b_blk, NCLS), jnp.float32),
        grid=(g,),
        in_specs=[
            pl.BlockSpec((b_blk, H, KPAD), lambda i: (i, 0, 0)),
            pl.BlockSpec((KPAD, NOUT), lambda i: (0, 0)),
            pl.BlockSpec((NCLS, PH, DWBLK), lambda i: (0, 0, 0)),
            pl.BlockSpec((1, NCLS), lambda i: (0, 0)),
        ],
        out_specs=pl.BlockSpec((1, b_blk, NCLS), lambda i: (i, 0, 0)),
        compiler_params=pltpu.CompilerParams(
            dimension_semantics=("parallel",)),
    )(x3, mmat, wl, bias)


# Static one-hot: onehot[w_pad, dw, j, dx] = 1 iff w_pad == 4*j + dw + dx.
_OH = (np.arange(WPAD)[:, None, None, None] ==
       (4 * np.arange(PW)[None, None, :, None]
        + np.arange(POOL)[None, :, None, None]
        + np.arange(KW)[None, None, None, :])).astype(np.float32)


@jax.jit
def model1_forward(x_nchw, conv_w_oihw, lin_w, lin_b):
    # TODO(synk): torch.split([32,32,32],dim=1)+cat needs 96 channels (conv expects 3);
    # it is the identity when valid, so it is treated as identity here.
    # TODO(synk): Sequential([conv]*3) repeats the same Conv2d(3,32) and is ill-typed
    # after the first application; the conv is applied once.
    B = x_nchw.shape[0]
    # >= 2 grid steps when possible (v7x megacore), capped for v5e VMEM safety.
    b_blk = min(MAX_B_BLK, max(1, -(-B // 2)))
    g = -(-B // b_blk)
    b_pad = g * b_blk

    # ---- compact input slab: NCHW -> padded NHWC -> (Bp, 38, 114) -> row-triplets ----
    x = x_nchw.astype(jnp.float32)
    if b_pad != B:
        x = jnp.pad(x, ((0, b_pad - B), (0, 0), (0, 0), (0, 0)))
    xp = jnp.pad(jnp.transpose(x, (0, 2, 3, 1)),
                 ((0, 0), (1, 1), (1, 1), (0, 0)))                 # (Bp, 38, 38, 3)
    x2 = xp.reshape(b_pad, HPAD, WPAD * CIN)                        # (Bp, 38, 114) lanes=(w_pad,cin)
    x3 = jnp.concatenate([x2[:, 0:H, :], x2[:, 1:H + 1, :], x2[:, 2:H + 2, :]],
                         axis=2)                                    # (Bp, 36, 342) lanes=(dy,w_pad,cin)
    x3 = jnp.pad(x3, ((0, 0), (0, 0), (0, KPAD - KIN))).astype(jnp.bfloat16)

    # ---- conv matrix: rows = (dy, w_pad, cin), cols = (dw, j, cout) ----
    # M[dy, w, c, dw, j, o] = Wconv[o, c, dy, w - 4j - dw]  when 0 <= w-4j-dw < 3 else 0.
    m6 = jnp.einsum('wdjx,ocyx->ywcdjo', _OH, conv_w_oihw.astype(jnp.float32))
    m6 = jnp.pad(m6, ((0, 0), (0, 0), (0, 0), (0, 0), (0, PWPAD - PW), (0, 0)))
    mmat = m6.reshape(KIN, NOUT)
    mmat = jnp.pad(mmat, ((0, KPAD - KIN), (0, 0))).astype(jnp.bfloat16)     # (384, 1536)

    # ---- linear weight: torch (cout, i, j)-flatten order -> (class, i, (j, cout)) ----
    wl = lin_w.reshape(NCLS, COUT, PH, PW)
    wl = jnp.transpose(wl, (0, 2, 3, 1))                            # (2, 9, 9, 32)
    wl = jnp.pad(wl, ((0, 0), (0, 0), (0, PWPAD - PW), (0, 0)))
    wl = wl.reshape(NCLS, PH, DWBLK).astype(jnp.float32)            # (2, 9, 384)

    bias = lin_b.reshape(1, NCLS).astype(jnp.float32)

    out = _fused_call(x3, mmat, wl, bias, b_blk, g)                 # (g, b_blk, 2)
    return out.reshape(b_pad, NCLS)[:B]


if __name__ == "__main__":
    key = jax.random.PRNGKey(0)
    kx, kw, kl, kb = jax.random.split(key, 4)
    B = 2
    x = jax.random.normal(kx, (B, CIN, H, W), jnp.float32)                    # NCHW input
    conv_w = jax.random.normal(kw, (COUT, CIN, KH, KW), jnp.float32) * 0.1    # OIHW
    lin_w = jax.random.normal(kl, (NCLS, FEAT), jnp.float32) * 0.02
    lin_b = jax.random.normal(kb, (NCLS,), jnp.float32) * 0.01

    out = jax.block_until_ready(model1_forward(x, conv_w, lin_w, lin_b))

    # Pure-JAX f32 reference (kernel streams bf16 operands -> loosened tolerance).
    ref_conv = jax.lax.conv_general_dilated(
        x, conv_w, window_strides=(1, 1), padding="SAME",
        dimension_numbers=("NCHW", "OIHW", "NCHW"))
    ref_pool = jax.lax.reduce_window(
        ref_conv, -jnp.inf, jax.lax.max,
        window_dimensions=(1, 1, POOL, POOL),
        window_strides=(1, 1, POOL, POOL), padding="VALID")
    ref_out = ref_pool.reshape(B, FEAT) @ lin_w.T + lin_b

    assert out.shape == (B, NCLS)
    np.testing.assert_allclose(np.asarray(out), np.asarray(ref_out),
                               rtol=2e-2, atol=2e-2)
    print("KERNEL_OK")
</pallas_src>

<mosaic_0001>
module attributes {stable_mosaic.version = 11 : i64} {
  func.func @kernel(%arg0: i32, %arg1: memref<1x36x384xbf16, #tpu.memory_space<vmem>>, %arg2: memref<384x1536xbf16, #tpu.memory_space<vmem>>, %arg3: memref<2x9x384xf32, #tpu.memory_space<vmem>>, %arg4: memref<1x2xf32, #tpu.memory_space<vmem>>, %arg5: memref<1x1x2xf32, #tpu.memory_space<vmem>>) attributes {dimension_semantics = [#tpu.dimension_semantics<parallel>], iteration_bounds = array<i64: 2>, scalar_prefetch = 0 : i64, scratch_operands = 0 : i64, tpu.core_type = #tpu.core_type<tc>, window_params = [{transform_indices = @transform_0, window_bounds = array<i64: 1, 36, 384>}, {pipeline_mode = #tpu.pipeline_mode<synchronous>, transform_indices = @transform_1, window_bounds = array<i64: 384, 1536>}, {pipeline_mode = #tpu.pipeline_mode<synchronous>, transform_indices = @transform_2, window_bounds = array<i64: 2, 9, 384>}, {pipeline_mode = #tpu.pipeline_mode<synchronous>, transform_indices = @transform_3, window_bounds = array<i64: 1, 2>}, {transform_indices = @transform_4, window_bounds = array<i64: 1, 1, 2>}]} {
    %c0 = arith.constant 0 : index
    %c0_0 = arith.constant 0 : index
    %0 = vector.load %arg2[%c0, %c0_0] : memref<384x1536xbf16, #tpu.memory_space<vmem>>, vector<384x1536xbf16>
    %c0_1 = arith.constant 0 : index
    %c0_2 = arith.constant 0 : index
    %c0_3 = arith.constant 0 : index
    %1 = vector.load %arg3[%c0_1, %c0_2, %c0_3] : memref<2x9x384xf32, #tpu.memory_space<vmem>>, vector<1x9x384xf32>
    %2 = vector.shape_cast %1 : vector<1x9x384xf32> to vector<9x384xf32>
    %c1 = arith.constant 1 : index
    %c0_4 = arith.constant 0 : index
    %c0_5 = arith.constant 0 : index
    %3 = vector.load %arg3[%c1, %c0_4, %c0_5] : memref<2x9x384xf32, #tpu.memory_space<vmem>>, vector<1x9x384xf32>
    %4 = vector.shape_cast %3 : vector<1x9x384xf32> to vector<9x384xf32>
    %c0_6 = arith.constant 0 : index
    %c0_7 = arith.constant 0 : index
    %c0_8 = arith.constant 0 : index
    %5 = vector.load %arg1[%c0_6, %c0_7, %c0_8] : memref<1x36x384xbf16, #tpu.memory_space<vmem>>, vector<1x36x384xbf16>
    %6 = vector.shape_cast %5 : vector<1x36x384xbf16> to vector<36x384xbf16>
    %cst = arith.constant dense<0.000000e+00> : vector<36x1536xf32>
    %7 = tpu.matmul %6, %0, %cst {dimension_numbers = #tpu.dot_dimension_numbers<[1], [0], [0], [1], [0, 0, 1, 1], [], []>} : vector<36x384xbf16>, vector<384x1536xbf16>, vector<36x1536xf32> -> vector<36x1536xf32>
    %8 = vector.extract_strided_slice %7 {offsets = [0, 0], sizes = [4, 1536], strides = [1, 1]} : vector<36x1536xf32> to vector<4x1536xf32>
    %cst_9 = arith.constant dense<0xFF800000> : vector<1536xf32>
    %9 = vector.multi_reduction <maximumf>, %8, %cst_9 [0] : vector<4x1536xf32> to vector<1536xf32>
    %10 = vector.shape_cast %9 : vector<1536xf32> to vector<1x1536xf32>
    %11 = vector.extract_strided_slice %7 {offsets = [4, 0], sizes = [4, 1536], strides = [1, 1]} : vector<36x1536xf32> to vector<4x1536xf32>
    %cst_10 = arith.constant dense<0xFF800000> : vector<1536xf32>
    %12 = vector.multi_reduction <maximumf>, %11, %cst_10 [0] : vector<4x1536xf32> to vector<1536xf32>
    %13 = vector.shape_cast %12 : vector<1536xf32> to vector<1x1536xf32>
    %14 = vector.extract_strided_slice %7 {offsets = [8, 0], sizes = [4, 1536], strides = [1, 1]} : vector<36x1536xf32> to vector<4x1536xf32>
    %cst_11 = arith.constant dense<0xFF800000> : vector<1536xf32>
    %15 = vector.multi_reduction <maximumf>, %14, %cst_11 [0] : vector<4x1536xf32> to vector<1536xf32>
    %16 = vector.shape_cast %15 : vector<1536xf32> to vector<1x1536xf32>
    %17 = vector.extract_strided_slice %7 {offsets = [12, 0], sizes = [4, 1536], strides = [1, 1]} : vector<36x1536xf32> to vector<4x1536xf32>
    %cst_12 = arith.constant dense<0xFF800000> : vector<1536xf32>
    %18 = vector.multi_reduction <maximumf>, %17, %cst_12 [0] : vector<4x1536xf32> to vector<1536xf32>
    %19 = vector.shape_cast %18 : vector<1536xf32> to vector<1x1536xf32>
    %20 = vector.extract_strided_slice %7 {offsets = [16, 0], sizes = [4, 1536], strides = [1, 1]} : vector<36x1536xf32> to vector<4x1536xf32>
    %cst_13 = arith.constant dense<0xFF800000> : vector<1536xf32>
    %21 = vector.multi_reduction <maximumf>, %20, %cst_13 [0] : vector<4x1536xf32> to vector<1536xf32>
    %22 = vector.shape_cast %21 : vector<1536xf32> to vector<1x1536xf32>
    %23 = vector.extract_strided_slice %7 {offsets = [20, 0], sizes = [4, 1536], strides = [1, 1]} : vector<36x1536xf32> to vector<4x1536xf32>
    %cst_14 = arith.constant dense<0xFF800000> : vector<1536xf32>
    %24 = vector.multi_reduction <maximumf>, %23, %cst_14 [0] : vector<4x1536xf32> to vector<1536xf32>
    %25 = vector.shape_cast %24 : vector<1536xf32> to vector<1x1536xf32>
    %26 = vector.extract_strided_slice %7 {offsets = [24, 0], sizes = [4, 1536], strides = [1, 1]} : vector<36x1536xf32> to vector<4x1536xf32>
    %cst_15 = arith.constant dense<0xFF800000> : vector<1536xf32>
    %27 = vector.multi_reduction <maximumf>, %26, %cst_15 [0] : vector<4x1536xf32> to vector<1536xf32>
    %28 = vector.shape_cast %27 : vector<1536xf32> to vector<1x1536xf32>
    %29 = vector.extract_strided_slice %7 {offsets = [28, 0], sizes = [4, 1536], strides = [1, 1]} : vector<36x1536xf32> to vector<4x1536xf32>
    %cst_16 = arith.constant dense<0xFF800000> : vector<1536xf32>
    %30 = vector.multi_reduction <maximumf>, %29, %cst_16 [0] : vector<4x1536xf32> to vector<1536xf32>
    %31 = vector.shape_cast %30 : vector<1536xf32> to vector<1x1536xf32>
    %32 = vector.extract_strided_slice %7 {offsets = [32, 0], sizes = [4, 1536], strides = [1, 1]} : vector<36x1536xf32> to vector<4x1536xf32>
    %cst_17 = arith.constant dense<0xFF800000> : vector<1536xf32>
    %33 = vector.multi_reduction <maximumf>, %32, %cst_17 [0] : vector<4x1536xf32> to vector<1536xf32>
    %34 = vector.shape_cast %33 : vector<1536xf32> to vector<1x1536xf32>
    %35 = tpu.concatenate %10, %13, %16, %19, %22, %25, %28, %31, %34 in 0 : vector<1x1536xf32>, vector<1x1536xf32>, vector<1x1536xf32>, vector<1x1536xf32>, vector<1x1536xf32>, vector<1x1536xf32>, vector<1x1536xf32>, vector<1x1536xf32>, vector<1x1536xf32> -> vector<9x1536xf32>
    %36 = vector.extract_strided_slice %35 {offsets = [0, 0], sizes = [9, 384], strides = [1, 1]} : vector<9x1536xf32> to vector<9x384xf32>
    %37 = vector.extract_strided_slice %35 {offsets = [0, 384], sizes = [9, 384], strides = [1, 1]} : vector<9x1536xf32> to vector<9x384xf32>
    %38 = arith.maximumf %36, %37 : vector<9x384xf32>
    %39 = vector.extract_strided_slice %35 {offsets = [0, 768], sizes = [9, 384], strides = [1, 1]} : vector<9x1536xf32> to vector<9x384xf32>
    %40 = vector.extract_strided_slice %35 {offsets = [0, 1152], sizes = [9, 384], strides = [1, 1]} : vector<9x1536xf32> to vector<9x384xf32>
    %41 = arith.maximumf %39, %40 : vector<9x384xf32>
    %42 = arith.maximumf %38, %41 : vector<9x384xf32>
    %43 = arith.mulf %42, %2 : vector<9x384xf32>
    %cst_18 = arith.constant dense<0.000000e+00> : vector<9xf32>
    %44 = vector.multi_reduction <add>, %43, %cst_18 [1] : vector<9x384xf32> to vector<9xf32>
    %45 = vector.shape_cast %44 : vector<9xf32> to vector<9x1xf32>
    %cst_19 = arith.constant dense<0.000000e+00> : vector<1xf32>
    %46 = vector.multi_reduction <add>, %45, %cst_19 [0] : vector<9x1xf32> to vector<1xf32>
    %47 = vector.shape_cast %46 : vector<1xf32> to vector<1x1xf32>
    %48 = arith.mulf %42, %4 : vector<9x384xf32>
    %cst_20 = arith.constant dense<0.000000e+00> : vector<9xf32>
    %49 = vector.multi_reduction <add>, %48, %cst_20 [1] : vector<9x384xf32> to vector<9xf32>
    %50 = vector.shape_cast %49 : vector<9xf32> to vector<9x1xf32>
    %cst_21 = arith.constant dense<0.000000e+00> : vector<1xf32>
    %51 = vector.multi_reduction <add>, %50, %cst_21 [0] : vector<9x1xf32> to vector<1xf32>
    %52 = vector.shape_cast %51 : vector<1xf32> to vector<1x1xf32>
    %53 = tpu.concatenate %47, %52 in 1 : vector<1x1xf32>, vector<1x1xf32> -> vector<1x2xf32>
    %c0_22 = arith.constant 0 : index
    %c0_23 = arith.constant 0 : index
    %54 = vector.load %arg4[%c0_22, %c0_23] : memref<1x2xf32, #tpu.memory_space<vmem>>, vector<1x2xf32>
    %55 = arith.addf %53, %54 : vector<1x2xf32>
    %c0_24 = arith.constant 0 : index
    %c0_25 = arith.constant 0 : index
    %c0_26 = arith.constant 0 : index
    %56 = vector.load %arg5[%c0_24, %c0_25, %c0_26] : memref<1x1x2xf32, #tpu.memory_space<vmem>>, vector<1x1x2xf32>
    %57 = vector.shape_cast %56 : vector<1x1x2xf32> to vector<1x2xf32>
    %58 = vector.shape_cast %55 : vector<1x2xf32> to vector<1x1x2xf32>
    tpu.vector_store %arg5[%c0_24, %c0_25, %c0_26], %58 {strides = array<i32>} : memref<1x1x2xf32, #tpu.memory_space<vmem>>, vector<1x1x2xf32>,
    return
  }
  func.func @transform_0(%arg0: i32) -> (i32, i32, i32) {
    %c0_i32 = arith.constant 0 : i32
    %c0_i32_0 = arith.constant 0 : i32
    %c0_i32_1 = arith.constant 0 : i32
    return %arg0, %c0_i32, %c0_i32_0 : i32, i32, i32
  }
  func.func @transform_1(%arg0: i32) -> (i32, i32) {
    %c0_i32 = arith.constant 0 : i32
    %c0_i32_0 = arith.constant 0 : i32
    %c0_i32_1 = arith.constant 0 : i32
    return %c0_i32, %c0_i32_0 : i32, i32
  }
  func.func @transform_2(%arg0: i32) -> (i32, i32, i32) {
    %c0_i32 = arith.constant 0 : i32
    %c0_i32_0 = arith.constant 0 : i32
    %c0_i32_1 = arith.constant 0 : i32
    %c0_i32_2 = arith.constant 0 : i32
    return %c0_i32, %c0_i32_0, %c0_i32_1 : i32, i32, i32
  }
  func.func @transform_3(%arg0: i32) -> (i32, i32) {
    %c0_i32 = arith.constant 0 : i32
    %c0_i32_0 = arith.constant 0 : i32
    %c0_i32_1 = arith.constant 0 : i32
    return %c0_i32, %c0_i32_0 : i32, i32
  }
  func.func @transform_4(%arg0: i32) -> (i32, i32, i32) {
    %c0_i32 = arith.constant 0 : i32
    %c0_i32_0 = arith.constant 0 : i32
    %c0_i32_1 = arith.constant 0 : i32
    return %arg0, %c0_i32, %c0_i32_0 : i32, i32, i32
  }
}

</mosaic_0001>

<llo_original>
// kernel: model1_forward.1
$region0: #{model1_forward.1}
  #allocation0 [shape = 'u32[]', space=smem, size = 0x4, offset = 0x4, fixed_abs, tag = 'smem constant byte address 0x4 - core index']
  #allocation1 [shape = 'u32[144,128]{1,0:T(1,128)}', space=vmem, size = 0x12000, scoped, tag = 'internal scratch']
  %s0 = inlined_call_operand.vmem [shape: bf16[2,36,384], index: 0, kind: input, shape index: {}]
  %s1 = inlined_call_operand.vmem [shape: bf16[384,1536], index: 1, kind: input, shape index: {}]
  %s2 = inlined_call_operand.vmem [shape: f32[2,9,384], index: 2, kind: input, shape index: {}]
  %s3 = inlined_call_operand.vmem [shape: f32[1,2], index: 3, kind: input, shape index: {}]
  %s4 = inlined_call_operand.hbm [shape: f32[2,1,2], index: 4, kind: output, shape index: {}]
  %s5 = sld [smem:[#allocation0]]
  $region49: #{model1_forward.1} parent=0
    _
  %s7 = ssub.s32 1, %s5
  %s8 = scalar_select 0, %s7, %s5
  $region1: #{model1_forward.1} parent=0
    #allocation2 [shape = 'u8[1024]{0}', space=vmem, size = 0x400, scoped, tag = 'output window, operand 0']
    #allocation3 [shape = 's32[2]{0}', space=sflag, size = 0x8, scoped, tag = 'scoped memory for model1_forward.1']
    %9 = vsyncpa [#allocation3], 0
    %s10 = scalar_lea.sflag [#allocation3], 1
    %11 = vsyncpa %s10, 0
    loop: start=0, step=1, limit=4
    $region2: #{model1_forward.1} parent=1 // loop_pre_header
      _
    $region3: #{model1_forward.1} parent=1 // loop_header
      %s13 = sphi 0, %s17
      %p14 = scmp.ge.s32.totalorder %s13, 4
      %s23 = sphi 0, %s25
      %s26 = sphi 0, %s23
      %s27 = sphi 0, %s26
      %s43 = sphi 0, %s27
      %s47 = sphi 0, %s47
      %s49 = sphi 0, %s47
      %s50 = sphi 0, %s49
      %s64 = sphi 0, %s50
      %s68 = sphi 0, %s68
      %s70 = sphi 0, %s68
      %s71 = sphi 0, %s70
      %s85 = sphi 0, %s71
      %s89 = sphi 0, %s89
      %s91 = sphi 0, %s89
      %s92 = sphi 0, %s91
      %s106 = sphi 0, %s92
      %s112 = sphi 0, %s114
      %s115 = sphi 0, %s112
      %s116 = sphi 0, %s115
      %s132 = sphi 0, %s116
    $region4: #{model1_forward.1} parent=1 // loop_header_branch
      %16 = sbr.rel (%p14) target = $region8
    $region5: #{model1_forward.1} parent=1 // loop_body
      %s18 = ssub.s32 %s13, 1
      %s19 = ssub.s32 %s13, 2
      %s20 = sadd.s32 %s13, 1
      %s21 = ssub.s32 %s13, %s20
      %p22 = scmp.eq.s32.totalorder %s21, 0
      %s24 = sadd.s32 %s23, 1
      %s25 = scalar_select %p22, %s23, %s24
      %p28 = pneg %p22
      %p29 = scmp.eq.s32.totalorder %s13, 1
      %p30 = por %p28, %p29
      %p31 = scmp.ne.s32.totalorder %s23, %s26
      %p32 = scmp.eq.s32.totalorder %s13, 0
      %p33 = por %p31, %p32
      %p34 = scmp.ne.s32.totalorder %s23, %s26
      %p35 = scmp.eq.s32.totalorder %s18, 1
      %p36 = por %p34, %p35
      %p37 = scmp.ne.s32.totalorder %s26, %s27
      %p38 = scmp.eq.s32.totalorder %s18, 0
      %p39 = por %p37, %p38
      %p40 = scmp.ne.s32.totalorder %s26, %s27
      %p41 = scmp.eq.s32.totalorder %s19, 1
      %p42 = por %p40, %p41
      %p44 = scmp.ne.s32.totalorder %s27, %s43
      %p45 = scmp.eq.s32.totalorder %s19, 0
      %p46 = por %p44, %p45
      %s48 = sadd.s32 %s47, 1
      %p51 = scmp.eq.s32.totalorder %s13, 1
      %p52 = scmp.ne.s32.totalorder %s47, %s49
      %p53 = scmp.eq.s32.totalorder %s13, 0
      %p54 = por %p52, %p53
      %p55 = scmp.ne.s32.totalorder %s47, %s49
      %p56 = scmp.eq.s32.totalorder %s18, 1
      %p57 = por %p55, %p56
      %p58 = scmp.ne.s32.totalorder %s49, %s50
      %p59 = scmp.eq.s32.totalorder %s18, 0
      %p60 = por %p58, %p59
      %p61 = scmp.ne.s32.totalorder %s49, %s50
      %p62 = scmp.eq.s32.totalorder %s19, 1
      %p63 = por %p61, %p62
      %p65 = scmp.ne.s32.totalorder %s50, %s64
      %p66 = scmp.eq.s32.totalorder %s19, 0
      %p67 = por %p65, %p66
      %s69 = sadd.s32 %s68, 1
      %p72 = scmp.eq.s32.totalorder %s13, 1
      %p73 = scmp.ne.s32.totalorder %s68, %s70
      %p74 = scmp.eq.s32.totalorder %s13, 0
      %p75 = por %p73, %p74
      %p76 = scmp.ne.s32.totalorder %s68, %s70
      %p77 = scmp.eq.s32.totalorder %s18, 1
      %p78 = por %p76, %p77
      %p79 = scmp.ne.s32.totalorder %s70, %s71
      %p80 = scmp.eq.s32.totalorder %s18, 0
      %p81 = por %p79, %p80
      %p82 = scmp.ne.s32.totalorder %s70, %s71
      %p83 = scmp.eq.s32.totalorder %s19, 1
      %p84 = por %p82, %p83
      %p86 = scmp.ne.s32.totalorder %s71, %s85
      %p87 = scmp.eq.s32.totalorder %s19, 0
      %p88 = por %p86, %p87
      %s90 = sadd.s32 %s89, 1
      %p93 = scmp.eq.s32.totalorder %s13, 1
      %p94 = scmp.ne.s32.totalorder %s89, %s91
      %p95 = scmp.eq.s32.totalorder %s13, 0
      %p96 = por %p94, %p95
      %p97 = scmp.ne.s32.totalorder %s89, %s91
      %p98 = scmp.eq.s32.totalorder %s18, 1
      %p99 = por %p97, %p98
      %p100 = scmp.ne.s32.totalorder %s91, %s92
      %p101 = scmp.eq.s32.totalorder %s18, 0
      %p102 = por %p100, %p101
      %p103 = scmp.ne.s32.totalorder %s91, %s92
      %p104 = scmp.eq.s32.totalorder %s19, 1
      %p105 = por %p103, %p104
      %p107 = scmp.ne.s32.totalorder %s92, %s106
      %p108 = scmp.eq.s32.totalorder %s19, 0
      %p109 = por %p107, %p108
      %s110 = ssub.s32 %s13, %s20
      %p111 = scmp.eq.s32.totalorder %s110, 0
      %s113 = sadd.s32 %s112, 1
      %s114 = scalar_select %p111, %s112, %s113
      %p117 = pneg %p111
      %p118 = scmp.eq.s32.totalorder %s13, 1
      %p119 = por %p117, %p118
      %p120 = scmp.ne.s32.totalorder %s112, %s115
      %p121 = scmp.eq.s32.totalorder %s13, 0
      %p122 = por %p120, %p121
      %p123 = scmp.ne.s32.totalorder %s112, %s115
      %p124 = scmp.eq.s32.totalorder %s18, 1
      %p125 = por %p123, %p124
      %p126 = scmp.ne.s32.totalorder %s115, %s116
      %p127 = scmp.eq.s32.totalorder %s18, 0
      %p128 = por %p126, %p127
      %p129 = scmp.ne.s32.totalorder %s115, %s116
      %p130 = scmp.eq.s32.totalorder %s19, 1
      %p131 = por %p129, %p130
      %p133 = scmp.ne.s32.totalorder %s116, %s132
      %p134 = scmp.eq.s32.totalorder %s19, 0
      %p135 = por %p133, %p134
      %p136 = scmp.le.s32.totalorder 1, %s13
      %p137 = scmp.lt.s32.totalorder %s13, 3
      %p138 = pnand %p136, %p137
      %p139 = pneg %p138
      // Predicated region
      $region9: #{model1_forward.1} parent=5 // pred_check
        _
      $region10: #{model1_forward.1} parent=5 // pred_check_branch
        %141 = sbr.rel (%p138) target = $region12
      $region11: #{model1_forward.1} parent=5 // pred_region
        %s142 = ssub.s32 %s13, 1
        // Predicated region
        $region13: #{model1_forward.1} parent=11 // pred_check
          %p143 = pneg %p60
        $region14: #{model1_forward.1} parent=11 // pred_check_branch
          %145 = sbr.rel (%p143) target = $region16
        $region15: #{model1_forward.1} parent=11 // pred_region
          _
        $region16: #{model1_forward.1} parent=11 // pred_fallthru
          _
        // Predicated region
        $region17: #{model1_forward.1} parent=11 // pred_check
          %p146 = pneg %p81
        $region18: #{model1_forward.1} parent=11 // pred_check_branch
          %148 = sbr.rel (%p146) target = $region20
        $region19: #{model1_forward.1} parent=11 // pred_region
          _
        $region20: #{model1_forward.1} parent=11 // pred_fallthru
          _
        // Predicated region
        $region21: #{model1_forward.1} parent=11 // pred_check
          %p149 = pneg %p102
        $region22: #{model1_forward.1} parent=11 // pred_check_branch
          %151 = sbr.rel (%p149) target = $region24
        $region23: #{model1_forward.1} parent=11 // pred_region
          _
        $region24: #{model1_forward.1} parent=11 // pred_fallthru
          _
      $region12: #{model1_forward.1} parent=5 // pred_fallthru
        _
      %p152 = scmp.lt.s32.totalorder %s13, 2
      // Predicated region
      $region25: #{model1_forward.1} parent=5 // pred_check
        %p153 = pneg %p152
      $region26: #{model1_forward.1} parent=5 // pred_check_branch
        %155 = sbr.rel (%p153) target = $region28
      $region27: #{model1_forward.1} parent=5 // pred_region
        // Predicated region
        $region29: #{model1_forward.1} parent=27 // pred_check
          %p156 = pneg %p33
        $region30: #{model1_forward.1} parent=27 // pred_check_branch
          %158 = sbr.rel (%p156) target = $region32
        $region31: #{model1_forward.1} parent=27 // pred_region
          %p159 = scmp.lt.s32.totalorder %s13, 1
          %s160 = scalar_select %p159, %s13, 1
          %s161 = smul.addr %s160, 15
          %s162 = smul.addr %s161, 4
          %s163 = scalar_lea.vmem %s0, %s162
        $region32: #{model1_forward.1} parent=27 // pred_fallthru
          _
      $region28: #{model1_forward.1} parent=5 // pred_fallthru
        _
      %p164 = scmp.le.s32.totalorder 1, %s13
      %p165 = scmp.lt.s32.totalorder %s13, 3
      %p166 = pnand %p164, %p165
      %p167 = pneg %p166
      // Predicated region
      $region33: #{model1_forward.1} parent=5 // pred_check
        _
      $region34: #{model1_forward.1} parent=5 // pred_check_branch
        %169 = sbr.rel (%p166) target = $region36
      $region35: #{model1_forward.1} parent=5 // pred_region
        %s170 = ssub.s32 %s13, 1
        %p171 = scmp.lt.s32.totalorder %s18, 1
        %s172 = scalar_select %p171, %s18, 1
        %s173 = smul.addr %s172, 15
        %s174 = smul.addr %s173, 4
        %s175 = scalar_lea.vmem %s0, %s174
        %p176 = pneg %p39
        %p177 = pneg %p36
        %p178 = pneg %p60
        %p179 = pneg %p57
        %p180 = pneg %p81
        %p181 = pneg %p78
        %p182 = pneg %p102
        %p183 = pneg %p99
        %p184 = pneg %p128
        %p185 = pneg %p125
        %s186 = sand.u32 %s115, 1
        %s187 = scalar_lea.sflag [#allocation3], %s186
        %s188 = sand.u32 %s115, 1
        %s189 = scalar_lea.vmem [#allocation2], %s188
        %p190 = scmp.lt.s32.totalorder %s18, 1
        %s191 = scalar_select %p190, %s18, 1
        %s192 = smul.addr %s191, 15
        %s193 = smul.addr %s192, 4
        %s194 = scalar_lea.vmem %s0, %s193
        %v196 = vld [vmem:[%s1] sm:$0xff]
        %v197 = vld [vmem:[%s1 + $0x8] sm:$0xff]
        %v198 = vld [vmem:[%s1 + $0x10] sm:$0xff]
        %v199 = vld [vmem:[%s1 + $0x18] sm:$0xff]
        %v200 = vld [vmem:[%s1 + $0x20] sm:$0xff]
        %v201 = vld [vmem:[%s1 + $0x28] sm:$0xff]
        %v202 = vld [vmem:[%s1 + $0x30] sm:$0xff]
        %v203 = vld [vmem:[%s1 + $0x38] sm:$0xff]
        %v204 = vld [vmem:[%s1 + $0x40] sm:$0xff]
        %v205 = vld [vmem:[%s1 + $0x48] sm:$0xff]
        %v206 = vld [vmem:[%s1 + $0x50] sm:$0xff]
        %v207 = vld [vmem:[%s1 + $0x58] sm:$0xff]
        %v208 = vld [vmem:[%s1 + $0x60] sm:$0xff]
        %v209 = vld [vmem:[%s1 + $0x68] sm:$0xff]
        %v210 = vld [vmem:[%s1 + $0x70] sm:$0xff]
        %v211 = vld [vmem:[%s1 + $0x78] sm:$0xff]
        %v212 = vld [vmem:[%s1 + $0x80] sm:$0xff]
        %v213 = vld [vmem:[%s1 + $0x88] sm:$0xff]
        %v214 = vld [vmem:[%s1 + $0x90] sm:$0xff]
        %v215 = vld [vmem:[%s1 + $0x98] sm:$0xff]
        %v216 = vld [vmem:[%s1 + $0xa0] sm:$0xff]
        %v217 = vld [vmem:[%s1 + $0xa8] sm:$0xff]
        %v218 = vld [vmem:[%s1 + $0xb0] sm:$0xff]
        %v219 = vld [vmem:[%s1 + $0xb8] sm:$0xff]
        %v220 = vld [vmem:[%s1 + $0xc0] sm:$0xff]
        %v221 = vld [vmem:[%s1 + $0xc8] sm:$0xff]
        %v222 = vld [vmem:[%s1 + $0xd0] sm:$0xff]
        %v223 = vld [vmem:[%s1 + $0xd8] sm:$0xff]
        %v224 = vld [vmem:[%s1 + $0xe0] sm:$0xff]
        %v225 = vld [vmem:[%s1 + $0xe8] sm:$0xff]
        %v226 = vld [vmem:[%s1 + $0xf0] sm:$0xff]
        %v227 = vld [vmem:[%s1 + $0xf8] sm:$0xff]
        %v228 = vld [vmem:[%s1 + $0x100] sm:$0xff]
        %v229 = vld [vmem:[%s1 + $0x108] sm:$0xff]
        %v230 = vld [vmem:[%s1 + $0x110] sm:$0xff]
        %v231 = vld [vmem:[%s1 + $0x118] sm:$0xff]
        %v232 = vld [vmem:[%s1 + $0x120] sm:$0xff]
        %v233 = vld [vmem:[%s1 + $0x128] sm:$0xff]
        %v234 = vld [vmem:[%s1 + $0x130] sm:$0xff]
        %v235 = vld [vmem:[%s1 + $0x138] sm:$0xff]
        %v236 = vld [vmem:[%s1 + $0x140] sm:$0xff]
        %v237 = vld [vmem:[%s1 + $0x148] sm:$0xff]
        %v238 = vld [vmem:[%s1 + $0x150] sm:$0xff]
        %v239 = vld [vmem:[%s1 + $0x158] sm:$0xff]
        %v240 = vld [vmem:[%s1 + $0x160] sm:$0xff]
        %v241 = vld [vmem:[%s1 + $0x168] sm:$0xff]
        %v242 = vld [vmem:[%s1 + $0x170] sm:$0xff]
        %v243 = vld [vmem:[%s1 + $0x178] sm:$0xff]
        %v244 = vld [vmem:[%s1 + $0x180] sm:$0xff]
        %v245 = vld [vmem:[%s1 + $0x188] sm:$0xff]
        %v246 = vld [vmem:[%s1 + $0x190] sm:$0xff]
        %v247 = vld [vmem:[%s1 + $0x198] sm:$0xff]
        %v248 = vld [vmem:[%s1 + $0x1a0] sm:$0xff]
        %v249 = vld [vmem:[%s1 + $0x1a8] sm:$0xff]
        %v250 = vld [vmem:[%s1 + $0x1b0] sm:$0xff]
        %v251 = vld [vmem:[%s1 + $0x1b8] sm:$0xff]
        %v252 = vld [vmem:[%s1 + $0x1c0] sm:$0xff]
        %v253 = vld [vmem:[%s1 + $0x1c8] sm:$0xff]
        %v254 = vld [vmem:[%s1 + $0x1d0] sm:$0xff]
        %v255 = vld [vmem:[%s1 + $0x1d8] sm:$0xff]
        %v256 = vld [vmem:[%s1 + $0x1e0] sm:$0xff]
        %v257 = vld [vmem:[%s1 + $0x1e8] sm:$0xff]
        %v258 = vld [vmem:[%s1 + $0x1f0] sm:$0xff]
        %v259 = vld [vmem:[%s1 + $0x1f8] sm:$0xff]
        %v260 = vld [vmem:[%s1 + $0x200] sm:$0xff]
        %v261 = vld [vmem:[%s1 + $0x208] sm:$0xff]
        %v262 = vld [vmem:[%s1 + $0x210] sm:$0xff]
        %v263 = vld [vmem:[%s1 + $0x218] sm:$0xff]
        %v264 = vld [vmem:[%s1 + $0x220] sm:$0xff]
        %v265 = vld [vmem:[%s1 + $0x228] sm:$0xff]
        %v266 = vld [vmem:[%s1 + $0x230] sm:$0xff]
        %v267 = vld [vmem:[%s1 + $0x238] sm:$0xff]
        %v268 = vld [vmem:[%s1 + $0x240] sm:$0xff]
        %v269 = vld [vmem:[%s1 + $0x248] sm:$0xff]
        %v270 = vld [vmem:[%s1 + $0x250] sm:$0xff]
        %v271 = vld [vmem:[%s1 + $0x258] sm:$0xff]
        %v272 = vld [vmem:[%s1 + $0x260] sm:$0xff]
        %v273 = vld [vmem:[%s1 + $0x268] sm:$0xff]
        %v274 = vld [vmem:[%s1 + $0x270] sm:$0xff]
        %v275 = vld [vmem:[%s1 + $0x278] sm:$0xff]
        %v276 = vld [vmem:[%s1 + $0x280] sm:$0xff]
        %v277 = vld [vmem:[%s1 + $0x288] sm:$0xff]
        %v278 = vld [vmem:[%s1 + $0x290] sm:$0xff]
        %v279 = vld [vmem:[%s1 + $0x298] sm:$0xff]
        %v280 = vld [vmem:[%s1 + $0x2a0] sm:$0xff]
        %v281 = vld [vmem:[%s1 + $0x2a8] sm:$0xff]
        %v282 = vld [vmem:[%s1 + $0x2b0] sm:$0xff]
        %v283 = vld [vmem:[%s1 + $0x2b8] sm:$0xff]
        %v284 = vld [vmem:[%s1 + $0x2c0] sm:$0xff]
        %v285 = vld [vmem:[%s1 + $0x2c8] sm:$0xff]
        %v286 = vld [vmem:[%s1 + $0x2d0] sm:$0xff]
        %v287 = vld [vmem:[%s1 + $0x2d8] sm:$0xff]
        %v288 = vld [vmem:[%s1 + $0x2e0] sm:$0xff]
        %v289 = vld [vmem:[%s1 + $0x2e8] sm:$0xff]
        %v290 = vld [vmem:[%s1 + $0x2f0] sm:$0xff]
        %v291 = vld [vmem:[%s1 + $0x2f8] sm:$0xff]
        %v292 = vld [vmem:[%s1 + $0x300] sm:$0xff]
        %v293 = vld [vmem:[%s1 + $0x308] sm:$0xff]
        %v294 = vld [vmem:[%s1 + $0x310] sm:$0xff]
        %v295 = vld [vmem:[%s1 + $0x318] sm:$0xff]
        %v296 = vld [vmem:[%s1 + $0x320] sm:$0xff]
        %v297 = vld [vmem:[%s1 + $0x328] sm:$0xff]
        %v298 = vld [vmem:[%s1 + $0x330] sm:$0xff]
        %v299 = vld [vmem:[%s1 + $0x338] sm:$0xff]
        %v300 = vld [vmem:[%s1 + $0x340] sm:$0xff]
        %v301 = vld [vmem:[%s1 + $0x348] sm:$0xff]
        %v302 = vld [vmem:[%s1 + $0x350] sm:$0xff]
        %v303 = vld [vmem:[%s1 + $0x358] sm:$0xff]
        %v304 = vld [vmem:[%s1 + $0x360] sm:$0xff]
        %v305 = vld [vmem:[%s1 + $0x368] sm:$0xff]
        %v306 = vld [vmem:[%s1 + $0x370] sm:$0xff]
        %v307 = vld [vmem:[%s1 + $0x378] sm:$0xff]
        %v308 = vld [vmem:[%s1 + $0x380] sm:$0xff]
        %v309 = vld [vmem:[%s1 + $0x388] sm:$0xff]
        %v310 = vld [vmem:[%s1 + $0x390] sm:$0xff]
        %v311 = vld [vmem:[%s1 + $0x398] sm:$0xff]
        %v312 = vld [vmem:[%s1 + $0x3a0] sm:$0xff]
        %v313 = vld [vmem:[%s1 + $0x3a8] sm:$0xff]
        %v314 = vld [vmem:[%s1 + $0x3b0] sm:$0xff]
        %v315 = vld [vmem:[%s1 + $0x3b8] sm:$0xff]
        %v316 = vld [vmem:[%s1 + $0x3c0] sm:$0xff]
        %v317 = vld [vmem:[%s1 + $0x3c8] sm:$0xff]
        %v318 = vld [vmem:[%s1 + $0x3d0] sm:$0xff]
        %v319 = vld [vmem:[%s1 + $0x3d8] sm:$0xff]
        %v320 = vld [vmem:[%s1 + $0x3e0] sm:$0xff]
        %v321 = vld [vmem:[%s1 + $0x3e8] sm:$0xff]
        %v322 = vld [vmem:[%s1 + $0x3f0] sm:$0xff]
        %v323 = vld [vmem:[%s1 + $0x3f8] sm:$0xff]
        %v324 = vld [vmem:[%s1 + $0x400] sm:$0xff]
        %v325 = vld [vmem:[%s1 + $0x408] sm:$0xff]
        %v326 = vld [vmem:[%s1 + $0x410] sm:$0xff]
        %v327 = vld [vmem:[%s1 + $0x418] sm:$0xff]
        %v328 = vld [vmem:[%s1 + $0x420] sm:$0xff]
        %v329 = vld [vmem:[%s1 + $0x428] sm:$0xff]
        %v330 = vld [vmem:[%s1 + $0x430] sm:$0xff]
        %v331 = vld [vmem:[%s1 + $0x438] sm:$0xff]
        %v332 = vld [vmem:[%s1 + $0x440] sm:$0xff]
        %v333 = vld [vmem:[%s1 + $0x448] sm:$0xff]
        %v334 = vld [vmem:[%s1 + $0x450] sm:$0xff]
        %v335 = vld [vmem:[%s1 + $0x458] sm:$0xff]
        %v336 = vld [vmem:[%s1 + $0x460] sm:$0xff]
        %v337 = vld [vmem:[%s1 + $0x468] sm:$0xff]
        %v338 = vld [vmem:[%s1 + $0x470] sm:$0xff]
        %v339 = vld [vmem:[%s1 + $0x478] sm:$0xff]
        %v340 = vld [vmem:[%s1 + $0x480] sm:$0xff]
        %v341 = vld [vmem:[%s1 + $0x488] sm:$0xff]
        %v342 = vld [vmem:[%s1 + $0x490] sm:$0xff]
        %v343 = vld [vmem:[%s1 + $0x498] sm:$0xff]
        %v344 = vld [vmem:[%s1 + $0x4a0] sm:$0xff]
        %v345 = vld [vmem:[%s1 + $0x4a8] sm:$0xff]
        %v346 = vld [vmem:[%s1 + $0x4b0] sm:$0xff]
        %v347 = vld [vmem:[%s1 + $0x4b8] sm:$0xff]
        %v348 = vld [vmem:[%s1 + $0x4c0] sm:$0xff]
        %v349 = vld [vmem:[%s1 + $0x4c8] sm:$0xff]
        %v350 = vld [vmem:[%s1 + $0x4d0] sm:$0xff]
        %v351 = vld [vmem:[%s1 + $0x4d8] sm:$0xff]
        %v352 = vld [vmem:[%s1 + $0x4e0] sm:$0xff]
        %v353 = vld [vmem:[%s1 + $0x4e8] sm:$0xff]
        %v354 = vld [vmem:[%s1 + $0x4f0] sm:$0xff]
        %v355 = vld [vmem:[%s1 + $0x4f8] sm:$0xff]
        %v356 = vld [vmem:[%s1 + $0x500] sm:$0xff]
        %v357 = vld [vmem:[%s1 + $0x508] sm:$0xff]
        %v358 = vld [vmem:[%s1 + $0x510] sm:$0xff]
        %v359 = vld [vmem:[%s1 + $0x518] sm:$0xff]
        %v360 = vld [vmem:[%s1 + $0x520] sm:$0xff]
        %v361 = vld [vmem:[%s1 + $0x528] sm:$0xff]
        %v362 = vld [vmem:[%s1 + $0x530] sm:$0xff]
        %v363 = vld [vmem:[%s1 + $0x538] sm:$0xff]
        %v364 = vld [vmem:[%s1 + $0x540] sm:$0xff]
        %v365 = vld [vmem:[%s1 + $0x548] sm:$0xff]
        %v366 = vld [vmem:[%s1 + $0x550] sm:$0xff]
        %v367 = vld [vmem:[%s1 + $0x558] sm:$0xff]
        %v368 = vld [vmem:[%s1 + $0x560] sm:$0xff]
        %v369 = vld [vmem:[%s1 + $0x568] sm:$0xff]
        %v370 = vld [vmem:[%s1 + $0x570] sm:$0xff]
        %v371 = vld [vmem:[%s1 + $0x578] sm:$0xff]
        %v372 = vld [vmem:[%s1 + $0x580] sm:$0xff]
        %v373 = vld [vmem:[%s1 + $0x588] sm:$0xff]
        %v374 = vld [vmem:[%s1 + $0x590] sm:$0xff]
        %v375 = vld [vmem:[%s1 + $0x598] sm:$0xff]
        %v376 = vld [vmem:[%s1 + $0x5a0] sm:$0xff]
        %v377 = vld [vmem:[%s1 + $0x5a8] sm:$0xff]
        %v378 = vld [vmem:[%s1 + $0x5b0] sm:$0xff]
        %v379 = vld [vmem:[%s1 + $0x5b8] sm:$0xff]
        %v380 = vld [vmem:[%s1 + $0x5c0] sm:$0xff]
        %v381 = vld [vmem:[%s1 + $0x5c8] sm:$0xff]
        %v382 = vld [vmem:[%s1 + $0x5d0] sm:$0xff]
        %v383 = vld [vmem:[%s1 + $0x5d8] sm:$0xff]
        %v384 = vld [vmem:[%s1 + $0x5e0] sm:$0xff]
        %v385 = vld [vmem:[%s1 + $0x5e8] sm:$0xff]
        %v386 = vld [vmem:[%s1 + $0x5f0] sm:$0xff]
        %v387 = vld [vmem:[%s1 + $0x5f8] sm:$0xff]
        %v388 = vld [vmem:[%s1 + $0x600] sm:$0xff]
        %v389 = vld [vmem:[%s1 + $0x608] sm:$0xff]
        %v390 = vld [vmem:[%s1 + $0x610] sm:$0xff]
        %v391 = vld [vmem:[%s1 + $0x618] sm:$0xff]
        %v392 = vld [vmem:[%s1 + $0x620] sm:$0xff]
        %v393 = vld [vmem:[%s1 + $0x628] sm:$0xff]
        %v394 = vld [vmem:[%s1 + $0x630] sm:$0xff]
        %v395 = vld [vmem:[%s1 + $0x638] sm:$0xff]
        %v396 = vld [vmem:[%s1 + $0x640] sm:$0xff]
        %v397 = vld [vmem:[%s1 + $0x648] sm:$0xff]
        %v398 = vld [vmem:[%s1 + $0x650] sm:$0xff]
        %v399 = vld [vmem:[%s1 + $0x658] sm:$0xff]
        %v400 = vld [vmem:[%s1 + $0x660] sm:$0xff]
        %v401 = vld [vmem:[%s1 + $0x668] sm:$0xff]
        %v402 = vld [vmem:[%s1 + $0x670] sm:$0xff]
        %v403 = vld [vmem:[%s1 + $0x678] sm:$0xff]
        %v404 = vld [vmem:[%s1 + $0x680] sm:$0xff]
        %v405 = vld [vmem:[%s1 + $0x688] sm:$0xff]
        %v406 = vld [vmem:[%s1 + $0x690] sm:$0xff]
        %v407 = vld [vmem:[%s1 + $0x698] sm:$0xff]
        %v408 = vld [vmem:[%s1 + $0x6a0] sm:$0xff]
        %v409 = vld [vmem:[%s1 + $0x6a8] sm:$0xff]
        %v410 = vld [vmem:[%s1 + $0x6b0] sm:$0xff]
        %v411 = vld [vmem:[%s1 + $0x6b8] sm:$0xff]
        %v412 = vld [vmem:[%s1 + $0x6c0] sm:$0xff]
        %v413 = vld [vmem:[%s1 + $0x6c8] sm:$0xff]
        %v414 = vld [vmem:[%s1 + $0x6d0] sm:$0xff]
        %v415 = vld [vmem:[%s1 + $0x6d8] sm:$0xff]
        %v416 = vld [vmem:[%s1 + $0x6e0] sm:$0xff]
        %v417 = vld [vmem:[%s1 + $0x6e8] sm:$0xff]
        %v418 = vld [vmem:[%s1 + $0x6f0] sm:$0xff]
        %v419 = vld [vmem:[%s1 + $0x6f8] sm:$0xff]
        %v420 = vld [vmem:[%s1 + $0x700] sm:$0xff]
        %v421 = vld [vmem:[%s1 + $0x708] sm:$0xff]
        %v422 = vld [vmem:[%s1 + $0x710] sm:$0xff]
        %v423 = vld [vmem:[%s1 + $0x718] sm:$0xff]
        %v424 = vld [vmem:[%s1 + $0x720] sm:$0xff]
        %v425 = vld [vmem:[%s1 + $0x728] sm:$0xff]
        %v426 = vld [vmem:[%s1 + $0x730] sm:$0xff]
        %v427 = vld [vmem:[%s1 + $0x738] sm:$0xff]
        %v428 = vld [vmem:[%s1 + $0x740] sm:$0xff]
        %v429 = vld [vmem:[%s1 + $0x748] sm:$0xff]
        %v430 = vld [vmem:[%s1 + $0x750] sm:$0xff]
        %v431 = vld [vmem:[%s1 + $0x758] sm:$0xff]
        %v432 = vld [vmem:[%s1 + $0x760] sm:$0xff]
        %v433 = vld [vmem:[%s1 + $0x768] sm:$0xff]
        %v434 = vld [vmem:[%s1 + $0x770] sm:$0xff]
        %v435 = vld [vmem:[%s1 + $0x778] sm:$0xff]
        %v436 = vld [vmem:[%s1 + $0x780] sm:$0xff]
        %v437 = vld [vmem:[%s1 + $0x788] sm:$0xff]
        %v438 = vld [vmem:[%s1 + $0x790] sm:$0xff]
        %v439 = vld [vmem:[%s1 + $0x798] sm:$0xff]
        %v440 = vld [vmem:[%s1 + $0x7a0] sm:$0xff]
        %v441 = vld [vmem:[%s1 + $0x7a8] sm:$0xff]
        %v442 = vld [vmem:[%s1 + $0x7b0] sm:$0xff]
        %v443 = vld [vmem:[%s1 + $0x7b8] sm:$0xff]
        %v444 = vld [vmem:[%s1 + $0x7c0] sm:$0xff]
        %v445 = vld [vmem:[%s1 + $0x7c8] sm:$0xff]
        %v446 = vld [vmem:[%s1 + $0x7d0] sm:$0xff]
        %v447 = vld [vmem:[%s1 + $0x7d8] sm:$0xff]
        %v448 = vld [vmem:[%s1 + $0x7e0] sm:$0xff]
        %v449 = vld [vmem:[%s1 + $0x7e8] sm:$0xff]
        %v450 = vld [vmem:[%s1 + $0x7f0] sm:$0xff]
        %v451 = vld [vmem:[%s1 + $0x7f8] sm:$0xff]
        %v452 = vld [vmem:[%s1 + $0x800] sm:$0xff]
        %v453 = vld [vmem:[%s1 + $0x808] sm:$0xff]
        %v454 = vld [vmem:[%s1 + $0x810] sm:$0xff]
        %v455 = vld [vmem:[%s1 + $0x818] sm:$0xff]
        %v456 = vld [vmem:[%s1 + $0x820] sm:$0xff]
        %v457 = vld [vmem:[%s1 + $0x828] sm:$0xff]
        %v458 = vld [vmem:[%s1 + $0x830] sm:$0xff]
        %v459 = vld [vmem:[%s1 + $0x838] sm:$0xff]
        %v460 = vld [vmem:[%s1 + $0x840] sm:$0xff]
        %v461 = vld [vmem:[%s1 + $0x848] sm:$0xff]
        %v462 = vld [vmem:[%s1 + $0x850] sm:$0xff]
        %v463 = vld [vmem:[%s1 + $0x858] sm:$0xff]
        %v464 = vld [vmem:[%s1 + $0x860] sm:$0xff]
        %v465 = vld [vmem:[%s1 + $0x868] sm:$0xff]
        %v466 = vld [vmem:[%s1 + $0x870] sm:$0xff]
        %v467 = vld [vmem:[%s1 + $0x878] sm:$0xff]
        %v468 = vld [vmem:[%s1 + $0x880] sm:$0xff]
        %v469 = vld [vmem:[%s1 + $0x888] sm:$0xff]
        %v470 = vld [vmem:[%s1 + $0x890] sm:$0xff]
        %v471 = vld [vmem:[%s1 + $0x898] sm:$0xff]
        %v472 = vld [vmem:[%s1 + $0x8a0] sm:$0xff]
        %v473 = vld [vmem:[%s1 + $0x8a8] sm:$0xff]
        %v474 = vld [vmem:[%s1 + $0x8b0] sm:$0xff]
        %v475 = vld [vmem:[%s1 + $0x8b8] sm:$0xff]
        %v476 = vld [vmem:[%s1 + $0x8c0] sm:$0xff]
        %v477 = vld [vmem:[%s1 + $0x8c8] sm:$0xff]
        %v478 = vld [vmem:[%s1 + $0x8d0] sm:$0xff]
        %v479 = vld [vmem:[%s1 + $0x8d8] sm:$0xff]
        %v480 = vld [vmem:[%s1 + $0x8e0] sm:$0xff]
        %v481 = vld [vmem:[%s1 + $0x8e8] sm:$0xff]
        %v482 = vld [vmem:[%s1 + $0x8f0] sm:$0xff]
        %v483 = vld [vmem:[%s1 + $0x8f8] sm:$0xff]
        %v484 = vld [vmem:[%s2] sm:$0xff]
        %v485 = vld [vmem:[%s2 + $0x8] sm:$0xff]
        %v486 = vld [vmem:[%s2 + $0x10] sm:$0xff]
        %v487 = vld [vmem:[%s2 + $0x18] sm:$0x1]
        %v488 = vld [vmem:[%s2 + $0x20] sm:$0x1]
        %v489 = vld [vmem:[%s2 + $0x28] sm:$0x1]
        %s490 = scalar_lea.vmem %s2, 48
        %v491 = vld [vmem:[%s490] sm:$0xff]
        %v492 = vld [vmem:[%s490 + $0x8] sm:$0xff]
        %v493 = vld [vmem:[%s490 + $0x10] sm:$0xff]
        %v494 = vld [vmem:[%s490 + $0x18] sm:$0x1]
        %v495 = vld [vmem:[%s490 + $0x20] sm:$0x1]
        %v496 = vld [vmem:[%s490 + $0x28] sm:$0x1]
        %v497 = vld [vmem:[%s194] sm:$0xff]
        %v498 = vld [vmem:[%s194 + $0x8] sm:$0xf]
        %v499 = vld [vmem:[%s194 + $0xc] sm:$0xff]
        %v500 = vld [vmem:[%s194 + $0x14] sm:$0xf]
        %v501 = vld [vmem:[%s194 + $0x18] sm:$0xff]
        %v502 = vld [vmem:[%s194 + $0x20] sm:$0xf]
        %v503 = vld [vmem:[%s194 + $0x24] sm:$0xff]
        %v504 = vld [vmem:[%s194 + $0x2c] sm:$0xf]
        %v505 = vld [vmem:[%s194 + $0x30] sm:$0x33]
        %v506 = vld [vmem:[%s194 + $0x38] sm:$0x3]
        %v517 = vunpack.c.l.b16 %v497
        %v518 = vunpack.c.h.b16 %v497
        %v519 = vunpack.c.l.b16 %v498
        %v520 = vunpack.c.l.b16 %v499
        %v521 = vunpack.c.h.b16 %v499
        %v522 = vunpack.c.l.b16 %v500
        %v523 = vunpack.c.l.b16 %v501
        %v524 = vunpack.c.h.b16 %v501
        %v525 = vunpack.c.l.b16 %v502
        %v526 = vunpack.c.l.b16 %v503
        %v527 = vunpack.c.h.b16 %v503
        %v528 = vunpack.c.l.b16 %v504
        %v529 = vunpack.c.l.b16 %v505
        %v530 = vunpack.c.h.b16 %v505
        %v531 = vunpack.c.l.b16 %v506
        %v532 = vpack.c.b16 %v520, %v517
        %v533 = vpack.c.b16 %v521, %v518
        %v534 = vpack.c.b16 %v522, %v519
        %v535 = vpack.c.b16 %v526, %v523
        %v536 = vpack.c.b16 %v527, %v524
        %v537 = vpack.c.b16 %v528, %v525
        %v538 = vpack.c.b16 %v529, %v529
        %v539 = vpack.c.b16 %v530, %v530
        %v540 = vpack.c.b16 %v531, %v531
        %v838 = vunpack.c.l.b16 %v196
        %v839 = vunpack.c.h.b16 %v196
        %v840 = vunpack.c.l.b16 %v197
        %v841 = vunpack.c.h.b16 %v197
        %v842 = vunpack.c.l.b16 %v198
        %v843 = vunpack.c.h.b16 %v198
        %v844 = vunpack.c.l.b16 %v199
        %v845 = vunpack.c.h.b16 %v199
        %v846 = vunpack.c.l.b16 %v200
        %v847 = vunpack.c.h.b16 %v200
        %v848 = vunpack.c.l.b16 %v201
        %v849 = vunpack.c.h.b16 %v201
        %v850 = vunpack.c.l.b16 %v202
        %v851 = vunpack.c.h.b16 %v202
        %v852 = vunpack.c.l.b16 %v203
        %v853 = vunpack.c.h.b16 %v203
        %v854 = vunpack.c.l.b16 %v204
        %v855 = vunpack.c.h.b16 %v204
        %v856 = vunpack.c.l.b16 %v205
        %v857 = vunpack.c.h.b16 %v205
        %v858 = vunpack.c.l.b16 %v206
        %v859 = vunpack.c.h.b16 %v206
        %v860 = vunpack.c.l.b16 %v207
        %v861 = vunpack.c.h.b16 %v207
        %v862 = vunpack.c.l.b16 %v208
        %v863 = vunpack.c.h.b16 %v208
        %v864 = vunpack.c.l.b16 %v209
        %v865 = vunpack.c.h.b16 %v209
        %v866 = vunpack.c.l.b16 %v210
        %v867 = vunpack.c.h.b16 %v210
        %v868 = vunpack.c.l.b16 %v211
        %v869 = vunpack.c.h.b16 %v211
        %v870 = vunpack.c.l.b16 %v212
        %v871 = vunpack.c.h.b16 %v212
        %v872 = vunpack.c.l.b16 %v213
        %v873 = vunpack.c.h.b16 %v213
        %v874 = vunpack.c.l.b16 %v214
        %v875 = vunpack.c.h.b16 %v214
        %v876 = vunpack.c.l.b16 %v215
        %v877 = vunpack.c.h.b16 %v215
        %v878 = vunpack.c.l.b16 %v216
        %v879 = vunpack.c.h.b16 %v216
        %v880 = vunpack.c.l.b16 %v217
        %v881 = vunpack.c.h.b16 %v217
        %v882 = vunpack.c.l.b16 %v218
        %v883 = vunpack.c.h.b16 %v218
        %v884 = vunpack.c.l.b16 %v219
        %v885 = vunpack.c.h.b16 %v219
        %v886 = vunpack.c.l.b16 %v220
        %v887 = vunpack.c.h.b16 %v220
        %v888 = vunpack.c.l.b16 %v221
        %v889 = vunpack.c.h.b16 %v221
        %v890 = vunpack.c.l.b16 %v222
        %v891 = vunpack.c.h.b16 %v222
        %v892 = vunpack.c.l.b16 %v223
        %v893 = vunpack.c.h.b16 %v223
        %v894 = vunpack.c.l.b16 %v224
        %v895 = vunpack.c.h.b16 %v224
        %v896 = vunpack.c.l.b16 %v225
        %v897 = vunpack.c.h.b16 %v225
        %v898 = vunpack.c.l.b16 %v226
        %v899 = vunpack.c.h.b16 %v226
        %v900 = vunpack.c.l.b16 %v227
        %v901 = vunpack.c.h.b16 %v227
        %v902 = vunpack.c.l.b16 %v228
        %v903 = vunpack.c.h.b16 %v228
        %v904 = vunpack.c.l.b16 %v229
        %v905 = vunpack.c.h.b16 %v229
        %v906 = vunpack.c.l.b16 %v230
        %v907 = vunpack.c.h.b16 %v230
        %v908 = vunpack.c.l.b16 %v231
        %v909 = vunpack.c.h.b16 %v231
        %v910 = vunpack.c.l.b16 %v232
        %v911 = vunpack.c.h.b16 %v232
        %v912 = vunpack.c.l.b16 %v233
        %v913 = vunpack.c.h.b16 %v233
        %v914 = vunpack.c.l.b16 %v234
        %v915 = vunpack.c.h.b16 %v234
        %v916 = vunpack.c.l.b16 %v235
        %v917 = vunpack.c.h.b16 %v235
        %v918 = vunpack.c.l.b16 %v236
        %v919 = vunpack.c.h.b16 %v236
        %v920 = vunpack.c.l.b16 %v237
        %v921 = vunpack.c.h.b16 %v237
        %v922 = vunpack.c.l.b16 %v238
        %v923 = vunpack.c.h.b16 %v238
        %v924 = vunpack.c.l.b16 %v239
        %v925 = vunpack.c.h.b16 %v239
        %v926 = vunpack.c.l.b16 %v240
        %v927 = vunpack.c.h.b16 %v240
        %v928 = vunpack.c.l.b16 %v241
        %v929 = vunpack.c.h.b16 %v241
        %v930 = vunpack.c.l.b16 %v242
        %v931 = vunpack.c.h.b16 %v242
        %v932 = vunpack.c.l.b16 %v243
        %v933 = vunpack.c.h.b16 %v243
        %v934 = vunpack.c.l.b16 %v244
        %v935 = vunpack.c.h.b16 %v244
        %v936 = vunpack.c.l.b16 %v245
        %v937 = vunpack.c.h.b16 %v245
        %v938 = vunpack.c.l.b16 %v246
        %v939 = vunpack.c.h.b16 %v246
        %v940 = vunpack.c.l.b16 %v247
        %v941 = vunpack.c.h.b16 %v247
        %v942 = vunpack.c.l.b16 %v248
        %v943 = vunpack.c.h.b16 %v248
        %v944 = vunpack.c.l.b16 %v249
        %v945 = vunpack.c.h.b16 %v249
        %v946 = vunpack.c.l.b16 %v250
        %v947 = vunpack.c.h.b16 %v250
        %v948 = vunpack.c.l.b16 %v251
        %v949 = vunpack.c.h.b16 %v251
        %v950 = vunpack.c.l.b16 %v252
        %v951 = vunpack.c.h.b16 %v252
        %v952 = vunpack.c.l.b16 %v253
        %v953 = vunpack.c.h.b16 %v253
        %v954 = vunpack.c.l.b16 %v254
        %v955 = vunpack.c.h.b16 %v254
        %v956 = vunpack.c.l.b16 %v255
        %v957 = vunpack.c.h.b16 %v255
        %v958 = vunpack.c.l.b16 %v256
        %v959 = vunpack.c.h.b16 %v256
        %v960 = vunpack.c.l.b16 %v257
        %v961 = vunpack.c.h.b16 %v257
        %v962 = vunpack.c.l.b16 %v258
        %v963 = vunpack.c.h.b16 %v258
        %v964 = vunpack.c.l.b16 %v259
        %v965 = vunpack.c.h.b16 %v259
        %v966 = vunpack.c.l.b16 %v260
        %v967 = vunpack.c.h.b16 %v260
        %v968 = vunpack.c.l.b16 %v261
        %v969 = vunpack.c.h.b16 %v261
        %v970 = vunpack.c.l.b16 %v262
        %v971 = vunpack.c.h.b16 %v262
        %v972 = vunpack.c.l.b16 %v263
        %v973 = vunpack.c.h.b16 %v263
        %v974 = vunpack.c.l.b16 %v264
        %v975 = vunpack.c.h.b16 %v264
        %v976 = vunpack.c.l.b16 %v265
        %v977 = vunpack.c.h.b16 %v265
        %v978 = vunpack.c.l.b16 %v266
        %v979 = vunpack.c.h.b16 %v266
        %v980 = vunpack.c.l.b16 %v267
        %v981 = vunpack.c.h.b16 %v267
        %v982 = vunpack.c.l.b16 %v268
        %v983 = vunpack.c.h.b16 %v268
        %v984 = vunpack.c.l.b16 %v269
        %v985 = vunpack.c.h.b16 %v269
        %v986 = vunpack.c.l.b16 %v270
        %v987 = vunpack.c.h.b16 %v270
        %v988 = vunpack.c.l.b16 %v271
        %v989 = vunpack.c.h.b16 %v271
        %v990 = vunpack.c.l.b16 %v272
        %v991 = vunpack.c.h.b16 %v272
        %v992 = vunpack.c.l.b16 %v273
        %v993 = vunpack.c.h.b16 %v273
        %v994 = vunpack.c.l.b16 %v274
        %v995 = vunpack.c.h.b16 %v274
        %v996 = vunpack.c.l.b16 %v275
        %v997 = vunpack.c.h.b16 %v275
        %v998 = vunpack.c.l.b16 %v276
        %v999 = vunpack.c.h.b16 %v276
        %v1000 = vunpack.c.l.b16 %v277
        %v1001 = vunpack.c.h.b16 %v277
        %v1002 = vunpack.c.l.b16 %v278
        %v1003 = vunpack.c.h.b16 %v278
        %v1004 = vunpack.c.l.b16 %v279
        %v1005 = vunpack.c.h.b16 %v279
        %v1006 = vunpack.c.l.b16 %v280
        %v1007 = vunpack.c.h.b16 %v280
        %v1008 = vunpack.c.l.b16 %v281
        %v1009 = vunpack.c.h.b16 %v281
        %v1010 = vunpack.c.l.b16 %v282
        %v1011 = vunpack.c.h.b16 %v282
        %v1012 = vunpack.c.l.b16 %v283
        %v1013 = vunpack.c.h.b16 %v283
        %v1014 = vunpack.c.l.b16 %v284
        %v1015 = vunpack.c.h.b16 %v284
        %v1016 = vunpack.c.l.b16 %v285
        %v1017 = vunpack.c.h.b16 %v285
        %v1018 = vunpack.c.l.b16 %v286
        %v1019 = vunpack.c.h.b16 %v286
        %v1020 = vunpack.c.l.b16 %v287
        %v1021 = vunpack.c.h.b16 %v287
        %v1022 = vunpack.c.l.b16 %v288
        %v1023 = vunpack.c.h.b16 %v288
        %v1024 = vunpack.c.l.b16 %v289
        %v1025 = vunpack.c.h.b16 %v289
        %v1026 = vunpack.c.l.b16 %v290
        %v1027 = vunpack.c.h.b16 %v290
        %v1028 = vunpack.c.l.b16 %v291
        %v1029 = vunpack.c.h.b16 %v291
        %v1030 = vunpack.c.l.b16 %v292
        %v1031 = vunpack.c.h.b16 %v292
        %v1032 = vunpack.c.l.b16 %v293
        %v1033 = vunpack.c.h.b16 %v293
        %v1034 = vunpack.c.l.b16 %v294
        %v1035 = vunpack.c.h.b16 %v294
        %v1036 = vunpack.c.l.b16 %v295
        %v1037 = vunpack.c.h.b16 %v295
        %v1038 = vunpack.c.l.b16 %v296
        %v1039 = vunpack.c.h.b16 %v296
        %v1040 = vunpack.c.l.b16 %v297
        %v1041 = vunpack.c.h.b16 %v297
        %v1042 = vunpack.c.l.b16 %v298
        %v1043 = vunpack.c.h.b16 %v298
        %v1044 = vunpack.c.l.b16 %v299
        %v1045 = vunpack.c.h.b16 %v299
        %v1046 = vunpack.c.l.b16 %v300
        %v1047 = vunpack.c.h.b16 %v300
        %v1048 = vunpack.c.l.b16 %v301
        %v1049 = vunpack.c.h.b16 %v301
        %v1050 = vunpack.c.l.b16 %v302
        %v1051 = vunpack.c.h.b16 %v302
        %v1052 = vunpack.c.l.b16 %v303
        %v1053 = vunpack.c.h.b16 %v303
        %v1054 = vunpack.c.l.b16 %v304
        %v1055 = vunpack.c.h.b16 %v304
        %v1056 = vunpack.c.l.b16 %v305
        %v1057 = vunpack.c.h.b16 %v305
        %v1058 = vunpack.c.l.b16 %v306
        %v1059 = vunpack.c.h.b16 %v306
        %v1060 = vunpack.c.l.b16 %v307
        %v1061 = vunpack.c.h.b16 %v307
        %v1062 = vunpack.c.l.b16 %v308
        %v1063 = vunpack.c.h.b16 %v308
        %v1064 = vunpack.c.l.b16 %v309
        %v1065 = vunpack.c.h.b16 %v309
        %v1066 = vunpack.c.l.b16 %v310
        %v1067 = vunpack.c.h.b16 %v310
        %v1068 = vunpack.c.l.b16 %v311
        %v1069 = vunpack.c.h.b16 %v311
        %v1070 = vunpack.c.l.b16 %v312
        %v1071 = vunpack.c.h.b16 %v312
        %v1072 = vunpack.c.l.b16 %v313
        %v1073 = vunpack.c.h.b16 %v313
        %v1074 = vunpack.c.l.b16 %v314
        %v1075 = vunpack.c.h.b16 %v314
        %v1076 = vunpack.c.l.b16 %v315
        %v1077 = vunpack.c.h.b16 %v315
        %v1078 = vunpack.c.l.b16 %v316
        %v1079 = vunpack.c.h.b16 %v316
        %v1080 = vunpack.c.l.b16 %v317
        %v1081 = vunpack.c.h.b16 %v317
        %v1082 = vunpack.c.l.b16 %v318
        %v1083 = vunpack.c.h.b16 %v318
        %v1084 = vunpack.c.l.b16 %v319
        %v1085 = vunpack.c.h.b16 %v319
        %v1086 = vunpack.c.l.b16 %v320
        %v1087 = vunpack.c.h.b16 %v320
        %v1088 = vunpack.c.l.b16 %v321
        %v1089 = vunpack.c.h.b16 %v321
        %v1090 = vunpack.c.l.b16 %v322
        %v1091 = vunpack.c.h.b16 %v322
        %v1092 = vunpack.c.l.b16 %v323
        %v1093 = vunpack.c.h.b16 %v323
        %v1094 = vunpack.c.l.b16 %v324
        %v1095 = vunpack.c.h.b16 %v324
        %v1096 = vunpack.c.l.b16 %v325
        %v1097 = vunpack.c.h.b16 %v325
        %v1098 = vunpack.c.l.b16 %v326
        %v1099 = vunpack.c.h.b16 %v326
        %v1100 = vunpack.c.l.b16 %v327
        %v1101 = vunpack.c.h.b16 %v327
        %v1102 = vunpack.c.l.b16 %v328
        %v1103 = vunpack.c.h.b16 %v328
        %v1104 = vunpack.c.l.b16 %v329
        %v1105 = vunpack.c.h.b16 %v329
        %v1106 = vunpack.c.l.b16 %v330
        %v1107 = vunpack.c.h.b16 %v330
        %v1108 = vunpack.c.l.b16 %v331
        %v1109 = vunpack.c.h.b16 %v331
        %v1110 = vunpack.c.l.b16 %v332
        %v1111 = vunpack.c.h.b16 %v332
        %v1112 = vunpack.c.l.b16 %v333
        %v1113 = vunpack.c.h.b16 %v333
        %v1114 = vunpack.c.l.b16 %v334
        %v1115 = vunpack.c.h.b16 %v334
        %v1116 = vunpack.c.l.b16 %v335
        %v1117 = vunpack.c.h.b16 %v335
        %v1118 = vunpack.c.l.b16 %v336
        %v1119 = vunpack.c.h.b16 %v336
        %v1120 = vunpack.c.l.b16 %v337
        %v1121 = vunpack.c.h.b16 %v337
        %v1122 = vunpack.c.l.b16 %v338
        %v1123 = vunpack.c.h.b16 %v338
        %v1124 = vunpack.c.l.b16 %v339
        %v1125 = vunpack.c.h.b16 %v339
        %v1126 = vunpack.c.l.b16 %v340
        %v1127 = vunpack.c.h.b16 %v340
        %v1128 = vunpack.c.l.b16 %v341
        %v1129 = vunpack.c.h.b16 %v341
        %v1130 = vunpack.c.l.b16 %v342
        %v1131 = vunpack.c.h.b16 %v342
        %v1132 = vunpack.c.l.b16 %v343
        %v1133 = vunpack.c.h.b16 %v343
        %v1134 = vunpack.c.l.b16 %v344
        %v1135 = vunpack.c.h.b16 %v344
        %v1136 = vunpack.c.l.b16 %v345
        %v1137 = vunpack.c.h.b16 %v345
        %v1138 = vunpack.c.l.b16 %v346
        %v1139 = vunpack.c.h.b16 %v346
        %v1140 = vunpack.c.l.b16 %v347
        %v1141 = vunpack.c.h.b16 %v347
        %v1142 = vunpack.c.l.b16 %v348
        %v1143 = vunpack.c.h.b16 %v348
        %v1144 = vunpack.c.l.b16 %v349
        %v1145 = vunpack.c.h.b16 %v349
        %v1146 = vunpack.c.l.b16 %v350
        %v1147 = vunpack.c.h.b16 %v350
        %v1148 = vunpack.c.l.b16 %v351
        %v1149 = vunpack.c.h.b16 %v351
        %v1150 = vunpack.c.l.b16 %v352
        %v1151 = vunpack.c.h.b16 %v352
        %v1152 = vunpack.c.l.b16 %v353
        %v1153 = vunpack.c.h.b16 %v353
        %v1154 = vunpack.c.l.b16 %v354
        %v1155 = vunpack.c.h.b16 %v354
        %v1156 = vunpack.c.l.b16 %v355
        %v1157 = vunpack.c.h.b16 %v355
        %v1158 = vunpack.c.l.b16 %v356
        %v1159 = vunpack.c.h.b16 %v356
        %v1160 = vunpack.c.l.b16 %v357
        %v1161 = vunpack.c.h.b16 %v357
        %v1162 = vunpack.c.l.b16 %v358
        %v1163 = vunpack.c.h.b16 %v358
        %v1164 = vunpack.c.l.b16 %v359
        %v1165 = vunpack.c.h.b16 %v359
        %v1166 = vunpack.c.l.b16 %v360
        %v1167 = vunpack.c.h.b16 %v360
        %v1168 = vunpack.c.l.b16 %v361
        %v1169 = vunpack.c.h.b16 %v361
        %v1170 = vunpack.c.l.b16 %v362
        %v1171 = vunpack.c.h.b16 %v362
        %v1172 = vunpack.c.l.b16 %v363
        %v1173 = vunpack.c.h.b16 %v363
        %v1174 = vunpack.c.l.b16 %v364
        %v1175 = vunpack.c.h.b16 %v364
        %v1176 = vunpack.c.l.b16 %v365
        %v1177 = vunpack.c.h.b16 %v365
        %v1178 = vunpack.c.l.b16 %v366
        %v1179 = vunpack.c.h.b16 %v366
        %v1180 = vunpack.c.l.b16 %v367
        %v1181 = vunpack.c.h.b16 %v367
        %v1182 = vunpack.c.l.b16 %v368
        %v1183 = vunpack.c.h.b16 %v368
        %v1184 = vunpack.c.l.b16 %v369
        %v1185 = vunpack.c.h.b16 %v369
        %v1186 = vunpack.c.l.b16 %v370
        %v1187 = vunpack.c.h.b16 %v370
        %v1188 = vunpack.c.l.b16 %v371
        %v1189 = vunpack.c.h.b16 %v371
        %v1190 = vunpack.c.l.b16 %v372
        %v1191 = vunpack.c.h.b16 %v372
        %v1192 = vunpack.c.l.b16 %v373
        %v1193 = vunpack.c.h.b16 %v373
        %v1194 = vunpack.c.l.b16 %v374
        %v1195 = vunpack.c.h.b16 %v374
        %v1196 = vunpack.c.l.b16 %v375
        %v1197 = vunpack.c.h.b16 %v375
        %v1198 = vunpack.c.l.b16 %v376
        %v1199 = vunpack.c.h.b16 %v376
        %v1200 = vunpack.c.l.b16 %v377
        %v1201 = vunpack.c.h.b16 %v377
        %v1202 = vunpack.c.l.b16 %v378
        %v1203 = vunpack.c.h.b16 %v378
        %v1204 = vunpack.c.l.b16 %v379
        %v1205 = vunpack.c.h.b16 %v379
        %v1206 = vunpack.c.l.b16 %v380
        %v1207 = vunpack.c.h.b16 %v380
        %v1208 = vunpack.c.l.b16 %v381
        %v1209 = vunpack.c.h.b16 %v381
        %v1210 = vunpack.c.l.b16 %v382
        %v1211 = vunpack.c.h.b16 %v382
        %v1212 = vunpack.c.l.b16 %v383
        %v1213 = vunpack.c.h.b16 %v383
        %v1214 = vunpack.c.l.b16 %v384
        %v1215 = vunpack.c.h.b16 %v384
        %v1216 = vunpack.c.l.b16 %v385
        %v1217 = vunpack.c.h.b16 %v385
        %v1218 = vunpack.c.l.b16 %v386
        %v1219 = vunpack.c.h.b16 %v386
        %v1220 = vunpack.c.l.b16 %v387
        %v1221 = vunpack.c.h.b16 %v387
        %v1222 = vunpack.c.l.b16 %v388
        %v1223 = vunpack.c.h.b16 %v388
        %v1224 = vunpack.c.l.b16 %v389
        %v1225 = vunpack.c.h.b16 %v389
        %v1226 = vunpack.c.l.b16 %v390
        %v1227 = vunpack.c.h.b16 %v390
        %v1228 = vunpack.c.l.b16 %v391
        %v1229 = vunpack.c.h.b16 %v391
        %v1230 = vunpack.c.l.b16 %v392
        %v1231 = vunpack.c.h.b16 %v392
        %v1232 = vunpack.c.l.b16 %v393
        %v1233 = vunpack.c.h.b16 %v393
        %v1234 = vunpack.c.l.b16 %v394
        %v1235 = vunpack.c.h.b16 %v394
        %v1236 = vunpack.c.l.b16 %v395
        %v1237 = vunpack.c.h.b16 %v395
        %v1238 = vunpack.c.l.b16 %v396
        %v1239 = vunpack.c.h.b16 %v396
        %v1240 = vunpack.c.l.b16 %v397
        %v1241 = vunpack.c.h.b16 %v397
        %v1242 = vunpack.c.l.b16 %v398
        %v1243 = vunpack.c.h.b16 %v398
        %v1244 = vunpack.c.l.b16 %v399
        %v1245 = vunpack.c.h.b16 %v399
        %v1246 = vunpack.c.l.b16 %v400
        %v1247 = vunpack.c.h.b16 %v400
        %v1248 = vunpack.c.l.b16 %v401
        %v1249 = vunpack.c.h.b16 %v401
        %v1250 = vunpack.c.l.b16 %v402
        %v1251 = vunpack.c.h.b16 %v402
        %v1252 = vunpack.c.l.b16 %v403
        %v1253 = vunpack.c.h.b16 %v403
        %v1254 = vunpack.c.l.b16 %v404
        %v1255 = vunpack.c.h.b16 %v404
        %v1256 = vunpack.c.l.b16 %v405
        %v1257 = vunpack.c.h.b16 %v405
        %v1258 = vunpack.c.l.b16 %v406
        %v1259 = vunpack.c.h.b16 %v406
        %v1260 = vunpack.c.l.b16 %v407
        %v1261 = vunpack.c.h.b16 %v407
        %v1262 = vunpack.c.l.b16 %v408
        %v1263 = vunpack.c.h.b16 %v408
        %v1264 = vunpack.c.l.b16 %v409
        %v1265 = vunpack.c.h.b16 %v409
        %v1266 = vunpack.c.l.b16 %v410
        %v1267 = vunpack.c.h.b16 %v410
        %v1268 = vunpack.c.l.b16 %v411
        %v1269 = vunpack.c.h.b16 %v411
        %v1270 = vunpack.c.l.b16 %v412
        %v1271 = vunpack.c.h.b16 %v412
        %v1272 = vunpack.c.l.b16 %v413
        %v1273 = vunpack.c.h.b16 %v413
        %v1274 = vunpack.c.l.b16 %v414
        %v1275 = vunpack.c.h.b16 %v414
        %v1276 = vunpack.c.l.b16 %v415
        %v1277 = vunpack.c.h.b16 %v415
        %v1278 = vunpack.c.l.b16 %v416
        %v1279 = vunpack.c.h.b16 %v416
        %v1280 = vunpack.c.l.b16 %v417
        %v1281 = vunpack.c.h.b16 %v417
        %v1282 = vunpack.c.l.b16 %v418
        %v1283 = vunpack.c.h.b16 %v418
        %v1284 = vunpack.c.l.b16 %v419
        %v1285 = vunpack.c.h.b16 %v419
        %v1286 = vunpack.c.l.b16 %v420
        %v1287 = vunpack.c.h.b16 %v420
        %v1288 = vunpack.c.l.b16 %v421
        %v1289 = vunpack.c.h.b16 %v421
        %v1290 = vunpack.c.l.b16 %v422
        %v1291 = vunpack.c.h.b16 %v422
        %v1292 = vunpack.c.l.b16 %v423
        %v1293 = vunpack.c.h.b16 %v423
        %v1294 = vunpack.c.l.b16 %v424
        %v1295 = vunpack.c.h.b16 %v424
        %v1296 = vunpack.c.l.b16 %v425
        %v1297 = vunpack.c.h.b16 %v425
        %v1298 = vunpack.c.l.b16 %v426
        %v1299 = vunpack.c.h.b16 %v426
        %v1300 = vunpack.c.l.b16 %v427
        %v1301 = vunpack.c.h.b16 %v427
        %v1302 = vunpack.c.l.b16 %v428
        %v1303 = vunpack.c.h.b16 %v428
        %v1304 = vunpack.c.l.b16 %v429
        %v1305 = vunpack.c.h.b16 %v429
        %v1306 = vunpack.c.l.b16 %v430
        %v1307 = vunpack.c.h.b16 %v430
        %v1308 = vunpack.c.l.b16 %v431
        %v1309 = vunpack.c.h.b16 %v431
        %v1310 = vunpack.c.l.b16 %v432
        %v1311 = vunpack.c.h.b16 %v432
        %v1312 = vunpack.c.l.b16 %v433
        %v1313 = vunpack.c.h.b16 %v433
        %v1314 = vunpack.c.l.b16 %v434
        %v1315 = vunpack.c.h.b16 %v434
        %v1316 = vunpack.c.l.b16 %v435
        %v1317 = vunpack.c.h.b16 %v435
        %v1318 = vunpack.c.l.b16 %v436
        %v1319 = vunpack.c.h.b16 %v436
        %v1320 = vunpack.c.l.b16 %v437
        %v1321 = vunpack.c.h.b16 %v437
        %v1322 = vunpack.c.l.b16 %v438
        %v1323 = vunpack.c.h.b16 %v438
        %v1324 = vunpack.c.l.b16 %v439
        %v1325 = vunpack.c.h.b16 %v439
        %v1326 = vunpack.c.l.b16 %v440
        %v1327 = vunpack.c.h.b16 %v440
        %v1328 = vunpack.c.l.b16 %v441
        %v1329 = vunpack.c.h.b16 %v441
        %v1330 = vunpack.c.l.b16 %v442
        %v1331 = vunpack.c.h.b16 %v442
        %v1332 = vunpack.c.l.b16 %v443
        %v1333 = vunpack.c.h.b16 %v443
        %v1334 = vunpack.c.l.b16 %v444
        %v1335 = vunpack.c.h.b16 %v444
        %v1336 = vunpack.c.l.b16 %v445
        %v1337 = vunpack.c.h.b16 %v445
        %v1338 = vunpack.c.l.b16 %v446
        %v1339 = vunpack.c.h.b16 %v446
        %v1340 = vunpack.c.l.b16 %v447
        %v1341 = vunpack.c.h.b16 %v447
        %v1342 = vunpack.c.l.b16 %v448
        %v1343 = vunpack.c.h.b16 %v448
        %v1344 = vunpack.c.l.b16 %v449
        %v1345 = vunpack.c.h.b16 %v449
        %v1346 = vunpack.c.l.b16 %v450
        %v1347 = vunpack.c.h.b16 %v450
        %v1348 = vunpack.c.l.b16 %v451
        %v1349 = vunpack.c.h.b16 %v451
        %v1350 = vunpack.c.l.b16 %v452
        %v1351 = vunpack.c.h.b16 %v452
        %v1352 = vunpack.c.l.b16 %v453
        %v1353 = vunpack.c.h.b16 %v453
        %v1354 = vunpack.c.l.b16 %v454
        %v1355 = vunpack.c.h.b16 %v454
        %v1356 = vunpack.c.l.b16 %v455
        %v1357 = vunpack.c.h.b16 %v455
        %v1358 = vunpack.c.l.b16 %v456
        %v1359 = vunpack.c.h.b16 %v456
        %v1360 = vunpack.c.l.b16 %v457
        %v1361 = vunpack.c.h.b16 %v457
        %v1362 = vunpack.c.l.b16 %v458
        %v1363 = vunpack.c.h.b16 %v458
        %v1364 = vunpack.c.l.b16 %v459
        %v1365 = vunpack.c.h.b16 %v459
        %v1366 = vunpack.c.l.b16 %v460
        %v1367 = vunpack.c.h.b16 %v460
        %v1368 = vunpack.c.l.b16 %v461
        %v1369 = vunpack.c.h.b16 %v461
        %v1370 = vunpack.c.l.b16 %v462
        %v1371 = vunpack.c.h.b16 %v462
        %v1372 = vunpack.c.l.b16 %v463
        %v1373 = vunpack.c.h.b16 %v463
        %v1374 = vunpack.c.l.b16 %v464
        %v1375 = vunpack.c.h.b16 %v464
        %v1376 = vunpack.c.l.b16 %v465
        %v1377 = vunpack.c.h.b16 %v465
        %v1378 = vunpack.c.l.b16 %v466
        %v1379 = vunpack.c.h.b16 %v466
        %v1380 = vunpack.c.l.b16 %v467
        %v1381 = vunpack.c.h.b16 %v467
        %v1382 = vunpack.c.l.b16 %v468
        %v1383 = vunpack.c.h.b16 %v468
        %v1384 = vunpack.c.l.b16 %v469
        %v1385 = vunpack.c.h.b16 %v469
        %v1386 = vunpack.c.l.b16 %v470
        %v1387 = vunpack.c.h.b16 %v470
        %v1388 = vunpack.c.l.b16 %v471
        %v1389 = vunpack.c.h.b16 %v471
        %v1390 = vunpack.c.l.b16 %v472
        %v1391 = vunpack.c.h.b16 %v472
        %v1392 = vunpack.c.l.b16 %v473
        %v1393 = vunpack.c.h.b16 %v473
        %v1394 = vunpack.c.l.b16 %v474
        %v1395 = vunpack.c.h.b16 %v474
        %v1396 = vunpack.c.l.b16 %v475
        %v1397 = vunpack.c.h.b16 %v475
        %v1398 = vunpack.c.l.b16 %v476
        %v1399 = vunpack.c.h.b16 %v476
        %v1400 = vunpack.c.l.b16 %v477
        %v1401 = vunpack.c.h.b16 %v477
        %v1402 = vunpack.c.l.b16 %v478
        %v1403 = vunpack.c.h.b16 %v478
        %v1404 = vunpack.c.l.b16 %v479
        %v1405 = vunpack.c.h.b16 %v479
        %v1406 = vunpack.c.l.b16 %v480
        %v1407 = vunpack.c.h.b16 %v480
        %v1408 = vunpack.c.l.b16 %v481
        %v1409 = vunpack.c.h.b16 %v481
        %v1410 = vunpack.c.l.b16 %v482
        %v1411 = vunpack.c.h.b16 %v482
        %v1412 = vunpack.c.l.b16 %v483
        %v1413 = vunpack.c.h.b16 %v483
        %v1414 = vpack.c.b16 %v850, %v838
        %v1415 = vpack.c.b16 %v851, %v839
        %v1416 = vpack.c.b16 %v852, %v840
        %v1417 = vpack.c.b16 %v853, %v841
        %v1418 = vpack.c.b16 %v854, %v842
        %v1419 = vpack.c.b16 %v855, %v843
        %v1420 = vpack.c.b16 %v856, %v844
        %v1421 = vpack.c.b16 %v857, %v845
        %v1422 = vpack.c.b16 %v858, %v846
        %v1423 = vpack.c.b16 %v859, %v847
        %v1424 = vpack.c.b16 %v860, %v848
        %v1425 = vpack.c.b16 %v861, %v849
        %v1426 = vpack.c.b16 %v874, %v862
        %v1427 = vpack.c.b16 %v875, %v863
        %v1428 = vpack.c.b16 %v876, %v864
        %v1429 = vpack.c.b16 %v877, %v865
        %v1430 = vpack.c.b16 %v878, %v866
        %v1431 = vpack.c.b16 %v879, %v867
        %v1432 = vpack.c.b16 %v880, %v868
        %v1433 = vpack.c.b16 %v881, %v869
        %v1434 = vpack.c.b16 %v882, %v870
        %v1435 = vpack.c.b16 %v883, %v871
        %v1436 = vpack.c.b16 %v884, %v872
        %v1437 = vpack.c.b16 %v885, %v873
        %v1438 = vpack.c.b16 %v898, %v886
        %v1439 = vpack.c.b16 %v899, %v887
        %v1440 = vpack.c.b16 %v900, %v888
        %v1441 = vpack.c.b16 %v901, %v889
        %v1442 = vpack.c.b16 %v902, %v890
        %v1443 = vpack.c.b16 %v903, %v891
        %v1444 = vpack.c.b16 %v904, %v892
        %v1445 = vpack.c.b16 %v905, %v893
        %v1446 = vpack.c.b16 %v906, %v894
        %v1447 = vpack.c.b16 %v907, %v895
        %v1448 = vpack.c.b16 %v908, %v896
        %v1449 = vpack.c.b16 %v909, %v897
        %v1450 = vpack.c.b16 %v922, %v910
        %v1451 = vpack.c.b16 %v923, %v911
        %v1452 = vpack.c.b16 %v924, %v912
        %v1453 = vpack.c.b16 %v925, %v913
        %v1454 = vpack.c.b16 %v926, %v914
        %v1455 = vpack.c.b16 %v927, %v915
        %v1456 = vpack.c.b16 %v928, %v916
        %v1457 = vpack.c.b16 %v929, %v917
        %v1458 = vpack.c.b16 %v930, %v918
        %v1459 = vpack.c.b16 %v931, %v919
        %v1460 = vpack.c.b16 %v932, %v920
        %v1461 = vpack.c.b16 %v933, %v921
        %v1462 = vpack.c.b16 %v946, %v934
        %v1463 = vpack.c.b16 %v947, %v935
        %v1464 = vpack.c.b16 %v948, %v936
        %v1465 = vpack.c.b16 %v949, %v937
        %v1466 = vpack.c.b16 %v950, %v938
        %v1467 = vpack.c.b16 %v951, %v939
        %v1468 = vpack.c.b16 %v952, %v940
        %v1469 = vpack.c.b16 %v953, %v941
        %v1470 = vpack.c.b16 %v954, %v942
        %v1471 = vpack.c.b16 %v955, %v943
        %v1472 = vpack.c.b16 %v956, %v944
        %v1473 = vpack.c.b16 %v957, %v945
        %v1474 = vpack.c.b16 %v970, %v958
        %v1475 = vpack.c.b16 %v971, %v959
        %v1476 = vpack.c.b16 %v972, %v960
        %v1477 = vpack.c.b16 %v973, %v961
        %v1478 = vpack.c.b16 %v974, %v962
        %v1479 = vpack.c.b16 %v975, %v963
        %v1480 = vpack.c.b16 %v976, %v964
        %v1481 = vpack.c.b16 %v977, %v965
        %v1482 = vpack.c.b16 %v978, %v966
        %v1483 = vpack.c.b16 %v979, %v967
        %v1484 = vpack.c.b16 %v980, %v968
        %v1485 = vpack.c.b16 %v981, %v969
        %v1486 = vpack.c.b16 %v994, %v982
        %v1487 = vpack.c.b16 %v995, %v983
        %v1488 = vpack.c.b16 %v996, %v984
        %v1489 = vpack.c.b16 %v997, %v985
        %v1490 = vpack.c.b16 %v998, %v986
        %v1491 = vpack.c.b16 %v999, %v987
        %v1492 = vpack.c.b16 %v1000, %v988
        %v1493 = vpack.c.b16 %v1001, %v989
        %v1494 = vpack.c.b16 %v1002, %v990
        %v1495 = vpack.c.b16 %v1003, %v991
        %v1496 = vpack.c.b16 %v1004, %v992
        %v1497 = vpack.c.b16 %v1005, %v993
        %v1498 = vpack.c.b16 %v1018, %v1006
        %v1499 = vpack.c.b16 %v1019, %v1007
        %v1500 = vpack.c.b16 %v1020, %v1008
        %v1501 = vpack.c.b16 %v1021, %v1009
        %v1502 = vpack.c.b16 %v1022, %v1010
        %v1503 = vpack.c.b16 %v1023, %v1011
        %v1504 = vpack.c.b16 %v1024, %v1012
        %v1505 = vpack.c.b16 %v1025, %v1013
        %v1506 = vpack.c.b16 %v1026, %v1014
        %v1507 = vpack.c.b16 %v1027, %v1015
        %v1508 = vpack.c.b16 %v1028, %v1016
        %v1509 = vpack.c.b16 %v1029, %v1017
        %v1510 = vpack.c.b16 %v1042, %v1030
        %v1511 = vpack.c.b16 %v1043, %v1031
        %v1512 = vpack.c.b16 %v1044, %v1032
        %v1513 = vpack.c.b16 %v1045, %v1033
        %v1514 = vpack.c.b16 %v1046, %v1034
        %v1515 = vpack.c.b16 %v1047, %v1035
        %v1516 = vpack.c.b16 %v1048, %v1036
        %v1517 = vpack.c.b16 %v1049, %v1037
        %v1518 = vpack.c.b16 %v1050, %v1038
        %v1519 = vpack.c.b16 %v1051, %v1039
        %v1520 = vpack.c.b16 %v1052, %v1040
        %v1521 = vpack.c.b16 %v1053, %v1041
        %v1522 = vpack.c.b16 %v1066, %v1054
        %v1523 = vpack.c.b16 %v1067, %v1055
        %v1524 = vpack.c.b16 %v1068, %v1056
        %v1525 = vpack.c.b16 %v1069, %v1057
        %v1526 = vpack.c.b16 %v1070, %v1058
        %v1527 = vpack.c.b16 %v1071, %v1059
        %v1528 = vpack.c.b16 %v1072, %v1060
        %v1529 = vpack.c.b16 %v1073, %v1061
        %v1530 = vpack.c.b16 %v1074, %v1062
        %v1531 = vpack.c.b16 %v1075, %v1063
        %v1532 = vpack.c.b16 %v1076, %v1064
        %v1533 = vpack.c.b16 %v1077, %v1065
        %v1534 = vpack.c.b16 %v1090, %v1078
        %v1535 = vpack.c.b16 %v1091, %v1079
        %v1536 = vpack.c.b16 %v1092, %v1080
        %v1537 = vpack.c.b16 %v1093, %v1081
        %v1538 = vpack.c.b16 %v1094, %v1082
        %v1539 = vpack.c.b16 %v1095, %v1083
        %v1540 = vpack.c.b16 %v1096, %v1084
        %v1541 = vpack.c.b16 %v1097, %v1085
        %v1542 = vpack.c.b16 %v1098, %v1086
        %v1543 = vpack.c.b16 %v1099, %v1087
        %v1544 = vpack.c.b16 %v1100, %v1088
        %v1545 = vpack.c.b16 %v1101, %v1089
        %v1546 = vpack.c.b16 %v1114, %v1102
        %v1547 = vpack.c.b16 %v1115, %v1103
        %v1548 = vpack.c.b16 %v1116, %v1104
        %v1549 = vpack.c.b16 %v1117, %v1105
        %v1550 = vpack.c.b16 %v1118, %v1106
        %v1551 = vpack.c.b16 %v1119, %v1107
        %v1552 = vpack.c.b16 %v1120, %v1108
        %v1553 = vpack.c.b16 %v1121, %v1109
        %v1554 = vpack.c.b16 %v1122, %v1110
        %v1555 = vpack.c.b16 %v1123, %v1111
        %v1556 = vpack.c.b16 %v1124, %v1112
        %v1557 = vpack.c.b16 %v1125, %v1113
        %v1558 = vpack.c.b16 %v1138, %v1126
        %v1559 = vpack.c.b16 %v1139, %v1127
        %v1560 = vpack.c.b16 %v1140, %v1128
        %v1561 = vpack.c.b16 %v1141, %v1129
        %v1562 = vpack.c.b16 %v1142, %v1130
        %v1563 = vpack.c.b16 %v1143, %v1131
        %v1564 = vpack.c.b16 %v1144, %v1132
        %v1565 = vpack.c.b16 %v1145, %v1133
        %v1566 = vpack.c.b16 %v1146, %v1134
        %v1567 = vpack.c.b16 %v1147, %v1135
        %v1568 = vpack.c.b16 %v1148, %v1136
        %v1569 = vpack.c.b16 %v1149, %v1137
        %v1570 = vpack.c.b16 %v1162, %v1150
        %v1571 = vpack.c.b16 %v1163, %v1151
        %v1572 = vpack.c.b16 %v1164, %v1152
        %v1573 = vpack.c.b16 %v1165, %v1153
        %v1574 = vpack.c.b16 %v1166, %v1154
        %v1575 = vpack.c.b16 %v1167, %v1155
        %v1576 = vpack.c.b16 %v1168, %v1156
        %v1577 = vpack.c.b16 %v1169, %v1157
        %v1578 = vpack.c.b16 %v1170, %v1158
        %v1579 = vpack.c.b16 %v1171, %v1159
        %v1580 = vpack.c.b16 %v1172, %v1160
        %v1581 = vpack.c.b16 %v1173, %v1161
        %v1582 = vpack.c.b16 %v1186, %v1174
        %v1583 = vpack.c.b16 %v1187, %v1175
        %v1584 = vpack.c.b16 %v1188, %v1176
        %v1585 = vpack.c.b16 %v1189, %v1177
        %v1586 = vpack.c.b16 %v1190, %v1178
        %v1587 = vpack.c.b16 %v1191, %v1179
        %v1588 = vpack.c.b16 %v1192, %v1180
        %v1589 = vpack.c.b16 %v1193, %v1181
        %v1590 = vpack.c.b16 %v1194, %v1182
        %v1591 = vpack.c.b16 %v1195, %v1183
        %v1592 = vpack.c.b16 %v1196, %v1184
        %v1593 = vpack.c.b16 %v1197, %v1185
        %v1594 = vpack.c.b16 %v1210, %v1198
        %v1595 = vpack.c.b16 %v1211, %v1199
        %v1596 = vpack.c.b16 %v1212, %v1200
        %v1597 = vpack.c.b16 %v1213, %v1201
        %v1598 = vpack.c.b16 %v1214, %v1202
        %v1599 = vpack.c.b16 %v1215, %v1203
        %v1600 = vpack.c.b16 %v1216, %v1204
        %v1601 = vpack.c.b16 %v1217, %v1205
        %v1602 = vpack.c.b16 %v1218, %v1206
        %v1603 = vpack.c.b16 %v1219, %v1207
        %v1604 = vpack.c.b16 %v1220, %v1208
        %v1605 = vpack.c.b16 %v1221, %v1209
        %v1606 = vpack.c.b16 %v1234, %v1222
        %v1607 = vpack.c.b16 %v1235, %v1223
        %v1608 = vpack.c.b16 %v1236, %v1224
        %v1609 = vpack.c.b16 %v1237, %v1225
        %v1610 = vpack.c.b16 %v1238, %v1226
        %v1611 = vpack.c.b16 %v1239, %v1227
        %v1612 = vpack.c.b16 %v1240, %v1228
        %v1613 = vpack.c.b16 %v1241, %v1229
        %v1614 = vpack.c.b16 %v1242, %v1230
        %v1615 = vpack.c.b16 %v1243, %v1231
        %v1616 = vpack.c.b16 %v1244, %v1232
        %v1617 = vpack.c.b16 %v1245, %v1233
        %v1618 = vpack.c.b16 %v1258, %v1246
        %v1619 = vpack.c.b16 %v1259, %v1247
        %v1620 = vpack.c.b16 %v1260, %v1248
        %v1621 = vpack.c.b16 %v1261, %v1249
        %v1622 = vpack.c.b16 %v1262, %v1250
        %v1623 = vpack.c.b16 %v1263, %v1251
        %v1624 = vpack.c.b16 %v1264, %v1252
        %v1625 = vpack.c.b16 %v1265, %v1253
        %v1626 = vpack.c.b16 %v1266, %v1254
        %v1627 = vpack.c.b16 %v1267, %v1255
        %v1628 = vpack.c.b16 %v1268, %v1256
        %v1629 = vpack.c.b16 %v1269, %v1257
        %v1630 = vpack.c.b16 %v1282, %v1270
        %v1631 = vpack.c.b16 %v1283, %v1271
        %v1632 = vpack.c.b16 %v1284, %v1272
        %v1633 = vpack.c.b16 %v1285, %v1273
        %v1634 = vpack.c.b16 %v1286, %v1274
        %v1635 = vpack.c.b16 %v1287, %v1275
        %v1636 = vpack.c.b16 %v1288, %v1276
        %v1637 = vpack.c.b16 %v1289, %v1277
        %v1638 = vpack.c.b16 %v1290, %v1278
        %v1639 = vpack.c.b16 %v1291, %v1279
        %v1640 = vpack.c.b16 %v1292, %v1280
        %v1641 = vpack.c.b16 %v1293, %v1281
        %v1642 = vpack.c.b16 %v1306, %v1294
        %v1643 = vpack.c.b16 %v1307, %v1295
        %v1644 = vpack.c.b16 %v1308, %v1296
        %v1645 = vpack.c.b16 %v1309, %v1297
        %v1646 = vpack.c.b16 %v1310, %v1298
        %v1647 = vpack.c.b16 %v1311, %v1299
        %v1648 = vpack.c.b16 %v1312, %v1300
        %v1649 = vpack.c.b16 %v1313, %v1301
        %v1650 = vpack.c.b16 %v1314, %v1302
        %v1651 = vpack.c.b16 %v1315, %v1303
        %v1652 = vpack.c.b16 %v1316, %v1304
        %v1653 = vpack.c.b16 %v1317, %v1305
        %v1654 = vpack.c.b16 %v1330, %v1318
        %v1655 = vpack.c.b16 %v1331, %v1319
        %v1656 = vpack.c.b16 %v1332, %v1320
        %v1657 = vpack.c.b16 %v1333, %v1321
        %v1658 = vpack.c.b16 %v1334, %v1322
        %v1659 = vpack.c.b16 %v1335, %v1323
        %v1660 = vpack.c.b16 %v1336, %v1324
        %v1661 = vpack.c.b16 %v1337, %v1325
        %v1662 = vpack.c.b16 %v1338, %v1326
        %v1663 = vpack.c.b16 %v1339, %v1327
        %v1664 = vpack.c.b16 %v1340, %v1328
        %v1665 = vpack.c.b16 %v1341, %v1329
        %v1666 = vpack.c.b16 %v1354, %v1342
        %v1667 = vpack.c.b16 %v1355, %v1343
        %v1668 = vpack.c.b16 %v1356, %v1344
        %v1669 = vpack.c.b16 %v1357, %v1345
        %v1670 = vpack.c.b16 %v1358, %v1346
        %v1671 = vpack.c.b16 %v1359, %v1347
        %v1672 = vpack.c.b16 %v1360, %v1348
        %v1673 = vpack.c.b16 %v1361, %v1349
        %v1674 = vpack.c.b16 %v1362, %v1350
        %v1675 = vpack.c.b16 %v1363, %v1351
        %v1676 = vpack.c.b16 %v1364, %v1352
        %v1677 = vpack.c.b16 %v1365, %v1353
        %v1678 = vpack.c.b16 %v1378, %v1366
        %v1679 = vpack.c.b16 %v1379, %v1367
        %v1680 = vpack.c.b16 %v1380, %v1368
        %v1681 = vpack.c.b16 %v1381, %v1369
        %v1682 = vpack.c.b16 %v1382, %v1370
        %v1683 = vpack.c.b16 %v1383, %v1371
        %v1684 = vpack.c.b16 %v1384, %v1372
        %v1685 = vpack.c.b16 %v1385, %v1373
        %v1686 = vpack.c.b16 %v1386, %v1374
        %v1687 = vpack.c.b16 %v1387, %v1375
        %v1688 = vpack.c.b16 %v1388, %v1376
        %v1689 = vpack.c.b16 %v1389, %v1377
        %v1690 = vpack.c.b16 %v1402, %v1390
        %v1691 = vpack.c.b16 %v1403, %v1391
        %v1692 = vpack.c.b16 %v1404, %v1392
        %v1693 = vpack.c.b16 %v1405, %v1393
        %v1694 = vpack.c.b16 %v1406, %v1394
        %v1695 = vpack.c.b16 %v1407, %v1395
        %v1696 = vpack.c.b16 %v1408, %v1396
        %v1697 = vpack.c.b16 %v1409, %v1397
        %v1698 = vpack.c.b16 %v1410, %v1398
        %v1699 = vpack.c.b16 %v1411, %v1399
        %v1700 = vpack.c.b16 %v1412, %v1400
        %v1701 = vpack.c.b16 %v1413, %v1401
        %1990 = vmatprep.subr.bf16.mxu0 %v1415
        %1991 = vmatpush1.bf16.msra.mxu0 %v1414
        %1992 = vmatprep.subr.bf16.mxu0 %v1427
        %1993 = vmatpush1.bf16.msra.mxu0 %v1426
        %1994 = vmatprep.subr.bf16.mxu0 %v1439
        %1995 = vmatpush1.bf16.msra.mxu0 %v1438
        %1996 = vmatprep.subr.bf16.mxu0 %v1451
        %1997 = vmatpush1.bf16.msra.mxu0 %v1450
        %1998 = vmatprep.subr.bf16.mxu0 %v1463
        %1999 = vmatpush1.bf16.msra.mxu0 %v1462
        %2000 = vmatprep.subr.bf16.mxu0 %v1475
        %2001 = vmatpush1.bf16.msra.mxu0 %v1474
        %2002 = vmatprep.subr.bf16.mxu0 %v1487
        %2003 = vmatpush1.bf16.msra.mxu0 %v1486
        %2004 = vmatprep.subr.bf16.mxu0 %v1499
        %2005 = vmatpush1.bf16.msra.mxu0 %v1498
        %2006 = vmatprep.subr.bf16.mxu0 %v1511
        %2007 = vmatpush1.bf16.msra.mxu0 %v1510
        %2008 = vmatprep.subr.bf16.mxu0 %v1523
        %2009 = vmatpush1.bf16.msra.mxu0 %v1522
        %2010 = vmatprep.subr.bf16.mxu0 %v1535
        %2011 = vmatpush1.bf16.msra.mxu0 %v1534
        %2012 = vmatprep.subr.bf16.mxu0 %v1547
        %2013 = vmatpush1.bf16.msra.mxu0 %v1546
        %2014 = vmatprep.subr.bf16.mxu0 %v1559
        %2015 = vmatpush1.bf16.msra.mxu0 %v1558
        %2016 = vmatprep.subr.bf16.mxu0 %v1571
        %2017 = vmatpush1.bf16.msra.mxu0 %v1570
        %2018 = vmatprep.subr.bf16.mxu0 %v1583
        %2019 = vmatpush1.bf16.msra.mxu0 %v1582
        %2020 = vmatprep.subr.bf16.mxu0 %v1595
        %2021 = vmatpush1.bf16.msra.mxu0 %v1594
        %2022 = vmatprep.mubr.bf16.mxu0 %v533
        %2023 = vmatmul.mubr.bf16.gmra.mrb[0].mxu0 %v532
        %v2024 = vpop.f32.mrb[0].mxu0
        %v2025 = vadd.f32 0.0, %v2024
        %v2026 = vpop.f32.mrb[0].mxu0
        %v2027 = vadd.f32 0.0, %v2026
        %v2028 = vpop.f32.mrb[0].mxu0
        %v2029 = vadd.f32 0.0, %v2028
        %v2030 = vpop.f32.mrb[0].mxu0
        %v2031 = vadd.f32 0.0, %v2030
        %2032 = vmatprep.mubr.bf16.mxu0 %v536
        %2033 = vmatmul.mubr.bf16.gmra.mrb[0].mxu0 %v535
        %v2034 = vpop.f32.mrb[0].mxu0
        %v2035 = vadd.f32 0.0, %v2034
        %v2036 = vpop.f32.mrb[0].mxu0
        %v2037 = vadd.f32 0.0, %v2036
        %v2038 = vpop.f32.mrb[0].mxu0
        %v2039 = vadd.f32 0.0, %v2038
        %v2040 = vpop.f32.mrb[0].mxu0
        %v2041 = vadd.f32 0.0, %v2040
        %2042 = vmatprep.mubr.bf16.mxu0 %v539
        %2043 = vmatmul.mubr.bf16.gmra.mrb[0].mxu0 %v538
        %v2044 = vpop.f32.mrb[0].mxu0
        %v2045 = vadd.f32 0.0, %v2044
        %v2046 = vpop.f32.mrb[0].mxu0
        %v2047 = vadd.f32 0.0, %v2046
        %v2048 = vpop.f32.mrb[0].mxu0
        %v2049 = vpop.f32.mrb[0].mxu0
        %2050 = vdwg.mxu0
        %2051 = vmatprep.subr.bf16.mxu0 %v1607
        %2052 = vmatpush1.bf16.msra.mxu0 %v1606
        %2053 = vmatprep.subr.bf16.mxu0 %v1619
        %2054 = vmatpush1.bf16.msra.mxu0 %v1618
        %2055 = vmatprep.subr.bf16.mxu0 %v1631
        %2056 = vmatpush1.bf16.msra.mxu0 %v1630
        %2057 = vmatprep.subr.bf16.mxu0 %v1643
        %2058 = vmatpush1.bf16.msra.mxu0 %v1642
        %2059 = vmatprep.subr.bf16.mxu0 %v1655
        %2060 = vmatpush1.bf16.msra.mxu0 %v1654
        %2061 = vmatprep.subr.bf16.mxu0 %v1667
        %2062 = vmatpush1.bf16.msra.mxu0 %v1666
        %2063 = vmatprep.subr.bf16.mxu0 %v1679
        %2064 = vmatpush1.bf16.msra.mxu0 %v1678
        %2065 = vmatprep.subr.bf16.mxu0 %v1691
        %2066 = vmatpush1.bf16.msra.mxu0 %v1690
        %2067 = vmatprep.subr.bf16.mxu0 0
        %2068 = vmatpush1.bf16.msra.mxu0 0
        %2069 = vmatprep.subr.bf16.mxu0 0
        %2070 = vmatpush1.bf16.msra.mxu0 0
        %2071 = vmatprep.subr.bf16.mxu0 0
        %2072 = vmatpush1.bf16.msra.mxu0 0
        %2073 = vmatprep.subr.bf16.mxu0 0
        %2074 = vmatpush1.bf16.msra.mxu0 0
        %2075 = vmatprep.subr.bf16.mxu0 0
        %2076 = vmatpush1.bf16.msra.mxu0 0
        %2077 = vmatprep.subr.bf16.mxu0 0
        %2078 = vmatpush1.bf16.msra.mxu0 0
        %2079 = vmatprep.subr.bf16.mxu0 0
        %2080 = vmatpush1.bf16.msra.mxu0 0
        %2081 = vmatprep.subr.bf16.mxu0 0
        %2082 = vmatpush1.bf16.msra.mxu0 0
        %2083 = vmatprep.mubr.bf16.mxu0 0
        %2084 = vmatmul.mubr.bf16.gmra.mrb[0].mxu0 %v534
        %v2085 = vpop.f32.mrb[0].mxu0
        %v2086 = vadd.f32 %v2025, %v2085
        %v2087 = vpop.f32.mrb[0].mxu0
        %v2088 = vadd.f32 %v2027, %v2087
        %v2089 = vpop.f32.mrb[0].mxu0
        %v2090 = vadd.f32 %v2029, %v2089
        %v2091 = vpop.f32.mrb[0].mxu0
        %v2092 = vadd.f32 %v2031, %v2091
        %2093 = vmatprep.mubr.bf16.mxu0 0
        %2094 = vmatmul.mubr.bf16.gmra.mrb[0].mxu0 %v537
        %v2095 = vpop.f32.mrb[0].mxu0
        %v2096 = vadd.f32 %v2035, %v2095
        %v2097 = vpop.f32.mrb[0].mxu0
        %v2098 = vadd.f32 %v2037, %v2097
        %v2099 = vpop.f32.mrb[0].mxu0
        %v2100 = vadd.f32 %v2039, %v2099
        %v2101 = vpop.f32.mrb[0].mxu0
        %v2102 = vadd.f32 %v2041, %v2101
        %2103 = vmatprep.mubr.bf16.mxu0 0
        %2104 = vmatmul.mubr.bf16.gmra.mrb[0].mxu0 %v540
        %v2105 = vpop.f32.mrb[0].mxu0
        %v2106 = vadd.f32 %v2045, %v2105
        %v2107 = vpop.f32.mrb[0].mxu0
        %v2108 = vadd.f32 %v2047, %v2107
        %v2109 = vpop.f32.mrb[0].mxu0
        %v2110 = vpop.f32.mrb[0].mxu0
        %2111 = vdwg.mxu0
        %2112 = vmatprep.subr.bf16.mxu0 %v1417
        %2113 = vmatpush1.bf16.msra.mxu0 %v1416
        %2114 = vmatprep.subr.bf16.mxu0 %v1429
        %2115 = vmatpush1.bf16.msra.mxu0 %v1428
        %2116 = vmatprep.subr.bf16.mxu0 %v1441
        %2117 = vmatpush1.bf16.msra.mxu0 %v1440
        %2118 = vmatprep.subr.bf16.mxu0 %v1453
        %2119 = vmatpush1.bf16.msra.mxu0 %v1452
        %2120 = vmatprep.subr.bf16.mxu0 %v1465
        %2121 = vmatpush1.bf16.msra.mxu0 %v1464
        %2122 = vmatprep.subr.bf16.mxu0 %v1477
        %2123 = vmatpush1.bf16.msra.mxu0 %v1476
        %2124 = vmatprep.subr.bf16.mxu0 %v1489
        %2125 = vmatpush1.bf16.msra.mxu0 %v1488
        %2126 = vmatprep.subr.bf16.mxu0 %v1501
        %2127 = vmatpush1.bf16.msra.mxu0 %v1500
        %2128 = vmatprep.subr.bf16.mxu0 %v1513
        %2129 = vmatpush1.bf16.msra.mxu0 %v1512
        %2130 = vmatprep.subr.bf16.mxu0 %v1525
        %2131 = vmatpush1.bf16.msra.mxu0 %v1524
        %2132 = vmatprep.subr.bf16.mxu0 %v1537
        %2133 = vmatpush1.bf16.msra.mxu0 %v1536
        %2134 = vmatprep.subr.bf16.mxu0 %v1549
        %2135 = vmatpush1.bf16.msra.mxu0 %v1548
        %2136 = vmatprep.subr.bf16.mxu0 %v1561
        %2137 = vmatpush1.bf16.msra.mxu0 %v1560
        %2138 = vmatprep.subr.bf16.mxu0 %v1573
        %2139 = vmatpush1.bf16.msra.mxu0 %v1572
        %2140 = vmatprep.subr.bf16.mxu0 %v1585
        %2141 = vmatpush1.bf16.msra.mxu0 %v1584
        %2142 = vmatprep.subr.bf16.mxu0 %v1597
        %2143 = vmatpush1.bf16.msra.mxu0 %v1596
        %2144 = vmatprep.mubr.bf16.mxu0 %v533
        %2145 = vmatmul.mubr.bf16.gmra.mrb[0].mxu0 %v532
        %v2146 = vpop.f32.mrb[0].mxu0
        %v2147 = vadd.f32 0.0, %v2146
        %v2148 = vpop.f32.mrb[0].mxu0
        %v2149 = vadd.f32 0.0, %v2148
        %v2150 = vpop.f32.mrb[0].mxu0
        %v2151 = vadd.f32 0.0, %v2150
        %v2152 = vpop.f32.mrb[0].mxu0
        %v2153 = vadd.f32 0.0, %v2152
        %2154 = vmatprep.mubr.bf16.mxu0 %v536
        %2155 = vmatmul.mubr.bf16.gmra.mrb[0].mxu0 %v535
        %v2156 = vpop.f32.mrb[0].mxu0
        %v2157 = vadd.f32 0.0, %v2156
        %v2158 = vpop.f32.mrb[0].mxu0
        %v2159 = vadd.f32 0.0, %v2158
        %v2160 = vpop.f32.mrb[0].mxu0
        %v2161 = vadd.f32 0.0, %v2160
        %v2162 = vpop.f32.mrb[0].mxu0
        %v2163 = vadd.f32 0.0, %v2162
        %2164 = vmatprep.mubr.bf16.mxu0 %v539
        %2165 = vmatmul.mubr.bf16.gmra.mrb[0].mxu0 %v538
        %v2166 = vpop.f32.mrb[0].mxu0
        %v2167 = vadd.f32 0.0, %v2166
        %v2168 = vpop.f32.mrb[0].mxu0
        %v2169 = vadd.f32 0.0, %v2168
        %v2170 = vpop.f32.mrb[0].mxu0
        %v2171 = vpop.f32.mrb[0].mxu0
        %2172 = vdwg.mxu0
        %2173 = vmatprep.subr.bf16.mxu0 %v1609
        %2174 = vmatpush1.bf16.msra.mxu0 %v1608
        %2175 = vmatprep.subr.bf16.mxu0 %v1621
        %2176 = vmatpush1.bf16.msra.mxu0 %v1620
        %2177 = vmatprep.subr.bf16.mxu0 %v1633
        %2178 = vmatpush1.bf16.msra.mxu0 %v1632
        %2179 = vmatprep.subr.bf16.mxu0 %v1645
        %2180 = vmatpush1.bf16.msra.mxu0 %v1644
        %2181 = vmatprep.subr.bf16.mxu0 %v1657
        %2182 = vmatpush1.bf16.msra.mxu0 %v1656
        %2183 = vmatprep.subr.bf16.mxu0 %v1669
        %2184 = vmatpush1.bf16.msra.mxu0 %v1668
        %2185 = vmatprep.subr.bf16.mxu0 %v1681
        %2186 = vmatpush1.bf16.msra.mxu0 %v1680
        %2187 = vmatprep.subr.bf16.mxu0 %v1693
        %2188 = vmatpush1.bf16.msra.mxu0 %v1692
        %2189 = vmatprep.subr.bf16.mxu0 0
        %2190 = vmatpush1.bf16.msra.mxu0 0
        %2191 = vmatprep.subr.bf16.mxu0 0
        %2192 = vmatpush1.bf16.msra.mxu0 0
        %2193 = vmatprep.subr.bf16.mxu0 0
        %2194 = vmatpush1.bf16.msra.mxu0 0
        %2195 = vmatprep.subr.bf16.mxu0 0
        %2196 = vmatpush1.bf16.msra.mxu0 0
        %2197 = vmatprep.subr.bf16.mxu0 0
        %2198 = vmatpush1.bf16.msra.mxu0 0
        %2199 = vmatprep.subr.bf16.mxu0 0
        %2200 = vmatpush1.bf16.msra.mxu0 0
        %2201 = vmatprep.subr.bf16.mxu0 0
        %2202 = vmatpush1.bf16.msra.mxu0 0
        %2203 = vmatprep.subr.bf16.mxu0 0
        %2204 = vmatpush1.bf16.msra.mxu0 0
        %2205 = vmatprep.mubr.bf16.mxu0 0
        %2206 = vmatmul.mubr.bf16.gmra.mrb[0].mxu0 %v534
        %v2207 = vpop.f32.mrb[0].mxu0
        %v2208 = vadd.f32 %v2147, %v2207
        %v2209 = vpop.f32.mrb[0].mxu0
        %v2210 = vadd.f32 %v2149, %v2209
        %v2211 = vpop.f32.mrb[0].mxu0
        %v2212 = vadd.f32 %v2151, %v2211
        %v2213 = vpop.f32.mrb[0].mxu0
        %v2214 = vadd.f32 %v2153, %v2213
        %2215 = vmatprep.mubr.bf16.mxu0 0
        %2216 = vmatmul.mubr.bf16.gmra.mrb[0].mxu0 %v537
        %v2217 = vpop.f32.mrb[0].mxu0
        %v2218 = vadd.f32 %v2157, %v2217
        %v2219 = vpop.f32.mrb[0].mxu0
        %v2220 = vadd.f32 %v2159, %v2219
        %v2221 = vpop.f32.mrb[0].mxu0
        %v2222 = vadd.f32 %v2161, %v2221
        %v2223 = vpop.f32.mrb[0].mxu0
        %v2224 = vadd.f32 %v2163, %v2223
        %2225 = vmatprep.mubr.bf16.mxu0 0
        %2226 = vmatmul.mubr.bf16.gmra.mrb[0].mxu0 %v540
        %v2227 = vpop.f32.mrb[0].mxu0
        %v2228 = vadd.f32 %v2167, %v2227
        %v2229 = vpop.f32.mrb[0].mxu0
        %v2230 = vadd.f32 %v2169, %v2229
        %v2231 = vpop.f32.mrb[0].mxu0
        %v2232 = vpop.f32.mrb[0].mxu0
        %2233 = vdwg.mxu0
        %2234 = vmatprep.subr.bf16.mxu0 %v1419
        %2235 = vmatpush1.bf16.msra.mxu0 %v1418
        %2236 = vmatprep.subr.bf16.mxu0 %v1431
        %2237 = vmatpush1.bf16.msra.mxu0 %v1430
        %2238 = vmatprep.subr.bf16.mxu0 %v1443
        %2239 = vmatpush1.bf16.msra.mxu0 %v1442
        %2240 = vmatprep.subr.bf16.mxu0 %v1455
        %2241 = vmatpush1.bf16.msra.mxu0 %v1454
        %2242 = vmatprep.subr.bf16.mxu0 %v1467
        %2243 = vmatpush1.bf16.msra.mxu0 %v1466
        %2244 = vmatprep.subr.bf16.mxu0 %v1479
        %2245 = vmatpush1.bf16.msra.mxu0 %v1478
        %2246 = vmatprep.subr.bf16.mxu0 %v1491
        %2247 = vmatpush1.bf16.msra.mxu0 %v1490
        %2248 = vmatprep.subr.bf16.mxu0 %v1503
        %2249 = vmatpush1.bf16.msra.mxu0 %v1502
        %2250 = vmatprep.subr.bf16.mxu0 %v1515
        %2251 = vmatpush1.bf16.msra.mxu0 %v1514
        %2252 = vmatprep.subr.bf16.mxu0 %v1527
        %2253 = vmatpush1.bf16.msra.mxu0 %v1526
        %2254 = vmatprep.subr.bf16.mxu0 %v1539
        %2255 = vmatpush1.bf16.msra.mxu0 %v1538
        %2256 = vmatprep.subr.bf16.mxu0 %v1551
        %2257 = vmatpush1.bf16.msra.mxu0 %v1550
        %2258 = vmatprep.subr.bf16.mxu0 %v1563
        %2259 = vmatpush1.bf16.msra.mxu0 %v1562
        %2260 = vmatprep.subr.bf16.mxu0 %v1575
        %2261 = vmatpush1.bf16.msra.mxu0 %v1574
        %2262 = vmatprep.subr.bf16.mxu0 %v1587
        %2263 = vmatpush1.bf16.msra.mxu0 %v1586
        %2264 = vmatprep.subr.bf16.mxu0 %v1599
        %2265 = vmatpush1.bf16.msra.mxu0 %v1598
        %2266 = vmatprep.mubr.bf16.mxu0 %v533
        %2267 = vmatmul.mubr.bf16.gmra.mrb[0].mxu0 %v532
        %v2268 = vpop.f32.mrb[0].mxu0
        %v2269 = vadd.f32 0.0, %v2268
        %v2270 = vpop.f32.mrb[0].mxu0
        %v2271 = vadd.f32 0.0, %v2270
        %v2272 = vpop.f32.mrb[0].mxu0
        %v2273 = vadd.f32 0.0, %v2272
        %v2274 = vpop.f32.mrb[0].mxu0
        %v2275 = vadd.f32 0.0, %v2274
        %2276 = vmatprep.mubr.bf16.mxu0 %v536
        %2277 = vmatmul.mubr.bf16.gmra.mrb[0].mxu0 %v535
        %v2278 = vpop.f32.mrb[0].mxu0
        %v2279 = vadd.f32 0.0, %v2278
        %v2280 = vpop.f32.mrb[0].mxu0
        %v2281 = vadd.f32 0.0, %v2280
        %v2282 = vpop.f32.mrb[0].mxu0
        %v2283 = vadd.f32 0.0, %v2282
        %v2284 = vpop.f32.mrb[0].mxu0
        %v2285 = vadd.f32 0.0, %v2284
        %2286 = vmatprep.mubr.bf16.mxu0 %v539
        %2287 = vmatmul.mubr.bf16.gmra.mrb[0].mxu0 %v538
        %v2288 = vpop.f32.mrb[0].mxu0
        %v2289 = vadd.f32 0.0, %v2288
        %v2290 = vpop.f32.mrb[0].mxu0
        %v2291 = vadd.f32 0.0, %v2290
        %v2292 = vpop.f32.mrb[0].mxu0
        %v2293 = vpop.f32.mrb[0].mxu0
        %2294 = vdwg.mxu0
        %2295 = vmatprep.subr.bf16.mxu0 %v1611
        %2296 = vmatpush1.bf16.msra.mxu0 %v1610
        %2297 = vmatprep.subr.bf16.mxu0 %v1623
        %2298 = vmatpush1.bf16.msra.mxu0 %v1622
        %2299 = vmatprep.subr.bf16.mxu0 %v1635
        %2300 = vmatpush1.bf16.msra.mxu0 %v1634
        %2301 = vmatprep.subr.bf16.mxu0 %v1647
        %2302 = vmatpush1.bf16.msra.mxu0 %v1646
        %2303 = vmatprep.subr.bf16.mxu0 %v1659
        %2304 = vmatpush1.bf16.msra.mxu0 %v1658
        %2305 = vmatprep.subr.bf16.mxu0 %v1671
        %2306 = vmatpush1.bf16.msra.mxu0 %v1670
        %2307 = vmatprep.subr.bf16.mxu0 %v1683
        %2308 = vmatpush1.bf16.msra.mxu0 %v1682
        %2309 = vmatprep.subr.bf16.mxu0 %v1695
        %2310 = vmatpush1.bf16.msra.mxu0 %v1694
        %2311 = vmatprep.subr.bf16.mxu0 0
        %2312 = vmatpush1.bf16.msra.mxu0 0
        %2313 = vmatprep.subr.bf16.mxu0 0
        %2314 = vmatpush1.bf16.msra.mxu0 0
        %2315 = vmatprep.subr.bf16.mxu0 0
        %2316 = vmatpush1.bf16.msra.mxu0 0
        %2317 = vmatprep.subr.bf16.mxu0 0
        %2318 = vmatpush1.bf16.msra.mxu0 0
        %2319 = vmatprep.subr.bf16.mxu0 0
        %2320 = vmatpush1.bf16.msra.mxu0 0
        %2321 = vmatprep.subr.bf16.mxu0 0
        %2322 = vmatpush1.bf16.msra.mxu0 0
        %2323 = vmatprep.subr.bf16.mxu0 0
        %2324 = vmatpush1.bf16.msra.mxu0 0
        %2325 = vmatprep.subr.bf16.mxu0 0
        %2326 = vmatpush1.bf16.msra.mxu0 0
        %2327 = vmatprep.mubr.bf16.mxu0 0
        %2328 = vmatmul.mubr.bf16.gmra.mrb[0].mxu0 %v534
        %v2329 = vpop.f32.mrb[0].mxu0
        %v2330 = vadd.f32 %v2269, %v2329
        %v2331 = vpop.f32.mrb[0].mxu0
        %v2332 = vadd.f32 %v2271, %v2331
        %v2333 = vpop.f32.mrb[0].mxu0
        %v2334 = vadd.f32 %v2273, %v2333
        %v2335 = vpop.f32.mrb[0].mxu0
        %v2336 = vadd.f32 %v2275, %v2335
        %2337 = vmatprep.mubr.bf16.mxu0 0
        %2338 = vmatmul.mubr.bf16.gmra.mrb[0].mxu0 %v537
        %v2339 = vpop.f32.mrb[0].mxu0
        %v2340 = vadd.f32 %v2279, %v2339
        %v2341 = vpop.f32.mrb[0].mxu0
        %v2342 = vadd.f32 %v2281, %v2341
        %v2343 = vpop.f32.mrb[0].mxu0
        %v2344 = vadd.f32 %v2283, %v2343
        %v2345 = vpop.f32.mrb[0].mxu0
        %v2346 = vadd.f32 %v2285, %v2345
        %2347 = vmatprep.mubr.bf16.mxu0 0
        %2348 = vmatmul.mubr.bf16.gmra.mrb[0].mxu0 %v540
        %v2349 = vpop.f32.mrb[0].mxu0
        %v2350 = vadd.f32 %v2289, %v2349
        %v2351 = vpop.f32.mrb[0].mxu0
        %v2352 = vadd.f32 %v2291, %v2351
        %v2353 = vpop.f32.mrb[0].mxu0
        %v2354 = vpop.f32.mrb[0].mxu0
        %2355 = vdwg.mxu0
        %2356 = vmatprep.subr.bf16.mxu0 %v1421
        %2357 = vmatpush1.bf16.msra.mxu0 %v1420
        %2358 = vmatprep.subr.bf16.mxu0 %v1433
        %2359 = vmatpush1.bf16.msra.mxu0 %v1432
        %2360 = vmatprep.subr.bf16.mxu0 %v1445
        %2361 = vmatpush1.bf16.msra.mxu0 %v1444
        %2362 = vmatprep.subr.bf16.mxu0 %v1457
        %2363 = vmatpush1.bf16.msra.mxu0 %v1456
        %2364 = vmatprep.subr.bf16.mxu0 %v1469
        %2365 = vmatpush1.bf16.msra.mxu0 %v1468
        %2366 = vmatprep.subr.bf16.mxu0 %v1481
        %2367 = vmatpush1.bf16.msra.mxu0 %v1480
        %2368 = vmatprep.subr.bf16.mxu0 %v1493
        %2369 = vmatpush1.bf16.msra.mxu0 %v1492
        %2370 = vmatprep.subr.bf16.mxu0 %v1505
        %2371 = vmatpush1.bf16.msra.mxu0 %v1504
        %2372 = vmatprep.subr.bf16.mxu0 %v1517
        %2373 = vmatpush1.bf16.msra.mxu0 %v1516
        %2374 = vmatprep.subr.bf16.mxu0 %v1529
        %2375 = vmatpush1.bf16.msra.mxu0 %v1528
        %2376 = vmatprep.subr.bf16.mxu0 %v1541
        %2377 = vmatpush1.bf16.msra.mxu0 %v1540
        %2378 = vmatprep.subr.bf16.mxu0 %v1553
        %2379 = vmatpush1.bf16.msra.mxu0 %v1552
        %2380 = vmatprep.subr.bf16.mxu0 %v1565
        %2381 = vmatpush1.bf16.msra.mxu0 %v1564
        %2382 = vmatprep.subr.bf16.mxu0 %v1577
        %2383 = vmatpush1.bf16.msra.mxu0 %v1576
        %2384 = vmatprep.subr.bf16.mxu0 %v1589
        %2385 = vmatpush1.bf16.msra.mxu0 %v1588
        %2386 = vmatprep.subr.bf16.mxu0 %v1601
        %2387 = vmatpush1.bf16.msra.mxu0 %v1600
        %2388 = vmatprep.mubr.bf16.mxu0 %v533
        %2389 = vmatmul.mubr.bf16.gmra.mrb[0].mxu0 %v532
        %v2390 = vpop.f32.mrb[0].mxu0
        %v2391 = vadd.f32 0.0, %v2390
        %v2392 = vpop.f32.mrb[0].mxu0
        %v2393 = vadd.f32 0.0, %v2392
        %v2394 = vpop.f32.mrb[0].mxu0
        %v2395 = vadd.f32 0.0, %v2394
        %v2396 = vpop.f32.mrb[0].mxu0
        %v2397 = vadd.f32 0.0, %v2396
        %2398 = vmatprep.mubr.bf16.mxu0 %v536
        %2399 = vmatmul.mubr.bf16.gmra.mrb[0].mxu0 %v535
        %v2400 = vpop.f32.mrb[0].mxu0
        %v2401 = vadd.f32 0.0, %v2400
        %v2402 = vpop.f32.mrb[0].mxu0
        %v2403 = vadd.f32 0.0, %v2402
        %v2404 = vpop.f32.mrb[0].mxu0
        %v2405 = vadd.f32 0.0, %v2404
        %v2406 = vpop.f32.mrb[0].mxu0
        %v2407 = vadd.f32 0.0, %v2406
        %2408 = vmatprep.mubr.bf16.mxu0 %v539
        %2409 = vmatmul.mubr.bf16.gmra.mrb[0].mxu0 %v538
        %v2410 = vpop.f32.mrb[0].mxu0
        %v2411 = vadd.f32 0.0, %v2410
        %v2412 = vpop.f32.mrb[0].mxu0
        %v2413 = vadd.f32 0.0, %v2412
        %v2414 = vpop.f32.mrb[0].mxu0
        %v2415 = vpop.f32.mrb[0].mxu0
        %2416 = vdwg.mxu0
        %2417 = vmatprep.subr.bf16.mxu0 %v1613
        %2418 = vmatpush1.bf16.msra.mxu0 %v1612
        %2419 = vmatprep.subr.bf16.mxu0 %v1625
        %2420 = vmatpush1.bf16.msra.mxu0 %v1624
        %2421 = vmatprep.subr.bf16.mxu0 %v1637
        %2422 = vmatpush1.bf16.msra.mxu0 %v1636
        %2423 = vmatprep.subr.bf16.mxu0 %v1649
        %2424 = vmatpush1.bf16.msra.mxu0 %v1648
        %2425 = vmatprep.subr.bf16.mxu0 %v1661
        %2426 = vmatpush1.bf16.msra.mxu0 %v1660
        %2427 = vmatprep.subr.bf16.mxu0 %v1673
        %2428 = vmatpush1.bf16.msra.mxu0 %v1672
        %2429 = vmatprep.subr.bf16.mxu0 %v1685
        %2430 = vmatpush1.bf16.msra.mxu0 %v1684
        %2431 = vmatprep.subr.bf16.mxu0 %v1697
        %2432 = vmatpush1.bf16.msra.mxu0 %v1696
        %2433 = vmatprep.subr.bf16.mxu0 0
        %2434 = vmatpush1.bf16.msra.mxu0 0
        %2435 = vmatprep.subr.bf16.mxu0 0
        %2436 = vmatpush1.bf16.msra.mxu0 0
        %2437 = vmatprep.subr.bf16.mxu0 0
        %2438 = vmatpush1.bf16.msra.mxu0 0
        %2439 = vmatprep.subr.bf16.mxu0 0
        %2440 = vmatpush1.bf16.msra.mxu0 0
        %2441 = vmatprep.subr.bf16.mxu0 0
        %2442 = vmatpush1.bf16.msra.mxu0 0
        %2443 = vmatprep.subr.bf16.mxu0 0
        %2444 = vmatpush1.bf16.msra.mxu0 0
        %2445 = vmatprep.subr.bf16.mxu0 0
        %2446 = vmatpush1.bf16.msra.mxu0 0
        %2447 = vmatprep.subr.bf16.mxu0 0
        %2448 = vmatpush1.bf16.msra.mxu0 0
        %2449 = vmatprep.mubr.bf16.mxu0 0
        %2450 = vmatmul.mubr.bf16.gmra.mrb[0].mxu0 %v534
        %v2451 = vpop.f32.mrb[0].mxu0
        %v2452 = vadd.f32 %v2391, %v2451
        %v2453 = vpop.f32.mrb[0].mxu0
        %v2454 = vadd.f32 %v2393, %v2453
        %v2455 = vpop.f32.mrb[0].mxu0
        %v2456 = vadd.f32 %v2395, %v2455
        %v2457 = vpop.f32.mrb[0].mxu0
        %v2458 = vadd.f32 %v2397, %v2457
        %2459 = vmatprep.mubr.bf16.mxu0 0
        %2460 = vmatmul.mubr.bf16.gmra.mrb[0].mxu0 %v537
        %v2461 = vpop.f32.mrb[0].mxu0
        %v2462 = vadd.f32 %v2401, %v2461
        %v2463 = vpop.f32.mrb[0].mxu0
        %v2464 = vadd.f32 %v2403, %v2463
        %v2465 = vpop.f32.mrb[0].mxu0
        %v2466 = vadd.f32 %v2405, %v2465
        %v2467 = vpop.f32.mrb[0].mxu0
        %v2468 = vadd.f32 %v2407, %v2467
        %2469 = vmatprep.mubr.bf16.mxu0 0
        %2470 = vmatmul.mubr.bf16.gmra.mrb[0].mxu0 %v540
        %v2471 = vpop.f32.mrb[0].mxu0
        %v2472 = vadd.f32 %v2411, %v2471
        %v2473 = vpop.f32.mrb[0].mxu0
        %v2474 = vadd.f32 %v2413, %v2473
        %v2475 = vpop.f32.mrb[0].mxu0
        %v2476 = vpop.f32.mrb[0].mxu0
        %2477 = vdwg.mxu0
        %2478 = vmatprep.subr.bf16.mxu0 %v1423
        %2479 = vmatpush1.bf16.msra.mxu0 %v1422
        %2480 = vmatprep.subr.bf16.mxu0 %v1435
        %2481 = vmatpush1.bf16.msra.mxu0 %v1434
        %2482 = vmatprep.subr.bf16.mxu0 %v1447
        %2483 = vmatpush1.bf16.msra.mxu0 %v1446
        %2484 = vmatprep.subr.bf16.mxu0 %v1459
        %2485 = vmatpush1.bf16.msra.mxu0 %v1458
        %2486 = vmatprep.subr.bf16.mxu0 %v1471
        %2487 = vmatpush1.bf16.msra.mxu0 %v1470
        %2488 = vmatprep.subr.bf16.mxu0 %v1483
        %2489 = vmatpush1.bf16.msra.mxu0 %v1482
        %2490 = vmatprep.subr.bf16.mxu0 %v1495
        %2491 = vmatpush1.bf16.msra.mxu0 %v1494
        %2492 = vmatprep.subr.bf16.mxu0 %v1507
        %2493 = vmatpush1.bf16.msra.mxu0 %v1506
        %2494 = vmatprep.subr.bf16.mxu0 %v1519
        %2495 = vmatpush1.bf16.msra.mxu0 %v1518
        %2496 = vmatprep.subr.bf16.mxu0 %v1531
        %2497 = vmatpush1.bf16.msra.mxu0 %v1530
        %2498 = vmatprep.subr.bf16.mxu0 %v1543
        %2499 = vmatpush1.bf16.msra.mxu0 %v1542
        %2500 = vmatprep.subr.bf16.mxu0 %v1555
        %2501 = vmatpush1.bf16.msra.mxu0 %v1554
        %2502 = vmatprep.subr.bf16.mxu0 %v1567
        %2503 = vmatpush1.bf16.msra.mxu0 %v1566
        %2504 = vmatprep.subr.bf16.mxu0 %v1579
        %2505 = vmatpush1.bf16.msra.mxu0 %v1578
        %2506 = vmatprep.subr.bf16.mxu0 %v1591
        %2507 = vmatpush1.bf16.msra.mxu0 %v1590
        %2508 = vmatprep.subr.bf16.mxu0 %v1603
        %2509 = vmatpush1.bf16.msra.mxu0 %v1602
        %2510 = vmatprep.mubr.bf16.mxu0 %v533
        %2511 = vmatmul.mubr.bf16.gmra.mrb[0].mxu0 %v532
        %v2512 = vpop.f32.mrb[0].mxu0
        %v2513 = vadd.f32 0.0, %v2512
        %v2514 = vpop.f32.mrb[0].mxu0
        %v2515 = vadd.f32 0.0, %v2514
        %v2516 = vpop.f32.mrb[0].mxu0
        %v2517 = vadd.f32 0.0, %v2516
        %v2518 = vpop.f32.mrb[0].mxu0
        %v2519 = vadd.f32 0.0, %v2518
        %2520 = vmatprep.mubr.bf16.mxu0 %v536
        %2521 = vmatmul.mubr.bf16.gmra.mrb[0].mxu0 %v535
        %v2522 = vpop.f32.mrb[0].mxu0
        %v2523 = vadd.f32 0.0, %v2522
        %v2524 = vpop.f32.mrb[0].mxu0
        %v2525 = vadd.f32 0.0, %v2524
        %v2526 = vpop.f32.mrb[0].mxu0
        %v2527 = vadd.f32 0.0, %v2526
        %v2528 = vpop.f32.mrb[0].mxu0
        %v2529 = vadd.f32 0.0, %v2528
        %2530 = vmatprep.mubr.bf16.mxu0 %v539
        %2531 = vmatmul.mubr.bf16.gmra.mrb[0].mxu0 %v538
        %v2532 = vpop.f32.mrb[0].mxu0
        %v2533 = vadd.f32 0.0, %v2532
        %v2534 = vpop.f32.mrb[0].mxu0
        %v2535 = vadd.f32 0.0, %v2534
        %v2536 = vpop.f32.mrb[0].mxu0
        %v2537 = vpop.f32.mrb[0].mxu0
        %2538 = vdwg.mxu0
        %2539 = vmatprep.subr.bf16.mxu0 %v1615
        %2540 = vmatpush1.bf16.msra.mxu0 %v1614
        %2541 = vmatprep.subr.bf16.mxu0 %v1627
        %2542 = vmatpush1.bf16.msra.mxu0 %v1626
        %2543 = vmatprep.subr.bf16.mxu0 %v1639
        %2544 = vmatpush1.bf16.msra.mxu0 %v1638
        %2545 = vmatprep.subr.bf16.mxu0 %v1651
        %2546 = vmatpush1.bf16.msra.mxu0 %v1650
        %2547 = vmatprep.subr.bf16.mxu0 %v1663
        %2548 = vmatpush1.bf16.msra.mxu0 %v1662
        %2549 = vmatprep.subr.bf16.mxu0 %v1675
        %2550 = vmatpush1.bf16.msra.mxu0 %v1674
        %2551 = vmatprep.subr.bf16.mxu0 %v1687
        %2552 = vmatpush1.bf16.msra.mxu0 %v1686
        %2553 = vmatprep.subr.bf16.mxu0 %v1699
        %2554 = vmatpush1.bf16.msra.mxu0 %v1698
        %2555 = vmatprep.subr.bf16.mxu0 0
        %2556 = vmatpush1.bf16.msra.mxu0 0
        %2557 = vmatprep.subr.bf16.mxu0 0
        %2558 = vmatpush1.bf16.msra.mxu0 0
        %2559 = vmatprep.subr.bf16.mxu0 0
        %2560 = vmatpush1.bf16.msra.mxu0 0
        %2561 = vmatprep.subr.bf16.mxu0 0
        %2562 = vmatpush1.bf16.msra.mxu0 0
        %2563 = vmatprep.subr.bf16.mxu0 0
        %2564 = vmatpush1.bf16.msra.mxu0 0
        %2565 = vmatprep.subr.bf16.mxu0 0
        %2566 = vmatpush1.bf16.msra.mxu0 0
        %2567 = vmatprep.subr.bf16.mxu0 0
        %2568 = vmatpush1.bf16.msra.mxu0 0
        %2569 = vmatprep.subr.bf16.mxu0 0
        %2570 = vmatpush1.bf16.msra.mxu0 0
        %2571 = vmatprep.mubr.bf16.mxu0 0
        %2572 = vmatmul.mubr.bf16.gmra.mrb[0].mxu0 %v534
        %v2573 = vpop.f32.mrb[0].mxu0
        %v2574 = vadd.f32 %v2513, %v2573
        %v2575 = vpop.f32.mrb[0].mxu0
        %v2576 = vadd.f32 %v2515, %v2575
        %v2577 = vpop.f32.mrb[0].mxu0
        %v2578 = vadd.f32 %v2517, %v2577
        %v2579 = vpop.f32.mrb[0].mxu0
        %v2580 = vadd.f32 %v2519, %v2579
        %2581 = vmatprep.mubr.bf16.mxu0 0
        %2582 = vmatmul.mubr.bf16.gmra.mrb[0].mxu0 %v537
        %v2583 = vpop.f32.mrb[0].mxu0
        %v2584 = vadd.f32 %v2523, %v2583
        %v2585 = vpop.f32.mrb[0].mxu0
        %v2586 = vadd.f32 %v2525, %v2585
        %v2587 = vpop.f32.mrb[0].mxu0
        %v2588 = vadd.f32 %v2527, %v2587
        %v2589 = vpop.f32.mrb[0].mxu0
        %v2590 = vadd.f32 %v2529, %v2589
        %2591 = vmatprep.mubr.bf16.mxu0 0
        %2592 = vmatmul.mubr.bf16.gmra.mrb[0].mxu0 %v540
        %v2593 = vpop.f32.mrb[0].mxu0
        %v2594 = vadd.f32 %v2533, %v2593
        %v2595 = vpop.f32.mrb[0].mxu0
        %v2596 = vadd.f32 %v2535, %v2595
        %v2597 = vpop.f32.mrb[0].mxu0
        %v2598 = vpop.f32.mrb[0].mxu0
        %2599 = vdwg.mxu0
        %2600 = vmatprep.subr.bf16.mxu0 %v1425
        %2601 = vmatpush1.bf16.msra.mxu0 %v1424
        %2602 = vmatprep.subr.bf16.mxu0 %v1437
        %2603 = vmatpush1.bf16.msra.mxu0 %v1436
        %2604 = vmatprep.subr.bf16.mxu0 %v1449
        %2605 = vmatpush1.bf16.msra.mxu0 %v1448
        %2606 = vmatprep.subr.bf16.mxu0 %v1461
        %2607 = vmatpush1.bf16.msra.mxu0 %v1460
        %2608 = vmatprep.subr.bf16.mxu0 %v1473
        %2609 = vmatpush1.bf16.msra.mxu0 %v1472
        %2610 = vmatprep.subr.bf16.mxu0 %v1485
        %2611 = vmatpush1.bf16.msra.mxu0 %v1484
        %2612 = vmatprep.subr.bf16.mxu0 %v1497
        %2613 = vmatpush1.bf16.msra.mxu0 %v1496
        %2614 = vmatprep.subr.bf16.mxu0 %v1509
        %2615 = vmatpush1.bf16.msra.mxu0 %v1508
        %2616 = vmatprep.subr.bf16.mxu0 %v1521
        %2617 = vmatpush1.bf16.msra.mxu0 %v1520
        %2618 = vmatprep.subr.bf16.mxu0 %v1533
        %2619 = vmatpush1.bf16.msra.mxu0 %v1532
        %2620 = vmatprep.subr.bf16.mxu0 %v1545
        %2621 = vmatpush1.bf16.msra.mxu0 %v1544
        %2622 = vmatprep.subr.bf16.mxu0 %v1557
        %2623 = vmatpush1.bf16.msra.mxu0 %v1556
        %2624 = vmatprep.subr.bf16.mxu0 %v1569
        %2625 = vmatpush1.bf16.msra.mxu0 %v1568
        %2626 = vmatprep.subr.bf16.mxu0 %v1581
        %2627 = vmatpush1.bf16.msra.mxu0 %v1580
        %2628 = vmatprep.subr.bf16.mxu0 %v1593
        %2629 = vmatpush1.bf16.msra.mxu0 %v1592
        %2630 = vmatprep.subr.bf16.mxu0 %v1605
        %2631 = vmatpush1.bf16.msra.mxu0 %v1604
        %2632 = vmatprep.mubr.bf16.mxu0 %v533
        %2633 = vmatmul.mubr.bf16.gmra.mrb[0].mxu0 %v532
        %v2634 = vpop.f32.mrb[0].mxu0
        %v2635 = vadd.f32 0.0, %v2634
        %v2636 = vpop.f32.mrb[0].mxu0
        %v2637 = vadd.f32 0.0, %v2636
        %v2638 = vpop.f32.mrb[0].mxu0
        %v2639 = vadd.f32 0.0, %v2638
        %v2640 = vpop.f32.mrb[0].mxu0
        %v2641 = vadd.f32 0.0, %v2640
        %2642 = vmatprep.mubr.bf16.mxu0 %v536
        %2643 = vmatmul.mubr.bf16.gmra.mrb[0].mxu0 %v535
        %v2644 = vpop.f32.mrb[0].mxu0
        %v2645 = vadd.f32 0.0, %v2644
        %v2646 = vpop.f32.mrb[0].mxu0
        %v2647 = vadd.f32 0.0, %v2646
        %v2648 = vpop.f32.mrb[0].mxu0
        %v2649 = vadd.f32 0.0, %v2648
        %v2650 = vpop.f32.mrb[0].mxu0
        %v2651 = vadd.f32 0.0, %v2650
        %2652 = vmatprep.mubr.bf16.mxu0 %v539
        %2653 = vmatmul.mubr.bf16.gmra.mrb[0].mxu0 %v538
        %v2654 = vpop.f32.mrb[0].mxu0
        %v2655 = vadd.f32 0.0, %v2654
        %v2656 = vpop.f32.mrb[0].mxu0
        %v2657 = vadd.f32 0.0, %v2656
        %v2658 = vpop.f32.mrb[0].mxu0
        %v2659 = vpop.f32.mrb[0].mxu0
        %2660 = vdwg.mxu0
        %2661 = vmatprep.subr.bf16.mxu0 %v1617
        %2662 = vmatpush1.bf16.msra.mxu0 %v1616
        %2663 = vmatprep.subr.bf16.mxu0 %v1629
        %2664 = vmatpush1.bf16.msra.mxu0 %v1628
        %2665 = vmatprep.subr.bf16.mxu0 %v1641
        %2666 = vmatpush1.bf16.msra.mxu0 %v1640
        %2667 = vmatprep.subr.bf16.mxu0 %v1653
        %2668 = vmatpush1.bf16.msra.mxu0 %v1652
        %2669 = vmatprep.subr.bf16.mxu0 %v1665
        %2670 = vmatpush1.bf16.msra.mxu0 %v1664
        %2671 = vmatprep.subr.bf16.mxu0 %v1677
        %2672 = vmatpush1.bf16.msra.mxu0 %v1676
        %2673 = vmatprep.subr.bf16.mxu0 %v1689
        %2674 = vmatpush1.bf16.msra.mxu0 %v1688
        %2675 = vmatprep.subr.bf16.mxu0 %v1701
        %2676 = vmatpush1.bf16.msra.mxu0 %v1700
        %2677 = vmatprep.subr.bf16.mxu0 0
        %2678 = vmatpush1.bf16.msra.mxu0 0
        %2679 = vmatprep.subr.bf16.mxu0 0
        %2680 = vmatpush1.bf16.msra.mxu0 0
        %2681 = vmatprep.subr.bf16.mxu0 0
        %2682 = vmatpush1.bf16.msra.mxu0 0
        %2683 = vmatprep.subr.bf16.mxu0 0
        %2684 = vmatpush1.bf16.msra.mxu0 0
        %2685 = vmatprep.subr.bf16.mxu0 0
        %2686 = vmatpush1.bf16.msra.mxu0 0
        %2687 = vmatprep.subr.bf16.mxu0 0
        %2688 = vmatpush1.bf16.msra.mxu0 0
        %2689 = vmatprep.subr.bf16.mxu0 0
        %2690 = vmatpush1.bf16.msra.mxu0 0
        %2691 = vmatprep.subr.bf16.mxu0 0
        %2692 = vmatpush1.bf16.msra.mxu0 0
        %2693 = vmatprep.mubr.bf16.mxu0 0
        %2694 = vmatmul.mubr.bf16.gmra.mrb[0].mxu0 %v534
        %v2695 = vpop.f32.mrb[0].mxu0
        %v2696 = vadd.f32 %v2635, %v2695
        %v2697 = vpop.f32.mrb[0].mxu0
        %v2698 = vadd.f32 %v2637, %v2697
        %v2699 = vpop.f32.mrb[0].mxu0
        %v2700 = vadd.f32 %v2639, %v2699
        %v2701 = vpop.f32.mrb[0].mxu0
        %v2702 = vadd.f32 %v2641, %v2701
        %2703 = vmatprep.mubr.bf16.mxu0 0
        %2704 = vmatmul.mubr.bf16.gmra.mrb[0].mxu0 %v537
        %v2705 = vpop.f32.mrb[0].mxu0
        %v2706 = vadd.f32 %v2645, %v2705
        %v2707 = vpop.f32.mrb[0].mxu0
        %v2708 = vadd.f32 %v2647, %v2707
        %v2709 = vpop.f32.mrb[0].mxu0
        %v2710 = vadd.f32 %v2649, %v2709
        %v2711 = vpop.f32.mrb[0].mxu0
        %v2712 = vadd.f32 %v2651, %v2711
        %2713 = vmatprep.mubr.bf16.mxu0 0
        %2714 = vmatmul.mubr.bf16.gmra.mrb[0].mxu0 %v540
        %v2715 = vpop.f32.mrb[0].mxu0
        %v2716 = vadd.f32 %v2655, %v2715
        %v2717 = vpop.f32.mrb[0].mxu0
        %v2718 = vadd.f32 %v2657, %v2717
        %v2719 = vpop.f32.mrb[0].mxu0
        %v2720 = vpop.f32.mrb[0].mxu0
        %2721 = vdwg.mxu0
        %vm2722 = vcmask 1043456
        %v2723 = vsel %vm2722, %v2086, -inf
        %v2724 = vrot.slane %v2723, 4
        %v2725 = vmax.f32 %v2723, %v2724
        %v2726 = vrot.slane %v2725, 2
        %v2727 = vmax.f32 %v2725, %v2726
        %v2728 = vrot.slane %v2727, 1
        %v2729 = vmax.f32 %v2727, %v2728
        %v2730 = vsel %vm2722, %v2088, -inf
        %v2731 = vrot.slane %v2730, 4
        %v2732 = vmax.f32 %v2730, %v2731
        %v2733 = vrot.slane %v2732, 2
        %v2734 = vmax.f32 %v2732, %v2733
        %v2735 = vrot.slane %v2734, 1
        %v2736 = vmax.f32 %v2734, %v2735
        %v2737 = vsel %vm2722, %v2208, -inf
        %v2738 = vrot.slane %v2737, 4
        %v2739 = vmax.f32 %v2737, %v2738
        %v2740 = vrot.slane %v2739, 2
        %v2741 = vmax.f32 %v2739, %v2740
        %v2742 = vrot.slane %v2741, 1
        %v2743 = vmax.f32 %v2741, %v2742
        %v2744 = vsel %vm2722, %v2210, -inf
        %v2745 = vrot.slane %v2744, 4
        %v2746 = vmax.f32 %v2744, %v2745
        %v2747 = vrot.slane %v2746, 2
        %v2748 = vmax.f32 %v2746, %v2747
        %v2749 = vrot.slane %v2748, 1
        %v2750 = vmax.f32 %v2748, %v2749
        %v2751 = vsel %vm2722, %v2330, -inf
        %v2752 = vrot.slane %v2751, 4
        %v2753 = vmax.f32 %v2751, %v2752
        %v2754 = vrot.slane %v2753, 2
        %v2755 = vmax.f32 %v2753, %v2754
        %v2756 = vrot.slane %v2755, 1
        %v2757 = vmax.f32 %v2755, %v2756
        %v2758 = vsel %vm2722, %v2332, -inf
        %v2759 = vrot.slane %v2758, 4
        %v2760 = vmax.f32 %v2758, %v2759
        %v2761 = vrot.slane %v2760, 2
        %v2762 = vmax.f32 %v2760, %v2761
        %v2763 = vrot.slane %v2762, 1
        %v2764 = vmax.f32 %v2762, %v2763
        %v2765 = vsel %vm2722, %v2452, -inf
        %v2766 = vrot.slane %v2765, 4
        %v2767 = vmax.f32 %v2765, %v2766
        %v2768 = vrot.slane %v2767, 2
        %v2769 = vmax.f32 %v2767, %v2768
        %v2770 = vrot.slane %v2769, 1
        %v2771 = vmax.f32 %v2769, %v2770
        %v2772 = vsel %vm2722, %v2454, -inf
        %v2773 = vrot.slane %v2772, 4
        %v2774 = vmax.f32 %v2772, %v2773
        %v2775 = vrot.slane %v2774, 2
        %v2776 = vmax.f32 %v2774, %v2775
        %v2777 = vrot.slane %v2776, 1
        %v2778 = vmax.f32 %v2776, %v2777
        %v2779 = vsel %vm2722, %v2574, -inf
        %v2780 = vrot.slane %v2779, 4
        %v2781 = vmax.f32 %v2779, %v2780
        %v2782 = vrot.slane %v2781, 2
        %v2783 = vmax.f32 %v2781, %v2782
        %v2784 = vrot.slane %v2783, 1
        %v2785 = vmax.f32 %v2783, %v2784
        %v2786 = vsel %vm2722, %v2576, -inf
        %v2787 = vrot.slane %v2786, 4
        %v2788 = vmax.f32 %v2786, %v2787
        %v2789 = vrot.slane %v2788, 2
        %v2790 = vmax.f32 %v2788, %v2789
        %v2791 = vrot.slane %v2790, 1
        %v2792 = vmax.f32 %v2790, %v2791
        %v2793 = vsel %vm2722, %v2696, -inf
        %v2794 = vrot.slane %v2793, 4
        %v2795 = vmax.f32 %v2793, %v2794
        %v2796 = vrot.slane %v2795, 2
        %v2797 = vmax.f32 %v2795, %v2796
        %v2798 = vrot.slane %v2797, 1
        %v2799 = vmax.f32 %v2797, %v2798
        %v2800 = vsel %vm2722, %v2698, -inf
        %v2801 = vrot.slane %v2800, 4
        %v2802 = vmax.f32 %v2800, %v2801
        %v2803 = vrot.slane %v2802, 2
        %v2804 = vmax.f32 %v2802, %v2803
        %v2805 = vrot.slane %v2804, 1
        %v2806 = vmax.f32 %v2804, %v2805
        %vm2807 = vcmask 1047556
        %v2808 = vsel %vm2807, %v2086, -inf
        %v2809 = vrot.slane %v2808, 4
        %v2810 = vmax.f32 %v2808, %v2809
        %v2811 = vrot.slane %v2810, 2
        %v2812 = vmax.f32 %v2810, %v2811
        %v2813 = vrot.slane %v2812, 1
        %v2814 = vmax.f32 %v2812, %v2813
        %v2815 = vsel %vm2807, %v2088, -inf
        %v2816 = vrot.slane %v2815, 4
        %v2817 = vmax.f32 %v2815, %v2816
        %v2818 = vrot.slane %v2817, 2
        %v2819 = vmax.f32 %v2817, %v2818
        %v2820 = vrot.slane %v2819, 1
        %v2821 = vmax.f32 %v2819, %v2820
        %v2822 = vsel %vm2807, %v2208, -inf
        %v2823 = vrot.slane %v2822, 4
        %v2824 = vmax.f32 %v2822, %v2823
        %v2825 = vrot.slane %v2824, 2
        %v2826 = vmax.f32 %v2824, %v2825
        %v2827 = vrot.slane %v2826, 1
        %v2828 = vmax.f32 %v2826, %v2827
        %v2829 = vsel %vm2807, %v2210, -inf
        %v2830 = vrot.slane %v2829, 4
        %v2831 = vmax.f32 %v2829, %v2830
        %v2832 = vrot.slane %v2831, 2
        %v2833 = vmax.f32 %v2831, %v2832
        %v2834 = vrot.slane %v2833, 1
        %v2835 = vmax.f32 %v2833, %v2834
        %v2836 = vsel %vm2807, %v2330, -inf
        %v2837 = vrot.slane %v2836, 4
        %v2838 = vmax.f32 %v2836, %v2837
        %v2839 = vrot.slane %v2838, 2
        %v2840 = vmax.f32 %v2838, %v2839
        %v2841 = vrot.slane %v2840, 1
        %v2842 = vmax.f32 %v2840, %v2841
        %v2843 = vsel %vm2807, %v2332, -inf
        %v2844 = vrot.slane %v2843, 4
        %v2845 = vmax.f32 %v2843, %v2844
        %v2846 = vrot.slane %v2845, 2
        %v2847 = vmax.f32 %v2845, %v2846
        %v2848 = vrot.slane %v2847, 1
        %v2849 = vmax.f32 %v2847, %v2848
        %v2850 = vsel %vm2807, %v2452, -inf
        %v2851 = vrot.slane %v2850, 4
        %v2852 = vmax.f32 %v2850, %v2851
        %v2853 = vrot.slane %v2852, 2
        %v2854 = vmax.f32 %v2852, %v2853
        %v2855 = vrot.slane %v2854, 1
        %v2856 = vmax.f32 %v2854, %v2855
        %v2857 = vsel %vm2807, %v2454, -inf
        %v2858 = vrot.slane %v2857, 4
        %v2859 = vmax.f32 %v2857, %v2858
        %v2860 = vrot.slane %v2859, 2
        %v2861 = vmax.f32 %v2859, %v2860
        %v2862 = vrot.slane %v2861, 1
        %v2863 = vmax.f32 %v2861, %v2862
        %v2864 = vsel %vm2807, %v2574, -inf
        %v2865 = vrot.slane %v2864, 4
        %v2866 = vmax.f32 %v2864, %v2865
        %v2867 = vrot.slane %v2866, 2
        %v2868 = vmax.f32 %v2866, %v2867
        %v2869 = vrot.slane %v2868, 1
        %v2870 = vmax.f32 %v2868, %v2869
        %v2871 = vsel %vm2807, %v2576, -inf
        %v2872 = vrot.slane %v2871, 4
        %v2873 = vmax.f32 %v2871, %v2872
        %v2874 = vrot.slane %v2873, 2
        %v2875 = vmax.f32 %v2873, %v2874
        %v2876 = vrot.slane %v2875, 1
        %v2877 = vmax.f32 %v2875, %v2876
        %v2878 = vsel %vm2807, %v2696, -inf
        %v2879 = vrot.slane %v2878, 4
        %v2880 = vmax.f32 %v2878, %v2879
        %v2881 = vrot.slane %v2880, 2
        %v2882 = vmax.f32 %v2880, %v2881
        %v2883 = vrot.slane %v2882, 1
        %v2884 = vmax.f32 %v2882, %v2883
        %v2885 = vsel %vm2807, %v2698, -inf
        %v2886 = vrot.slane %v2885, 4
        %v2887 = vmax.f32 %v2885, %v2886
        %v2888 = vrot.slane %v2887, 2
        %v2889 = vmax.f32 %v2887, %v2888
        %v2890 = vrot.slane %v2889, 1
        %v2891 = vmax.f32 %v2889, %v2890
        %v2892 = vsel %vm2722, %v2090, -inf
        %v2893 = vrot.slane %v2892, 4
        %v2894 = vmax.f32 %v2892, %v2893
        %v2895 = vrot.slane %v2894, 2
        %v2896 = vmax.f32 %v2894, %v2895
        %v2897 = vrot.slane %v2896, 1
        %v2898 = vmax.f32 %v2896, %v2897
        %v2899 = vsel %vm2722, %v2092, -inf
        %v2900 = vrot.slane %v2899, 4
        %v2901 = vmax.f32 %v2899, %v2900
        %v2902 = vrot.slane %v2901, 2
        %v2903 = vmax.f32 %v2901, %v2902
        %v2904 = vrot.slane %v2903, 1
        %v2905 = vmax.f32 %v2903, %v2904
        %v2906 = vsel %vm2722, %v2212, -inf
        %v2907 = vrot.slane %v2906, 4
        %v2908 = vmax.f32 %v2906, %v2907
        %v2909 = vrot.slane %v2908, 2
        %v2910 = vmax.f32 %v2908, %v2909
        %v2911 = vrot.slane %v2910, 1
        %v2912 = vmax.f32 %v2910, %v2911
        %v2913 = vsel %vm2722, %v2214, -inf
        %v2914 = vrot.slane %v2913, 4
        %v2915 = vmax.f32 %v2913, %v2914
        %v2916 = vrot.slane %v2915, 2
        %v2917 = vmax.f32 %v2915, %v2916
        %v2918 = vrot.slane %v2917, 1
        %v2919 = vmax.f32 %v2917, %v2918
        %v2920 = vsel %vm2722, %v2334, -inf
        %v2921 = vrot.slane %v2920, 4
        %v2922 = vmax.f32 %v2920, %v2921
        %v2923 = vrot.slane %v2922, 2
        %v2924 = vmax.f32 %v2922, %v2923
        %v2925 = vrot.slane %v2924, 1
        %v2926 = vmax.f32 %v2924, %v2925
        %v2927 = vsel %vm2722, %v2336, -inf
        %v2928 = vrot.slane %v2927, 4
        %v2929 = vmax.f32 %v2927, %v2928
        %v2930 = vrot.slane %v2929, 2
        %v2931 = vmax.f32 %v2929, %v2930
        %v2932 = vrot.slane %v2931, 1
        %v2933 = vmax.f32 %v2931, %v2932
        %v2934 = vsel %vm2722, %v2456, -inf
        %v2935 = vrot.slane %v2934, 4
        %v2936 = vmax.f32 %v2934, %v2935
        %v2937 = vrot.slane %v2936, 2
        %v2938 = vmax.f32 %v2936, %v2937
        %v2939 = vrot.slane %v2938, 1
        %v2940 = vmax.f32 %v2938, %v2939
        %v2941 = vsel %vm2722, %v2458, -inf
        %v2942 = vrot.slane %v2941, 4
        %v2943 = vmax.f32 %v2941, %v2942
        %v2944 = vrot.slane %v2943, 2
        %v2945 = vmax.f32 %v2943, %v2944
        %v2946 = vrot.slane %v2945, 1
        %v2947 = vmax.f32 %v2945, %v2946
        %v2948 = vsel %vm2722, %v2578, -inf
        %v2949 = vrot.slane %v2948, 4
        %v2950 = vmax.f32 %v2948, %v2949
        %v2951 = vrot.slane %v2950, 2
        %v2952 = vmax.f32 %v2950, %v2951
        %v2953 = vrot.slane %v2952, 1
        %v2954 = vmax.f32 %v2952, %v2953
        %v2955 = vsel %vm2722, %v2580, -inf
        %v2956 = vrot.slane %v2955, 4
        %v2957 = vmax.f32 %v2955, %v2956
        %v2958 = vrot.slane %v2957, 2
        %v2959 = vmax.f32 %v2957, %v2958
        %v2960 = vrot.slane %v2959, 1
        %v2961 = vmax.f32 %v2959, %v2960
        %v2962 = vsel %vm2722, %v2700, -inf
        %v2963 = vrot.slane %v2962, 4
        %v2964 = vmax.f32 %v2962, %v2963
        %v2965 = vrot.slane %v2964, 2
        %v2966 = vmax.f32 %v2964, %v2965
        %v2967 = vrot.slane %v2966, 1
        %v2968 = vmax.f32 %v2966, %v2967
        %v2969 = vsel %vm2722, %v2702, -inf
        %v2970 = vrot.slane %v2969, 4
        %v2971 = vmax.f32 %v2969, %v2970
        %v2972 = vrot.slane %v2971, 2
        %v2973 = vmax.f32 %v2971, %v2972
        %v2974 = vrot.slane %v2973, 1
        %v2975 = vmax.f32 %v2973, %v2974
        %v2976 = vsel %vm2807, %v2090, -inf
        %v2977 = vrot.slane %v2976, 4
        %v2978 = vmax.f32 %v2976, %v2977
        %v2979 = vrot.slane %v2978, 2
        %v2980 = vmax.f32 %v2978, %v2979
        %v2981 = vrot.slane %v2980, 1
        %v2982 = vmax.f32 %v2980, %v2981
        %v2983 = vsel %vm2807, %v2092, -inf
        %v2984 = vrot.slane %v2983, 4
        %v2985 = vmax.f32 %v2983, %v2984
        %v2986 = vrot.slane %v2985, 2
        %v2987 = vmax.f32 %v2985, %v2986
        %v2988 = vrot.slane %v2987, 1
        %v2989 = vmax.f32 %v2987, %v2988
        %v2990 = vsel %vm2807, %v2212, -inf
        %v2991 = vrot.slane %v2990, 4
        %v2992 = vmax.f32 %v2990, %v2991
        %v2993 = vrot.slane %v2992, 2
        %v2994 = vmax.f32 %v2992, %v2993
        %v2995 = vrot.slane %v2994, 1
        %v2996 = vmax.f32 %v2994, %v2995
        %v2997 = vsel %vm2807, %v2214, -inf
        %v2998 = vrot.slane %v2997, 4
        %v2999 = vmax.f32 %v2997, %v2998
        %v3000 = vrot.slane %v2999, 2
        %v3001 = vmax.f32 %v2999, %v3000
        %v3002 = vrot.slane %v3001, 1
        %v3003 = vmax.f32 %v3001, %v3002
        %v3004 = vsel %vm2807, %v2334, -inf
        %v3005 = vrot.slane %v3004, 4
        %v3006 = vmax.f32 %v3004, %v3005
        %v3007 = vrot.slane %v3006, 2
        %v3008 = vmax.f32 %v3006, %v3007
        %v3009 = vrot.slane %v3008, 1
        %v3010 = vmax.f32 %v3008, %v3009
        %v3011 = vsel %vm2807, %v2336, -inf
        %v3012 = vrot.slane %v3011, 4
        %v3013 = vmax.f32 %v3011, %v3012
        %v3014 = vrot.slane %v3013, 2
        %v3015 = vmax.f32 %v3013, %v3014
        %v3016 = vrot.slane %v3015, 1
        %v3017 = vmax.f32 %v3015, %v3016
        %v3018 = vsel %vm2807, %v2456, -inf
        %v3019 = vrot.slane %v3018, 4
        %v3020 = vmax.f32 %v3018, %v3019
        %v3021 = vrot.slane %v3020, 2
        %v3022 = vmax.f32 %v3020, %v3021
        %v3023 = vrot.slane %v3022, 1
        %v3024 = vmax.f32 %v3022, %v3023
        %v3025 = vsel %vm2807, %v2458, -inf
        %v3026 = vrot.slane %v3025, 4
        %v3027 = vmax.f32 %v3025, %v3026
        %v3028 = vrot.slane %v3027, 2
        %v3029 = vmax.f32 %v3027, %v3028
        %v3030 = vrot.slane %v3029, 1
        %v3031 = vmax.f32 %v3029, %v3030
        %v3032 = vsel %vm2807, %v2578, -inf
        %v3033 = vrot.slane %v3032, 4
        %v3034 = vmax.f32 %v3032, %v3033
        %v3035 = vrot.slane %v3034, 2
        %v3036 = vmax.f32 %v3034, %v3035
        %v3037 = vrot.slane %v3036, 1
        %v3038 = vmax.f32 %v3036, %v3037
        %v3039 = vsel %vm2807, %v2580, -inf
        %v3040 = vrot.slane %v3039, 4
        %v3041 = vmax.f32 %v3039, %v3040
        %v3042 = vrot.slane %v3041, 2
        %v3043 = vmax.f32 %v3041, %v3042
        %v3044 = vrot.slane %v3043, 1
        %v3045 = vmax.f32 %v3043, %v3044
        %v3046 = vsel %vm2807, %v2700, -inf
        %v3047 = vrot.slane %v3046, 4
        %v3048 = vmax.f32 %v3046, %v3047
        %v3049 = vrot.slane %v3048, 2
        %v3050 = vmax.f32 %v3048, %v3049
        %v3051 = vrot.slane %v3050, 1
        %v3052 = vmax.f32 %v3050, %v3051
        %v3053 = vsel %vm2807, %v2702, -inf
        %v3054 = vrot.slane %v3053, 4
        %v3055 = vmax.f32 %v3053, %v3054
        %v3056 = vrot.slane %v3055, 2
        %v3057 = vmax.f32 %v3055, %v3056
        %v3058 = vrot.slane %v3057, 1
        %v3059 = vmax.f32 %v3057, %v3058
        %v3060 = vsel %vm2722, %v2096, -inf
        %v3061 = vrot.slane %v3060, 4
        %v3062 = vmax.f32 %v3060, %v3061
        %v3063 = vrot.slane %v3062, 2
        %v3064 = vmax.f32 %v3062, %v3063
        %v3065 = vrot.slane %v3064, 1
        %v3066 = vmax.f32 %v3064, %v3065
        %v3067 = vsel %vm2722, %v2098, -inf
        %v3068 = vrot.slane %v3067, 4
        %v3069 = vmax.f32 %v3067, %v3068
        %v3070 = vrot.slane %v3069, 2
        %v3071 = vmax.f32 %v3069, %v3070
        %v3072 = vrot.slane %v3071, 1
        %v3073 = vmax.f32 %v3071, %v3072
        %v3074 = vsel %vm2722, %v2218, -inf
        %v3075 = vrot.slane %v3074, 4
        %v3076 = vmax.f32 %v3074, %v3075
        %v3077 = vrot.slane %v3076, 2
        %v3078 = vmax.f32 %v3076, %v3077
        %v3079 = vrot.slane %v3078, 1
        %v3080 = vmax.f32 %v3078, %v3079
        %v3081 = vsel %vm2722, %v2220, -inf
        %v3082 = vrot.slane %v3081, 4
        %v3083 = vmax.f32 %v3081, %v3082
        %v3084 = vrot.slane %v3083, 2
        %v3085 = vmax.f32 %v3083, %v3084
        %v3086 = vrot.slane %v3085, 1
        %v3087 = vmax.f32 %v3085, %v3086
        %v3088 = vsel %vm2722, %v2340, -inf
        %v3089 = vrot.slane %v3088, 4
        %v3090 = vmax.f32 %v3088, %v3089
        %v3091 = vrot.slane %v3090, 2
        %v3092 = vmax.f32 %v3090, %v3091
        %v3093 = vrot.slane %v3092, 1
        %v3094 = vmax.f32 %v3092, %v3093
        %v3095 = vsel %vm2722, %v2342, -inf
        %v3096 = vrot.slane %v3095, 4
        %v3097 = vmax.f32 %v3095, %v3096
        %v3098 = vrot.slane %v3097, 2
        %v3099 = vmax.f32 %v3097, %v3098
        %v3100 = vrot.slane %v3099, 1
        %v3101 = vmax.f32 %v3099, %v3100
        %v3102 = vsel %vm2722, %v2462, -inf
        %v3103 = vrot.slane %v3102, 4
        %v3104 = vmax.f32 %v3102, %v3103
        %v3105 = vrot.slane %v3104, 2
        %v3106 = vmax.f32 %v3104, %v3105
        %v3107 = vrot.slane %v3106, 1
        %v3108 = vmax.f32 %v3106, %v3107
        %v3109 = vsel %vm2722, %v2464, -inf
        %v3110 = vrot.slane %v3109, 4
        %v3111 = vmax.f32 %v3109, %v3110
        %v3112 = vrot.slane %v3111, 2
        %v3113 = vmax.f32 %v3111, %v3112
        %v3114 = vrot.slane %v3113, 1
        %v3115 = vmax.f32 %v3113, %v3114
        %v3116 = vsel %vm2722, %v2584, -inf
        %v3117 = vrot.slane %v3116, 4
        %v3118 = vmax.f32 %v3116, %v3117
        %v3119 = vrot.slane %v3118, 2
        %v3120 = vmax.f32 %v3118, %v3119
        %v3121 = vrot.slane %v3120, 1
        %v3122 = vmax.f32 %v3120, %v3121
        %v3123 = vsel %vm2722, %v2586, -inf
        %v3124 = vrot.slane %v3123, 4
        %v3125 = vmax.f32 %v3123, %v3124
        %v3126 = vrot.slane %v3125, 2
        %v3127 = vmax.f32 %v3125, %v3126
        %v3128 = vrot.slane %v3127, 1
        %v3129 = vmax.f32 %v3127, %v3128
        %v3130 = vsel %vm2722, %v2706, -inf
        %v3131 = vrot.slane %v3130, 4
        %v3132 = vmax.f32 %v3130, %v3131
        %v3133 = vrot.slane %v3132, 2
        %v3134 = vmax.f32 %v3132, %v3133
        %v3135 = vrot.slane %v3134, 1
        %v3136 = vmax.f32 %v3134, %v3135
        %v3137 = vsel %vm2722, %v2708, -inf
        %v3138 = vrot.slane %v3137, 4
        %v3139 = vmax.f32 %v3137, %v3138
        %v3140 = vrot.slane %v3139, 2
        %v3141 = vmax.f32 %v3139, %v3140
        %v3142 = vrot.slane %v3141, 1
        %v3143 = vmax.f32 %v3141, %v3142
        %v3144 = vsel %vm2807, %v2096, -inf
        %v3145 = vrot.slane %v3144, 4
        %v3146 = vmax.f32 %v3144, %v3145
        %v3147 = vrot.slane %v3146, 2
        %v3148 = vmax.f32 %v3146, %v3147
        %v3149 = vrot.slane %v3148, 1
        %v3150 = vmax.f32 %v3148, %v3149
        %v3151 = vsel %vm2807, %v2098, -inf
        %v3152 = vrot.slane %v3151, 4
        %v3153 = vmax.f32 %v3151, %v3152
        %v3154 = vrot.slane %v3153, 2
        %v3155 = vmax.f32 %v3153, %v3154
        %v3156 = vrot.slane %v3155, 1
        %v3157 = vmax.f32 %v3155, %v3156
        %v3158 = vsel %vm2807, %v2218, -inf
        %v3159 = vrot.slane %v3158, 4
        %v3160 = vmax.f32 %v3158, %v3159
        %v3161 = vrot.slane %v3160, 2
        %v3162 = vmax.f32 %v3160, %v3161
        %v3163 = vrot.slane %v3162, 1
        %v3164 = vmax.f32 %v3162, %v3163
        %v3165 = vsel %vm2807, %v2220, -inf
        %v3166 = vrot.slane %v3165, 4
        %v3167 = vmax.f32 %v3165, %v3166
        %v3168 = vrot.slane %v3167, 2
        %v3169 = vmax.f32 %v3167, %v3168
        %v3170 = vrot.slane %v3169, 1
        %v3171 = vmax.f32 %v3169, %v3170
        %v3172 = vsel %vm2807, %v2340, -inf
        %v3173 = vrot.slane %v3172, 4
        %v3174 = vmax.f32 %v3172, %v3173
        %v3175 = vrot.slane %v3174, 2
        %v3176 = vmax.f32 %v3174, %v3175
        %v3177 = vrot.slane %v3176, 1
        %v3178 = vmax.f32 %v3176, %v3177
        %v3179 = vsel %vm2807, %v2342, -inf
        %v3180 = vrot.slane %v3179, 4
        %v3181 = vmax.f32 %v3179, %v3180
        %v3182 = vrot.slane %v3181, 2
        %v3183 = vmax.f32 %v3181, %v3182
        %v3184 = vrot.slane %v3183, 1
        %v3185 = vmax.f32 %v3183, %v3184
        %v3186 = vsel %vm2807, %v2462, -inf
        %v3187 = vrot.slane %v3186, 4
        %v3188 = vmax.f32 %v3186, %v3187
        %v3189 = vrot.slane %v3188, 2
        %v3190 = vmax.f32 %v3188, %v3189
        %v3191 = vrot.slane %v3190, 1
        %v3192 = vmax.f32 %v3190, %v3191
        %v3193 = vsel %vm2807, %v2464, -inf
        %v3194 = vrot.slane %v3193, 4
        %v3195 = vmax.f32 %v3193, %v3194
        %v3196 = vrot.slane %v3195, 2
        %v3197 = vmax.f32 %v3195, %v3196
        %v3198 = vrot.slane %v3197, 1
        %v3199 = vmax.f32 %v3197, %v3198
        %v3200 = vsel %vm2807, %v2584, -inf
        %v3201 = vrot.slane %v3200, 4
        %v3202 = vmax.f32 %v3200, %v3201
        %v3203 = vrot.slane %v3202, 2
        %v3204 = vmax.f32 %v3202, %v3203
        %v3205 = vrot.slane %v3204, 1
        %v3206 = vmax.f32 %v3204, %v3205
        %v3207 = vsel %vm2807, %v2586, -inf
        %v3208 = vrot.slane %v3207, 4
        %v3209 = vmax.f32 %v3207, %v3208
        %v3210 = vrot.slane %v3209, 2
        %v3211 = vmax.f32 %v3209, %v3210
        %v3212 = vrot.slane %v3211, 1
        %v3213 = vmax.f32 %v3211, %v3212
        %v3214 = vsel %vm2807, %v2706, -inf
        %v3215 = vrot.slane %v3214, 4
        %v3216 = vmax.f32 %v3214, %v3215
        %v3217 = vrot.slane %v3216, 2
        %v3218 = vmax.f32 %v3216, %v3217
        %v3219 = vrot.slane %v3218, 1
        %v3220 = vmax.f32 %v3218, %v3219
        %v3221 = vsel %vm2807, %v2708, -inf
        %v3222 = vrot.slane %v3221, 4
        %v3223 = vmax.f32 %v3221, %v3222
        %v3224 = vrot.slane %v3223, 2
        %v3225 = vmax.f32 %v3223, %v3224
        %v3226 = vrot.slane %v3225, 1
        %v3227 = vmax.f32 %v3225, %v3226
        %v3228 = vsel %vm2722, %v2100, -inf
        %v3229 = vrot.slane %v3228, 4
        %v3230 = vmax.f32 %v3228, %v3229
        %v3231 = vrot.slane %v3230, 2
        %v3232 = vmax.f32 %v3230, %v3231
        %v3233 = vrot.slane %v3232, 1
        %v3234 = vmax.f32 %v3232, %v3233
        %v3235 = vsel %vm2722, %v2102, -inf
        %v3236 = vrot.slane %v3235, 4
        %v3237 = vmax.f32 %v3235, %v3236
        %v3238 = vrot.slane %v3237, 2
        %v3239 = vmax.f32 %v3237, %v3238
        %v3240 = vrot.slane %v3239, 1
        %v3241 = vmax.f32 %v3239, %v3240
        %v3242 = vsel %vm2722, %v2222, -inf
        %v3243 = vrot.slane %v3242, 4
        %v3244 = vmax.f32 %v3242, %v3243
        %v3245 = vrot.slane %v3244, 2
        %v3246 = vmax.f32 %v3244, %v3245
        %v3247 = vrot.slane %v3246, 1
        %v3248 = vmax.f32 %v3246, %v3247
        %v3249 = vsel %vm2722, %v2224, -inf
        %v3250 = vrot.slane %v3249, 4
        %v3251 = vmax.f32 %v3249, %v3250
        %v3252 = vrot.slane %v3251, 2
        %v3253 = vmax.f32 %v3251, %v3252
        %v3254 = vrot.slane %v3253, 1
        %v3255 = vmax.f32 %v3253, %v3254
        %v3256 = vsel %vm2722, %v2344, -inf
        %v3257 = vrot.slane %v3256, 4
        %v3258 = vmax.f32 %v3256, %v3257
        %v3259 = vrot.slane %v3258, 2
        %v3260 = vmax.f32 %v3258, %v3259
        %v3261 = vrot.slane %v3260, 1
        %v3262 = vmax.f32 %v3260, %v3261
        %v3263 = vsel %vm2722, %v2346, -inf
        %v3264 = vrot.slane %v3263, 4
        %v3265 = vmax.f32 %v3263, %v3264
        %v3266 = vrot.slane %v3265, 2
        %v3267 = vmax.f32 %v3265, %v3266
        %v3268 = vrot.slane %v3267, 1
        %v3269 = vmax.f32 %v3267, %v3268
        %v3270 = vsel %vm2722, %v2466, -inf
        %v3271 = vrot.slane %v3270, 4
        %v3272 = vmax.f32 %v3270, %v3271
        %v3273 = vrot.slane %v3272, 2
        %v3274 = vmax.f32 %v3272, %v3273
        %v3275 = vrot.slane %v3274, 1
        %v3276 = vmax.f32 %v3274, %v3275
        %v3277 = vsel %vm2722, %v2468, -inf
        %v3278 = vrot.slane %v3277, 4
        %v3279 = vmax.f32 %v3277, %v3278
        %v3280 = vrot.slane %v3279, 2
        %v3281 = vmax.f32 %v3279, %v3280
        %v3282 = vrot.slane %v3281, 1
        %v3283 = vmax.f32 %v3281, %v3282
        %v3284 = vsel %vm2722, %v2588, -inf
        %v3285 = vrot.slane %v3284, 4
        %v3286 = vmax.f32 %v3284, %v3285
        %v3287 = vrot.slane %v3286, 2
        %v3288 = vmax.f32 %v3286, %v3287
        %v3289 = vrot.slane %v3288, 1
        %v3290 = vmax.f32 %v3288, %v3289
        %v3291 = vsel %vm2722, %v2590, -inf
        %v3292 = vrot.slane %v3291, 4
        %v3293 = vmax.f32 %v3291, %v3292
        %v3294 = vrot.slane %v3293, 2
        %v3295 = vmax.f32 %v3293, %v3294
        %v3296 = vrot.slane %v3295, 1
        %v3297 = vmax.f32 %v3295, %v3296
        %v3298 = vsel %vm2722, %v2710, -inf
        %v3299 = vrot.slane %v3298, 4
        %v3300 = vmax.f32 %v3298, %v3299
        %v3301 = vrot.slane %v3300, 2
        %v3302 = vmax.f32 %v3300, %v3301
        %v3303 = vrot.slane %v3302, 1
        %v3304 = vmax.f32 %v3302, %v3303
        %v3305 = vsel %vm2722, %v2712, -inf
        %v3306 = vrot.slane %v3305, 4
        %v3307 = vmax.f32 %v3305, %v3306
        %v3308 = vrot.slane %v3307, 2
        %v3309 = vmax.f32 %v3307, %v3308
        %v3310 = vrot.slane %v3309, 1
        %v3311 = vmax.f32 %v3309, %v3310
        %v3312 = vsel %vm2807, %v2100, -inf
        %v3313 = vrot.slane %v3312, 4
        %v3314 = vmax.f32 %v3312, %v3313
        %v3315 = vrot.slane %v3314, 2
        %v3316 = vmax.f32 %v3314, %v3315
        %v3317 = vrot.slane %v3316, 1
        %v3318 = vmax.f32 %v3316, %v3317
        %v3319 = vsel %vm2807, %v2102, -inf
        %v3320 = vrot.slane %v3319, 4
        %v3321 = vmax.f32 %v3319, %v3320
        %v3322 = vrot.slane %v3321, 2
        %v3323 = vmax.f32 %v3321, %v3322
        %v3324 = vrot.slane %v3323, 1
        %v3325 = vmax.f32 %v3323, %v3324
        %v3326 = vsel %vm2807, %v2222, -inf
        %v3327 = vrot.slane %v3326, 4
        %v3328 = vmax.f32 %v3326, %v3327
        %v3329 = vrot.slane %v3328, 2
        %v3330 = vmax.f32 %v3328, %v3329
        %v3331 = vrot.slane %v3330, 1
        %v3332 = vmax.f32 %v3330, %v3331
        %v3333 = vsel %vm2807, %v2224, -inf
        %v3334 = vrot.slane %v3333, 4
        %v3335 = vmax.f32 %v3333, %v3334
        %v3336 = vrot.slane %v3335, 2
        %v3337 = vmax.f32 %v3335, %v3336
        %v3338 = vrot.slane %v3337, 1
        %v3339 = vmax.f32 %v3337, %v3338
        %v3340 = vsel %vm2807, %v2344, -inf
        %v3341 = vrot.slane %v3340, 4
        %v3342 = vmax.f32 %v3340, %v3341
        %v3343 = vrot.slane %v3342, 2
        %v3344 = vmax.f32 %v3342, %v3343
        %v3345 = vrot.slane %v3344, 1
        %v3346 = vmax.f32 %v3344, %v3345
        %v3347 = vsel %vm2807, %v2346, -inf
        %v3348 = vrot.slane %v3347, 4
        %v3349 = vmax.f32 %v3347, %v3348
        %v3350 = vrot.slane %v3349, 2
        %v3351 = vmax.f32 %v3349, %v3350
        %v3352 = vrot.slane %v3351, 1
        %v3353 = vmax.f32 %v3351, %v3352
        %v3354 = vsel %vm2807, %v2466, -inf
        %v3355 = vrot.slane %v3354, 4
        %v3356 = vmax.f32 %v3354, %v3355
        %v3357 = vrot.slane %v3356, 2
        %v3358 = vmax.f32 %v3356, %v3357
        %v3359 = vrot.slane %v3358, 1
        %v3360 = vmax.f32 %v3358, %v3359
        %v3361 = vsel %vm2807, %v2468, -inf
        %v3362 = vrot.slane %v3361, 4
        %v3363 = vmax.f32 %v3361, %v3362
        %v3364 = vrot.slane %v3363, 2
        %v3365 = vmax.f32 %v3363, %v3364
        %v3366 = vrot.slane %v3365, 1
        %v3367 = vmax.f32 %v3365, %v3366
        %v3368 = vsel %vm2807, %v2588, -inf
        %v3369 = vrot.slane %v3368, 4
        %v3370 = vmax.f32 %v3368, %v3369
        %v3371 = vrot.slane %v3370, 2
        %v3372 = vmax.f32 %v3370, %v3371
        %v3373 = vrot.slane %v3372, 1
        %v3374 = vmax.f32 %v3372, %v3373
        %v3375 = vsel %vm2807, %v2590, -inf
        %v3376 = vrot.slane %v3375, 4
        %v3377 = vmax.f32 %v3375, %v3376
        %v3378 = vrot.slane %v3377, 2
        %v3379 = vmax.f32 %v3377, %v3378
        %v3380 = vrot.slane %v3379, 1
        %v3381 = vmax.f32 %v3379, %v3380
        %v3382 = vsel %vm2807, %v2710, -inf
        %v3383 = vrot.slane %v3382, 4
        %v3384 = vmax.f32 %v3382, %v3383
        %v3385 = vrot.slane %v3384, 2
        %v3386 = vmax.f32 %v3384, %v3385
        %v3387 = vrot.slane %v3386, 1
        %v3388 = vmax.f32 %v3386, %v3387
        %v3389 = vsel %vm2807, %v2712, -inf
        %v3390 = vrot.slane %v3389, 4
        %v3391 = vmax.f32 %v3389, %v3390
        %v3392 = vrot.slane %v3391, 2
        %v3393 = vmax.f32 %v3391, %v3392
        %v3394 = vrot.slane %v3393, 1
        %v3395 = vmax.f32 %v3393, %v3394
        %v3396 = vsel %vm2722, %v2106, -inf
        %v3397 = vrot.slane %v3396, 4
        %v3398 = vmax.f32 %v3396, %v3397
        %v3399 = vrot.slane %v3398, 2
        %v3400 = vmax.f32 %v3398, %v3399
        %v3401 = vrot.slane %v3400, 1
        %v3402 = vmax.f32 %v3400, %v3401
        %v3403 = vsel %vm2722, %v2108, -inf
        %v3404 = vrot.slane %v3403, 4
        %v3405 = vmax.f32 %v3403, %v3404
        %v3406 = vrot.slane %v3405, 2
        %v3407 = vmax.f32 %v3405, %v3406
        %v3408 = vrot.slane %v3407, 1
        %v3409 = vmax.f32 %v3407, %v3408
        %v3410 = vsel %vm2722, %v2228, -inf
        %v3411 = vrot.slane %v3410, 4
        %v3412 = vmax.f32 %v3410, %v3411
        %v3413 = vrot.slane %v3412, 2
        %v3414 = vmax.f32 %v3412, %v3413
        %v3415 = vrot.slane %v3414, 1
        %v3416 = vmax.f32 %v3414, %v3415
        %v3417 = vsel %vm2722, %v2230, -inf
        %v3418 = vrot.slane %v3417, 4
        %v3419 = vmax.f32 %v3417, %v3418
        %v3420 = vrot.slane %v3419, 2
        %v3421 = vmax.f32 %v3419, %v3420
        %v3422 = vrot.slane %v3421, 1
        %v3423 = vmax.f32 %v3421, %v3422
        %v3424 = vsel %vm2722, %v2350, -inf
        %v3425 = vrot.slane %v3424, 4
        %v3426 = vmax.f32 %v3424, %v3425
        %v3427 = vrot.slane %v3426, 2
        %v3428 = vmax.f32 %v3426, %v3427
        %v3429 = vrot.slane %v3428, 1
        %v3430 = vmax.f32 %v3428, %v3429
        %v3431 = vsel %vm2722, %v2352, -inf
        %v3432 = vrot.slane %v3431, 4
        %v3433 = vmax.f32 %v3431, %v3432
        %v3434 = vrot.slane %v3433, 2
        %v3435 = vmax.f32 %v3433, %v3434
        %v3436 = vrot.slane %v3435, 1
        %v3437 = vmax.f32 %v3435, %v3436
        %v3438 = vsel %vm2722, %v2472, -inf
        %v3439 = vrot.slane %v3438, 4
        %v3440 = vmax.f32 %v3438, %v3439
        %v3441 = vrot.slane %v3440, 2
        %v3442 = vmax.f32 %v3440, %v3441
        %v3443 = vrot.slane %v3442, 1
        %v3444 = vmax.f32 %v3442, %v3443
        %v3445 = vsel %vm2722, %v2474, -inf
        %v3446 = vrot.slane %v3445, 4
        %v3447 = vmax.f32 %v3445, %v3446
        %v3448 = vrot.slane %v3447, 2
        %v3449 = vmax.f32 %v3447, %v3448
        %v3450 = vrot.slane %v3449, 1
        %v3451 = vmax.f32 %v3449, %v3450
        %v3452 = vsel %vm2722, %v2594, -inf
        %v3453 = vrot.slane %v3452, 4
        %v3454 = vmax.f32 %v3452, %v3453
        %v3455 = vrot.slane %v3454, 2
        %v3456 = vmax.f32 %v3454, %v3455
        %v3457 = vrot.slane %v3456, 1
        %v3458 = vmax.f32 %v3456, %v3457
        %v3459 = vsel %vm2722, %v2596, -inf
        %v3460 = vrot.slane %v3459, 4
        %v3461 = vmax.f32 %v3459, %v3460
        %v3462 = vrot.slane %v3461, 2
        %v3463 = vmax.f32 %v3461, %v3462
        %v3464 = vrot.slane %v3463, 1
        %v3465 = vmax.f32 %v3463, %v3464
        %v3466 = vsel %vm2722, %v2716, -inf
        %v3467 = vrot.slane %v3466, 4
        %v3468 = vmax.f32 %v3466, %v3467
        %v3469 = vrot.slane %v3468, 2
        %v3470 = vmax.f32 %v3468, %v3469
        %v3471 = vrot.slane %v3470, 1
        %v3472 = vmax.f32 %v3470, %v3471
        %v3473 = vsel %vm2722, %v2718, -inf
        %v3474 = vrot.slane %v3473, 4
        %v3475 = vmax.f32 %v3473, %v3474
        %v3476 = vrot.slane %v3475, 2
        %v3477 = vmax.f32 %v3475, %v3476
        %v3478 = vrot.slane %v3477, 1
        %v3479 = vmax.f32 %v3477, %v3478
        %vm3480 = vcmask 1040384
        %v3481 = vsel %vm3480, %v2729, %v2814
        %v3482 = vsel %vm3480, %v2736, %v2821
        %v3483 = vsel %vm3480, %v2743, %v2828
        %v3484 = vsel %vm3480, %v2750, %v2835
        %v3485 = vsel %vm3480, %v2757, %v2842
        %v3486 = vsel %vm3480, %v2764, %v2849
        %v3487 = vsel %vm3480, %v2771, %v2856
        %v3488 = vsel %vm3480, %v2778, %v2863
        %v3489 = vsel %vm3480, %v2785, %v2870
        %v3490 = vsel %vm3480, %v2792, %v2877
        %v3491 = vsel %vm3480, %v2799, %v2884
        %v3492 = vsel %vm3480, %v2806, %v2891
        %vm3493 = vcmask 1041408
        %v3494 = vsel %vm3493, %v3481, %v2898
        %v3495 = vsel %vm3493, %v3482, %v2905
        %v3496 = vsel %vm3493, %v3483, %v2912
        %v3497 = vsel %vm3493, %v3484, %v2919
        %v3498 = vsel %vm3493, %v3485, %v2926
        %v3499 = vsel %vm3493, %v3486, %v2933
        %v3500 = vsel %vm3493, %v3487, %v2940
        %v3501 = vsel %vm3493, %v3488, %v2947
        %v3502 = vsel %vm3493, %v3489, %v2954
        %v3503 = vsel %vm3493, %v3490, %v2961
        %v3504 = vsel %vm3493, %v3491, %v2968
        %v3505 = vsel %vm3493, %v3492, %v2975
        %vm3506 = vcmask 1042432
        %v3507 = vsel %vm3506, %v3494, %v2982
        %v3508 = vsel %vm3506, %v3495, %v2989
        %v3509 = vsel %vm3506, %v3496, %v2996
        %v3510 = vsel %vm3506, %v3497, %v3003
        %v3511 = vsel %vm3506, %v3498, %v3010
        %v3512 = vsel %vm3506, %v3499, %v3017
        %v3513 = vsel %vm3506, %v3500, %v3024
        %v3514 = vsel %vm3506, %v3501, %v3031
        %v3515 = vsel %vm3506, %v3502, %v3038
        %v3516 = vsel %vm3506, %v3503, %v3045
        %v3517 = vsel %vm3506, %v3504, %v3052
        %v3518 = vsel %vm3506, %v3505, %v3059
        %v3519 = vsel %vm2722, %v3507, %v3066
        %v3520 = vsel %vm2722, %v3508, %v3073
        %v3521 = vsel %vm2722, %v3509, %v3080
        %v3522 = vsel %vm2722, %v3510, %v3087
        %v3523 = vsel %vm2722, %v3511, %v3094
        %v3524 = vsel %vm2722, %v3512, %v3101
        %v3525 = vsel %vm2722, %v3513, %v3108
        %v3526 = vsel %vm2722, %v3514, %v3115
        %v3527 = vsel %vm2722, %v3515, %v3122
        %v3528 = vsel %vm2722, %v3516, %v3129
        %v3529 = vsel %vm2722, %v3517, %v3136
        %v3530 = vsel %vm2722, %v3518, %v3143
        %vm3531 = vcmask 1044480
        %v3532 = vsel %vm3531, %v3519, %v3150
        %v3533 = vsel %vm3531, %v3520, %v3157
        %v3534 = vsel %vm3531, %v3521, %v3164
        %v3535 = vsel %vm3531, %v3522, %v3171
        %v3536 = vsel %vm3531, %v3523, %v3178
        %v3537 = vsel %vm3531, %v3524, %v3185
        %v3538 = vsel %vm3531, %v3525, %v3192
        %v3539 = vsel %vm3531, %v3526, %v3199
        %v3540 = vsel %vm3531, %v3527, %v3206
        %v3541 = vsel %vm3531, %v3528, %v3213
        %v3542 = vsel %vm3531, %v3529, %v3220
        %v3543 = vsel %vm3531, %v3530, %v3227
        %vm3544 = vcmask 1045504
        %v3545 = vsel %vm3544, %v3532, %v3234
        %v3546 = vsel %vm3544, %v3533, %v3241
        %v3547 = vsel %vm3544, %v3534, %v3248
        %v3548 = vsel %vm3544, %v3535, %v3255
        %v3549 = vsel %vm3544, %v3536, %v3262
        %v3550 = vsel %vm3544, %v3537, %v3269
        %v3551 = vsel %vm3544, %v3538, %v3276
        %v3552 = vsel %vm3544, %v3539, %v3283
        %v3553 = vsel %vm3544, %v3540, %v3290
        %v3554 = vsel %vm3544, %v3541, %v3297
        %v3555 = vsel %vm3544, %v3542, %v3304
        %v3556 = vsel %vm3544, %v3543, %v3311
        %vm3557 = vcmask 1046528
        %v3558 = vsel %vm3557, %v3545, %v3318
        %v3559 = vsel %vm3557, %v3546, %v3325
        %v3560 = vsel %vm3557, %v3547, %v3332
        %v3561 = vsel %vm3557, %v3548, %v3339
        %v3562 = vsel %vm3557, %v3549, %v3346
        %v3563 = vsel %vm3557, %v3550, %v3353
        %v3564 = vsel %vm3557, %v3551, %v3360
        %v3565 = vsel %vm3557, %v3552, %v3367
        %v3566 = vsel %vm3557, %v3553, %v3374
        %v3567 = vsel %vm3557, %v3554, %v3381
        %v3568 = vsel %vm3557, %v3555, %v3388
        %v3569 = vsel %vm3557, %v3556, %v3395
        %v3570 = vmax.f32 %v3558, %v3561
        %v3571 = vmax.f32 %v3559, %v3562
        %v3572 = vmax.f32 %v3560, %v3563
        %v3573 = vmax.f32 %v3402, %v3423
        %v3574 = vmax.f32 %v3409, %v3430
        %v3575 = vmax.f32 %v3416, %v3437
        %v3576 = vmax.f32 %v3564, %v3567
        %v3577 = vmax.f32 %v3565, %v3568
        %v3578 = vmax.f32 %v3566, %v3569
        %v3579 = vmax.f32 %v3444, %v3465
        %v3580 = vmax.f32 %v3451, %v3472
        %v3581 = vmax.f32 %v3458, %v3479
        %v3582 = vmax.f32 %v3570, %v3576
        %v3583 = vmax.f32 %v3571, %v3577
        %v3584 = vmax.f32 %v3572, %v3578
        %v3585 = vmax.f32 %v3573, %v3579
        %v3586 = vmax.f32 %v3574, %v3580
        %v3587 = vmax.f32 %v3575, %v3581
        %v3588 = vmul.f32 %v3582, %v484
        %v3589 = vmul.f32 %v3583, %v485
        %v3590 = vmul.f32 %v3584, %v486
        %v3591 = vmul.f32 %v3585, %v487
        %v3592 = vmul.f32 %v3586, %v488
        %v3593 = vmul.f32 %v3587, %v489
        %v3594 = vadd.f32 %v3588, %v3589
        %v3595 = vadd.f32 %v3594, %v3590
        %3596 = vadd.xlane.f32.xlu0 %v3595
        %v3597 = vpop.xlane.xlu0 %3596
        %v3598 = vsel %vm3480, %v3591, 0.0
        %v3599 = vsel %vm3480, %v3592, 0.0
        %v3600 = vadd.f32 %v3598, %v3599
        %v3601 = vsel %vm3480, %v3593, 0.0
        %v3602 = vadd.f32 %v3600, %v3601
        %3603 = vadd.xlane.f32.xlu0 %v3602
        %v3604 = vpop.xlane.xlu0 %3603
        %v3605 = vsel %vm3480, %v3604, 0.0
        %v3606 = vadd.f32 %v3597, %v3605
        %v3607 = vrot.slane %v3606, 4
        %v3608 = vadd.f32 %v3606, %v3607
        %v3609 = vrot.slane %v3608, 2
        %v3610 = vadd.f32 %v3608, %v3609
        %v3611 = vrot.slane %v3610, 1
        %v3612 = vadd.f32 %v3610, %v3611
        %v3613 = vmul.f32 %v3582, %v491
        %v3614 = vmul.f32 %v3583, %v492
        %v3615 = vmul.f32 %v3584, %v493
        %v3616 = vmul.f32 %v3585, %v494
        %v3617 = vmul.f32 %v3586, %v495
        %v3618 = vmul.f32 %v3587, %v496
        %v3619 = vadd.f32 %v3613, %v3614
        %v3620 = vadd.f32 %v3619, %v3615
        %3621 = vadd.xlane.f32.xlu0 %v3620
        %v3622 = vpop.xlane.xlu0 %3621
        %v3623 = vsel %vm3480, %v3616, 0.0
        %v3624 = vsel %vm3480, %v3617, 0.0
        %v3625 = vadd.f32 %v3623, %v3624
        %v3626 = vsel %vm3480, %v3618, 0.0
        %v3627 = vadd.f32 %v3625, %v3626
        %3628 = vadd.xlane.f32.xlu0 %v3627
        %v3629 = vpop.xlane.xlu0 %3628
        %v3630 = vsel %vm3480, %v3629, 0.0
        %v3631 = vadd.f32 %v3622, %v3630
        %v3632 = vrot.slane %v3631, 4
        %v3633 = vadd.f32 %v3631, %v3632
        %v3634 = vrot.slane %v3633, 2
        %v3635 = vadd.f32 %v3633, %v3634
        %v3636 = vrot.slane %v3635, 1
        %v3637 = vadd.f32 %v3635, %v3636
        %vm3638 = vcmask 7168
        %v3639 = vsel %vm3638, %v3612, %v3637
        %v3640 = vld [vmem:[%s3] sm:$0x1]
        %v3641 = vadd.f32 %v3639, %v3640
        %vm3642 = vcmask 8192
        %3643 = vst.msk [vmem:[%s189] sm:$0x1] %vm3642, %v3641
        %s3644 = sand.u32 %s115, 1
        %s3645 = scalar_lea.sflag [#allocation3], %s3644
        %s3646 = sand.u32 %s115, 1
        %s3647 = scalar_lea.vmem [#allocation2], %s3646
        // Predicated region
        $region37: #{model1_forward.1} parent=35 // pred_check
          %p3648 = pneg %p125
        $region38: #{model1_forward.1} parent=35 // pred_check_branch
          %3650 = sbr.rel (%p3648) target = $region40
        $region39: #{model1_forward.1} parent=35 // pred_region
          %s3652 = ssub.s32 16, 16
          %3653 = vsyncadd %s3645, %s3652
          %s3654 = smul.addr %s18, 16
          %s3655 = scalar_lea.hbm %s4, %s3654
          %s3657 = sshll.u32 %s3647, 4
          %s3658 = int_to_ptr.vmem [resolvable:$true] %s3657
          %3660 = dma.vmem_to_hbm [thread:$0]  %s3658, 16, %s3655, %s3645
        $region40: #{model1_forward.1} parent=35 // pred_fallthru
          _
      $region36: #{model1_forward.1} parent=5 // pred_fallthru
        _
      %p3661 = scmp.le.s32.totalorder 2, %s13
      // Predicated region
      $region41: #{model1_forward.1} parent=5 // pred_check
        %p3662 = pneg %p3661
      $region42: #{model1_forward.1} parent=5 // pred_check_branch
        %3664 = sbr.rel (%p3662) target = $region44
      $region43: #{model1_forward.1} parent=5 // pred_region
        %s3665 = ssub.s32 %s13, 2
        // Predicated region
        $region45: #{model1_forward.1} parent=43 // pred_check
          %p3666 = pneg %p131
        $region46: #{model1_forward.1} parent=43 // pred_check_branch
          %3668 = sbr.rel (%p3666) target = $region48
        $region47: #{model1_forward.1} parent=43 // pred_region
          %s3669 = sand.u32 %s116, 1
          %s3670 = scalar_lea.sflag [#allocation3], %s3669
          %s3671 = sand.u32 %s116, 1
          %s3672 = scalar_lea.vmem [#allocation2], %s3671
          %3673 = dma.done %s3670, 16
        $region48: #{model1_forward.1} parent=43 // pred_fallthru
          _
      $region44: #{model1_forward.1} parent=5 // pred_fallthru
        _
    $region6: #{model1_forward.1} parent=1 // loop_footer
      %s17 = sadd.s32 1, %s13
    $region7: #{model1_forward.1} parent=1 // loop_footer_branch
      %12 = sbr.rel target = $region3
    $region8: #{model1_forward.1} parent=1 // loop_exit
      _
    %3674 = vsyncpa [#allocation3], 1
    %s3675 = scalar_lea.sflag [#allocation3], 1
    %3676 = vsyncpa %s3675, 1

</llo_original>
